<compile_context>
chip_gen: v6e
topology: v6e:2x2x1
jax: 0.10.0
libtpu: 0.0.40
codegen_flags: <defaults>
</compile_context>

<pallas_src>
import functools

import jax
import jax.numpy as jnp
from jax.experimental import pallas as pl
from jax.experimental.pallas import tpu as pltpu


def _round_up(x, m):
    return -(-x // m) * m


def _neuron_tile_kernel(x_ref,    # (Bp, Fp)    f32   whole padded input (resident across tiles)
                        im_ref,   # (K, TO)     i32   fan-in column ids for this neuron tile
                        wm_ref,   # (RWp, TO)   bf16  matrix-weight rows for this tile
                        wb_ref,   # (RBp, TO)   f32   bias rows for this tile
                        out_ref,  # (Bp, TO)    f32   lane-dense output tile
                        wm_scr,   # (RWp, TO)   f32   upcast weight scratch
                        xs_scr,   # (K*Bp, TO)  f32   gathered-input scratch
                        *, fan_in, width_n):
    K, N = fan_in, width_n
    Bp, Fp = x_ref.shape
    TO = out_ref.shape[-1]
    BC = 8                                    # batch (sublane) chunk
    f32 = jnp.float32

    # Row offsets inside the packed slabs (must match pack_params).
    W1_OFF = 0
    WR0_OFF = N * K
    W2_OFF = 2 * N * K
    W3_OFF = W2_OFF + N * N
    WR1_OFF = W3_OFF + N * N
    W4_OFF = WR1_OFF + N
    B1_OFF, B2_OFF, B3_OFF, B4_OFF = 0, N, 2 * N, 3 * N

    # Upcast the bf16 weight slab once per tile (streams through the VPU).
    wm_scr[...] = wm_ref[...].astype(f32)

    # In-kernel sparse gather: one-hot column selection on the (otherwise idle) MXU.
    # sel entries are exact 0/1, so the selection is exact for bf16-representable
    # (e.g. quantized) inputs at any matmul precision.
    x = x_ref[...]                                              # (Bp, Fp)
    fids = jax.lax.broadcasted_iota(jnp.int32, (Fp, TO), 0)     # feature ids, hoisted
    for k in range(K):
        sel = jnp.where(im_ref[pl.ds(k, 1), :] == fids, 1.0, 0.0)   # (Fp, TO) one-hot
        xs_scr[pl.ds(k * Bp, Bp), :] = jnp.dot(
            x, sel, preferred_element_type=f32)

    def wrow(r):   # (1, TO): per-neuron weight scalar per lane, broadcast over sublanes
        return wm_scr[pl.ds(r, 1), :]

    def brow(r):
        return wb_ref[pl.ds(r, 1), :]

    def chunk(c, carry):
        off = pl.multiple_of(c * BC, BC)
        xs = [xs_scr[pl.ds(pl.multiple_of(k * Bp + c * BC, BC), BC), :]
              for k in range(K)]                              # K x (BC, TO)

        # fc1 (+ReLU) and res0 share the gathered inputs.
        h0, r0 = [], []
        for n in range(N):
            a = wrow(W1_OFF + n * K) * xs[0]
            b = wrow(WR0_OFF + n * K) * xs[0]
            for k in range(1, K):
                a = a + wrow(W1_OFF + n * K + k) * xs[k]
                b = b + wrow(WR0_OFF + n * K + k) * xs[k]
            h0.append(jnp.maximum(a + brow(B1_OFF + n), 0.0))
            r0.append(b)                         # br0 pre-folded into the b2 rows

        # fc2 + residual0 + ReLU.
        h1 = []
        for n in range(N):
            a = wrow(W2_OFF + n * N) * h0[0]
            for m in range(1, N):
                a = a + wrow(W2_OFF + n * N + m) * h0[m]
            h1.append(jnp.maximum(a + brow(B2_OFF + n) + r0[n], 0.0))

        # res1 and fc3 share the same LHS (h1).
        r1 = wrow(WR1_OFF) * h1[0]
        for m in range(1, N):
            r1 = r1 + wrow(WR1_OFF + m) * h1[m]
        h2 = []
        for n in range(N):
            a = wrow(W3_OFF + n * N) * h1[0]
            for m in range(1, N):
                a = a + wrow(W3_OFF + n * N + m) * h1[m]
            h2.append(jnp.maximum(a + brow(B3_OFF + n), 0.0))

        # fc4 + residual1 (br1 pre-folded into the b4 row) -> unmasked lane-dense store.
        o = wrow(W4_OFF) * h2[0]
        for m in range(1, N):
            o = o + wrow(W4_OFF + m) * h2[m]
        out_ref[pl.ds(off, BC), :] = o + brow(B4_OFF) + r1
        return carry

    jax.lax.fori_loop(0, Bp // BC, chunk, 0)


def sparse_linear_neq_forward(x, packed, *, out_features, fan_in, width_n):
    """x: (B, in_features) f32 -> (B, out_features) f32 (NEQ inference path)."""
    imask_p, wmat, wbias = packed
    K, N = fan_in, width_n
    B, F = x.shape
    TO = 128
    Opad = wmat.shape[1]
    RWp, RBp = wmat.shape[0], wbias.shape[0]

    BC = 8
    Bp = _round_up(B, BC)
    Fp = _round_up(F, 8)
    if Bp != B or Fp != F:
        x = jnp.pad(x, ((0, Bp - B), (0, Fp - F)))

    grid = (Opad // TO,)

    flops = 2 * Bp * Opad * (K * Fp + 2 * N * K + 2 * N * N + 2 * N)
    bytes_accessed = (Bp * Fp * 4 + imask_p.size * 4 + wmat.size * 2
                      + wbias.size * 4 + Bp * Opad * 4)

    kernel = functools.partial(_neuron_tile_kernel, fan_in=K, width_n=N)
    out = pl.pallas_call(
        kernel,
        out_shape=jax.ShapeDtypeStruct((Bp, Opad), jnp.float32),
        grid_spec=pltpu.PrefetchScalarGridSpec(
            num_scalar_prefetch=0,
            grid=grid,
            in_specs=[
                pl.BlockSpec((Bp, Fp), lambda t: (0, 0)),     # resident across tiles
                pl.BlockSpec((K, TO), lambda t: (0, t)),
                pl.BlockSpec((RWp, TO), lambda t: (0, t)),
                pl.BlockSpec((RBp, TO), lambda t: (0, t)),
            ],
            out_specs=pl.BlockSpec((Bp, TO), lambda t: (0, t)),
            scratch_shapes=[pltpu.VMEM((RWp, TO), jnp.float32),
                            pltpu.VMEM((K * Bp, TO), jnp.float32)]),
        compiler_params=pltpu.CompilerParams(
            dimension_semantics=("parallel",)),
        cost_estimate=pl.CostEstimate(flops=flops, transcendentals=0,
                                      bytes_accessed=bytes_accessed),
    )(x, imask_p, wmat, wbias)

    return out[:B, :out_features]


def make_params(key, *, out_features, fan_in, width_n):
    """Deterministic synthetic parameters in the module's natural per-neuron layout.

    Matrix weights are rounded to bf16-representable f32 so the bf16 storage used
    by the kernel is bit-exact w.r.t. the f32 reference; biases stay full f32.
    """
    O, K, N = out_features, fan_in, width_n
    ks = jax.random.split(key, 12)
    s = 0.5
    bf = lambda a: a.astype(jnp.bfloat16).astype(jnp.float32)
    W1 = bf(s * jax.random.normal(ks[0], (O, N, K), jnp.float32))    # fc1 per neuron
    b1 = s * jax.random.normal(ks[1], (O, N), jnp.float32)
    Wr0 = bf(s * jax.random.normal(ks[2], (O, N, K), jnp.float32))   # res0
    br0 = s * jax.random.normal(ks[3], (O, N), jnp.float32)
    W2 = bf(s * jax.random.normal(ks[4], (O, N, N), jnp.float32))    # fc2 [o, n_out, m_in]
    b2 = s * jax.random.normal(ks[5], (O, N), jnp.float32)
    W3 = bf(s * jax.random.normal(ks[6], (O, N, N), jnp.float32))    # fc3
    b3 = s * jax.random.normal(ks[7], (O, N), jnp.float32)
    Wr1 = bf(s * jax.random.normal(ks[8], (O, N), jnp.float32))      # res1
    br1 = s * jax.random.normal(ks[9], (O,), jnp.float32)
    W4 = bf(s * jax.random.normal(ks[10], (O, N), jnp.float32))      # fc4
    b4 = s * jax.random.normal(ks[11], (O,), jnp.float32)
    return (W1, b1, Wr0, br0, W2, b2, W3, b3, Wr1, br1, W4, b4)


def pack_params(imask, params, *, out_features, fan_in, width_n):
    """One-time repack into lane-dense slabs with the neuron axis last.

    Matrix weights -> a single bf16 slab (upcast in-kernel), biases -> a small f32
    slab with b2+br0 and b4+br1 pre-folded, imask -> (K, Opad) int32 columns.
    out_features is padded to a multiple of 128 so every output tile is lane-dense.
    """
    (W1, b1, Wr0, br0, W2, b2, W3, b3, Wr1, br1, W4, b4) = params
    O, K, N = out_features, fan_in, width_n
    TO = 128
    Opad = _round_up(O, TO)

    wmat = jnp.concatenate([
        W1.reshape(O, N * K).T,            # rows n*K + k
        Wr0.reshape(O, N * K).T,
        W2.reshape(O, N * N).T,            # rows n*N + m
        W3.reshape(O, N * N).T,
        Wr1.T,                             # rows m
        W4.T,
    ], axis=0)                             # (2NK + 2NN + 2N, O) f32
    wbias = jnp.concatenate([
        b1.T, (b2 + br0).T, b3.T, (b4 + br1)[None, :],
    ], axis=0)                             # (3N + 1, O) f32

    RW, RB = wmat.shape[0], wbias.shape[0]
    RWp, RBp = _round_up(RW, 8), _round_up(RB, 8)

    wmat = jnp.pad(wmat, ((0, RWp - RW), (0, Opad - O))).astype(jnp.bfloat16)
    wbias = jnp.pad(wbias, ((0, RBp - RB), (0, Opad - O))).astype(jnp.float32)
    imask_p = jnp.pad(imask.T.astype(jnp.int32), ((0, 0), (0, Opad - O)))   # (K, Opad)
    return imask_p, wmat, wbias


def reference_forward(x, imask, params):
    """Pure-JAX mirror of the PyTorch SparseLinearNeq.forward (NEQ path)."""
    (W1, b1, Wr0, br0, W2, b2, W3, b3, Wr1, br1, W4, b4) = params
    xs = x[:, imask]                                                  # (B, O, K)
    h0 = jax.nn.relu(jnp.einsum('bok,onk->bon', xs, W1) + b1[None])
    r0 = jnp.einsum('bok,onk->bon', xs, Wr0) + br0[None]
    h1 = jax.nn.relu(jnp.einsum('bom,onm->bon', h0, W2) + b2[None] + r0)
    r1 = jnp.einsum('bom,om->bo', h1, Wr1) + br1[None]
    h2 = jax.nn.relu(jnp.einsum('bom,onm->bon', h1, W3) + b3[None])
    out = jnp.einsum('bom,om->bo', h2, W4) + b4[None] + r1
    return out


if __name__ == "__main__":
    # Small but representative: LUT-nets have many output neurons; O=512 gives four
    # lane-dense 128-neuron tiles (grid of 4 parallel steps, >=2 per v7x TensorCore).
    B, in_features, out_features, fan_in, width_n = 16, 64, 512, 4, 8

    key = jax.random.PRNGKey(0)
    k_x, k_mask, k_params = jax.random.split(key, 3)

    # bf16-representable inputs keep the in-kernel one-hot selection matmul exact
    # (matches the quantized inputs the real module feeds this layer).
    x = jax.random.normal(k_x, (B, in_features), jnp.float32)
    x = x.astype(jnp.bfloat16).astype(jnp.float32)
    # imask(): fixed sparse connectivity, (out_features, fan_in) indices.
    imask = jax.random.randint(k_mask, (out_features, fan_in), 0, in_features,
                               dtype=jnp.int32)
    params = make_params(k_params, out_features=out_features,
                         fan_in=fan_in, width_n=width_n)
    packed = pack_params(imask, params, out_features=out_features,
                         fan_in=fan_in, width_n=width_n)

    fwd = jax.jit(functools.partial(sparse_linear_neq_forward,
                                    out_features=out_features,
                                    fan_in=fan_in, width_n=width_n))
    y = fwd(x, packed)
    jax.block_until_ready(y)

    y_ref = reference_forward(x, imask, params)
    assert y.shape == (B, out_features), y.shape
    max_err = float(jnp.max(jnp.abs(y - y_ref)))
    assert jnp.allclose(y, y_ref, atol=1e-3, rtol=1e-4), max_err

    print("KERNEL_OK")
</pallas_src>

<mosaic_0001>
module attributes {stable_mosaic.version = 11 : i64} {
  func.func @_neuron_tile_kernel(%arg0: i32, %arg1: memref<16x64xf32, #tpu.memory_space<vmem>>, %arg2: memref<4x128xi32, #tpu.memory_space<vmem>>, %arg3: memref<208x128xbf16, #tpu.memory_space<vmem>>, %arg4: memref<32x128xf32, #tpu.memory_space<vmem>>, %arg5: memref<16x128xf32, #tpu.memory_space<vmem>>, %arg6: memref<208x128xf32, #tpu.memory_space<vmem>>, %arg7: memref<64x128xf32, #tpu.memory_space<vmem>>) attributes {dimension_semantics = [#tpu.dimension_semantics<parallel>], iteration_bounds = array<i64: 4>, scalar_prefetch = 0 : i64, scratch_operands = 2 : i64, tpu.core_type = #tpu.core_type<tc>, window_params = [{pipeline_mode = #tpu.pipeline_mode<synchronous>, transform_indices = @transform_0, window_bounds = array<i64: 16, 64>}, {transform_indices = @transform_1, window_bounds = array<i64: 4, 128>}, {transform_indices = @transform_2, window_bounds = array<i64: 208, 128>}, {transform_indices = @transform_3, window_bounds = array<i64: 32, 128>}, {transform_indices = @transform_4, window_bounds = array<i64: 16, 128>}]} {
    %c0 = arith.constant 0 : index
    %c0_0 = arith.constant 0 : index
    %0 = vector.load %arg3[%c0, %c0_0] : memref<208x128xbf16, #tpu.memory_space<vmem>>, vector<208x128xbf16>
    %1 = arith.extf %0 : vector<208x128xbf16> to vector<208x128xf32>
    %c0_1 = arith.constant 0 : index
    %c0_2 = arith.constant 0 : index
    %2 = vector.load %arg6[%c0_1, %c0_2] : memref<208x128xf32, #tpu.memory_space<vmem>>, vector<208x128xf32>
    tpu.vector_store %arg6[%c0_1, %c0_2], %1 {strides = array<i32>} : memref<208x128xf32, #tpu.memory_space<vmem>>, vector<208x128xf32>,
    %c0_3 = arith.constant 0 : index
    %c0_4 = arith.constant 0 : index
    %3 = vector.load %arg1[%c0_3, %c0_4] : memref<16x64xf32, #tpu.memory_space<vmem>>, vector<16x64xf32>
    %4 = tpu.iota {dimensions = array<i32: 0>} : vector<64x128xi32>
    %c0_5 = arith.constant 0 : index
    %c0_6 = arith.constant 0 : index
    %5 = vector.load %arg2[%c0_5, %c0_6] : memref<4x128xi32, #tpu.memory_space<vmem>>, vector<1x128xi32>
    %6 = vector.broadcast %5 : vector<1x128xi32> to vector<64x128xi32>
    %7 = arith.cmpi eq, %6, %4 : vector<64x128xi32>
    %cst = arith.constant 1.000000e+00 : f32
    %cst_7 = arith.constant 0.000000e+00 : f32
    %8 = vector.broadcast %cst : f32 to vector<64x128xf32>
    %9 = vector.broadcast %cst_7 : f32 to vector<64x128xf32>
    %10 = arith.select %7, %8, %9 : vector<64x128xi1>, vector<64x128xf32>
    %cst_8 = arith.constant dense<0.000000e+00> : vector<16x128xf32>
    %11 = tpu.matmul %3, %10, %cst_8 {dimension_numbers = #tpu.dot_dimension_numbers<[1], [0], [0], [1], [0, 0, 1, 1], [], []>} : vector<16x64xf32>, vector<64x128xf32>, vector<16x128xf32> -> vector<16x128xf32>
    %c0_9 = arith.constant 0 : index
    %c0_10 = arith.constant 0 : index
    %12 = vector.load %arg7[%c0_9, %c0_10] : memref<64x128xf32, #tpu.memory_space<vmem>>, vector<16x128xf32>
    tpu.vector_store %arg7[%c0_9, %c0_10], %11 {strides = array<i32>} : memref<64x128xf32, #tpu.memory_space<vmem>>, vector<16x128xf32>,
    %c1 = arith.constant 1 : index
    %c0_11 = arith.constant 0 : index
    %13 = vector.load %arg2[%c1, %c0_11] : memref<4x128xi32, #tpu.memory_space<vmem>>, vector<1x128xi32>
    %14 = vector.broadcast %13 : vector<1x128xi32> to vector<64x128xi32>
    %15 = arith.cmpi eq, %14, %4 : vector<64x128xi32>
    %cst_12 = arith.constant 1.000000e+00 : f32
    %cst_13 = arith.constant 0.000000e+00 : f32
    %16 = vector.broadcast %cst_12 : f32 to vector<64x128xf32>
    %17 = vector.broadcast %cst_13 : f32 to vector<64x128xf32>
    %18 = arith.select %15, %16, %17 : vector<64x128xi1>, vector<64x128xf32>
    %cst_14 = arith.constant dense<0.000000e+00> : vector<16x128xf32>
    %19 = tpu.matmul %3, %18, %cst_14 {dimension_numbers = #tpu.dot_dimension_numbers<[1], [0], [0], [1], [0, 0, 1, 1], [], []>} : vector<16x64xf32>, vector<64x128xf32>, vector<16x128xf32> -> vector<16x128xf32>
    %c16 = arith.constant 16 : index
    %c0_15 = arith.constant 0 : index
    %20 = vector.load %arg7[%c16, %c0_15] : memref<64x128xf32, #tpu.memory_space<vmem>>, vector<16x128xf32>
    tpu.vector_store %arg7[%c16, %c0_15], %19 {strides = array<i32>} : memref<64x128xf32, #tpu.memory_space<vmem>>, vector<16x128xf32>,
    %c2 = arith.constant 2 : index
    %c0_16 = arith.constant 0 : index
    %21 = vector.load %arg2[%c2, %c0_16] : memref<4x128xi32, #tpu.memory_space<vmem>>, vector<1x128xi32>
    %22 = vector.broadcast %21 : vector<1x128xi32> to vector<64x128xi32>
    %23 = arith.cmpi eq, %22, %4 : vector<64x128xi32>
    %cst_17 = arith.constant 1.000000e+00 : f32
    %cst_18 = arith.constant 0.000000e+00 : f32
    %24 = vector.broadcast %cst_17 : f32 to vector<64x128xf32>
    %25 = vector.broadcast %cst_18 : f32 to vector<64x128xf32>
    %26 = arith.select %23, %24, %25 : vector<64x128xi1>, vector<64x128xf32>
    %cst_19 = arith.constant dense<0.000000e+00> : vector<16x128xf32>
    %27 = tpu.matmul %3, %26, %cst_19 {dimension_numbers = #tpu.dot_dimension_numbers<[1], [0], [0], [1], [0, 0, 1, 1], [], []>} : vector<16x64xf32>, vector<64x128xf32>, vector<16x128xf32> -> vector<16x128xf32>
    %c32 = arith.constant 32 : index
    %c0_20 = arith.constant 0 : index
    %28 = vector.load %arg7[%c32, %c0_20] : memref<64x128xf32, #tpu.memory_space<vmem>>, vector<16x128xf32>
    tpu.vector_store %arg7[%c32, %c0_20], %27 {strides = array<i32>} : memref<64x128xf32, #tpu.memory_space<vmem>>, vector<16x128xf32>,
    %c3 = arith.constant 3 : index
    %c0_21 = arith.constant 0 : index
    %29 = vector.load %arg2[%c3, %c0_21] : memref<4x128xi32, #tpu.memory_space<vmem>>, vector<1x128xi32>
    %30 = vector.broadcast %29 : vector<1x128xi32> to vector<64x128xi32>
    %31 = arith.cmpi eq, %30, %4 : vector<64x128xi32>
    %cst_22 = arith.constant 1.000000e+00 : f32
    %cst_23 = arith.constant 0.000000e+00 : f32
    %32 = vector.broadcast %cst_22 : f32 to vector<64x128xf32>
    %33 = vector.broadcast %cst_23 : f32 to vector<64x128xf32>
    %34 = arith.select %31, %32, %33 : vector<64x128xi1>, vector<64x128xf32>
    %cst_24 = arith.constant dense<0.000000e+00> : vector<16x128xf32>
    %35 = tpu.matmul %3, %34, %cst_24 {dimension_numbers = #tpu.dot_dimension_numbers<[1], [0], [0], [1], [0, 0, 1, 1], [], []>} : vector<16x64xf32>, vector<64x128xf32>, vector<16x128xf32> -> vector<16x128xf32>
    %c48 = arith.constant 48 : index
    %c0_25 = arith.constant 0 : index
    %36 = vector.load %arg7[%c48, %c0_25] : memref<64x128xf32, #tpu.memory_space<vmem>>, vector<16x128xf32>
    tpu.vector_store %arg7[%c48, %c0_25], %35 {strides = array<i32>} : memref<64x128xf32, #tpu.memory_space<vmem>>, vector<16x128xf32>,
    %c0_i32 = arith.constant 0 : i32
    %c2_i32 = arith.constant 2 : i32
    %37 = arith.addi %c0_i32, %c2_i32 : i32
    %c1_i32 = arith.constant 1 : i32
    scf.for %arg8 = %c0_i32 to %37 step %c1_i32  : i32 {
      %c8_i32 = arith.constant 8 : i32
      %38 = arith.muli %arg8, %c8_i32 : i32
      %39 = tpu.assume_multiple %38, 8 : i32
      %c8_i32_27 = arith.constant 8 : i32
      %40 = arith.muli %arg8, %c8_i32_27 : i32
      %c0_i32_28 = arith.constant 0 : i32
      %41 = arith.addi %c0_i32_28, %40 : i32
      %42 = tpu.assume_multiple %41, 8 : i32
      %43 = arith.index_cast %42 : i32 to index
      %c0_29 = arith.constant 0 : index
      %44 = vector.load %arg7[%43, %c0_29] : memref<64x128xf32, #tpu.memory_space<vmem>>, vector<8x128xf32>
      %c8_i32_30 = arith.constant 8 : i32
      %45 = arith.muli %arg8, %c8_i32_30 : i32
      %c16_i32 = arith.constant 16 : i32
      %46 = arith.addi %c16_i32, %45 : i32
      %47 = tpu.assume_multiple %46, 8 : i32
      %48 = arith.index_cast %47 : i32 to index
      %c0_31 = arith.constant 0 : index
      %49 = vector.load %arg7[%48, %c0_31] : memref<64x128xf32, #tpu.memory_space<vmem>>, vector<8x128xf32>
      %c8_i32_32 = arith.constant 8 : i32
      %50 = arith.muli %arg8, %c8_i32_32 : i32
      %c32_i32 = arith.constant 32 : i32
      %51 = arith.addi %c32_i32, %50 : i32
      %52 = tpu.assume_multiple %51, 8 : i32
      %53 = arith.index_cast %52 : i32 to index
      %c0_33 = arith.constant 0 : index
      %54 = vector.load %arg7[%53, %c0_33] : memref<64x128xf32, #tpu.memory_space<vmem>>, vector<8x128xf32>
      %c8_i32_34 = arith.constant 8 : i32
      %55 = arith.muli %arg8, %c8_i32_34 : i32
      %c48_i32 = arith.constant 48 : i32
      %56 = arith.addi %c48_i32, %55 : i32
      %57 = tpu.assume_multiple %56, 8 : i32
      %58 = arith.index_cast %57 : i32 to index
      %c0_35 = arith.constant 0 : index
      %59 = vector.load %arg7[%58, %c0_35] : memref<64x128xf32, #tpu.memory_space<vmem>>, vector<8x128xf32>
      %c0_36 = arith.constant 0 : index
      %c0_37 = arith.constant 0 : index
      %60 = vector.load %arg6[%c0_36, %c0_37] : memref<208x128xf32, #tpu.memory_space<vmem>>, vector<1x128xf32>
      %61 = vector.broadcast %60 : vector<1x128xf32> to vector<8x128xf32>
      %62 = arith.mulf %61, %44 : vector<8x128xf32>
      %c32_38 = arith.constant 32 : index
      %c0_39 = arith.constant 0 : index
      %63 = vector.load %arg6[%c32_38, %c0_39] : memref<208x128xf32, #tpu.memory_space<vmem>>, vector<1x128xf32>
      %64 = vector.broadcast %63 : vector<1x128xf32> to vector<8x128xf32>
      %65 = arith.mulf %64, %44 : vector<8x128xf32>
      %c1_40 = arith.constant 1 : index
      %c0_41 = arith.constant 0 : index
      %66 = vector.load %arg6[%c1_40, %c0_41] : memref<208x128xf32, #tpu.memory_space<vmem>>, vector<1x128xf32>
      %67 = vector.broadcast %66 : vector<1x128xf32> to vector<8x128xf32>
      %68 = arith.mulf %67, %49 : vector<8x128xf32>
      %69 = arith.addf %62, %68 : vector<8x128xf32>
      %c33 = arith.constant 33 : index
      %c0_42 = arith.constant 0 : index
      %70 = vector.load %arg6[%c33, %c0_42] : memref<208x128xf32, #tpu.memory_space<vmem>>, vector<1x128xf32>
      %71 = vector.broadcast %70 : vector<1x128xf32> to vector<8x128xf32>
      %72 = arith.mulf %71, %49 : vector<8x128xf32>
      %73 = arith.addf %65, %72 : vector<8x128xf32>
      %c2_43 = arith.constant 2 : index
      %c0_44 = arith.constant 0 : index
      %74 = vector.load %arg6[%c2_43, %c0_44] : memref<208x128xf32, #tpu.memory_space<vmem>>, vector<1x128xf32>
      %75 = vector.broadcast %74 : vector<1x128xf32> to vector<8x128xf32>
      %76 = arith.mulf %75, %54 : vector<8x128xf32>
      %77 = arith.addf %69, %76 : vector<8x128xf32>
      %c34 = arith.constant 34 : index
      %c0_45 = arith.constant 0 : index
      %78 = vector.load %arg6[%c34, %c0_45] : memref<208x128xf32, #tpu.memory_space<vmem>>, vector<1x128xf32>
      %79 = vector.broadcast %78 : vector<1x128xf32> to vector<8x128xf32>
      %80 = arith.mulf %79, %54 : vector<8x128xf32>
      %81 = arith.addf %73, %80 : vector<8x128xf32>
      %c3_46 = arith.constant 3 : index
      %c0_47 = arith.constant 0 : index
      %82 = vector.load %arg6[%c3_46, %c0_47] : memref<208x128xf32, #tpu.memory_space<vmem>>, vector<1x128xf32>
      %83 = vector.broadcast %82 : vector<1x128xf32> to vector<8x128xf32>
      %84 = arith.mulf %83, %59 : vector<8x128xf32>
      %85 = arith.addf %77, %84 : vector<8x128xf32>
      %c35 = arith.constant 35 : index
      %c0_48 = arith.constant 0 : index
      %86 = vector.load %arg6[%c35, %c0_48] : memref<208x128xf32, #tpu.memory_space<vmem>>, vector<1x128xf32>
      %87 = vector.broadcast %86 : vector<1x128xf32> to vector<8x128xf32>
      %88 = arith.mulf %87, %59 : vector<8x128xf32>
      %89 = arith.addf %81, %88 : vector<8x128xf32>
      %c0_49 = arith.constant 0 : index
      %c0_50 = arith.constant 0 : index
      %90 = vector.load %arg4[%c0_49, %c0_50] : memref<32x128xf32, #tpu.memory_space<vmem>>, vector<1x128xf32>
      %91 = vector.broadcast %90 : vector<1x128xf32> to vector<8x128xf32>
      %92 = arith.addf %85, %91 : vector<8x128xf32>
      %cst_51 = arith.constant 0.000000e+00 : f32
      %93 = vector.broadcast %cst_51 : f32 to vector<8x128xf32>
      %94 = arith.maximumf %92, %93 : vector<8x128xf32>
      %c4 = arith.constant 4 : index
      %c0_52 = arith.constant 0 : index
      %95 = vector.load %arg6[%c4, %c0_52] : memref<208x128xf32, #tpu.memory_space<vmem>>, vector<1x128xf32>
      %96 = vector.broadcast %95 : vector<1x128xf32> to vector<8x128xf32>
      %97 = arith.mulf %96, %44 : vector<8x128xf32>
      %c36 = arith.constant 36 : index
      %c0_53 = arith.constant 0 : index
      %98 = vector.load %arg6[%c36, %c0_53] : memref<208x128xf32, #tpu.memory_space<vmem>>, vector<1x128xf32>
      %99 = vector.broadcast %98 : vector<1x128xf32> to vector<8x128xf32>
      %100 = arith.mulf %99, %44 : vector<8x128xf32>
      %c5 = arith.constant 5 : index
      %c0_54 = arith.constant 0 : index
      %101 = vector.load %arg6[%c5, %c0_54] : memref<208x128xf32, #tpu.memory_space<vmem>>, vector<1x128xf32>
      %102 = vector.broadcast %101 : vector<1x128xf32> to vector<8x128xf32>
      %103 = arith.mulf %102, %49 : vector<8x128xf32>
      %104 = arith.addf %97, %103 : vector<8x128xf32>
      %c37 = arith.constant 37 : index
      %c0_55 = arith.constant 0 : index
      %105 = vector.load %arg6[%c37, %c0_55] : memref<208x128xf32, #tpu.memory_space<vmem>>, vector<1x128xf32>
      %106 = vector.broadcast %105 : vector<1x128xf32> to vector<8x128xf32>
      %107 = arith.mulf %106, %49 : vector<8x128xf32>
      %108 = arith.addf %100, %107 : vector<8x128xf32>
      %c6 = arith.constant 6 : index
      %c0_56 = arith.constant 0 : index
      %109 = vector.load %arg6[%c6, %c0_56] : memref<208x128xf32, #tpu.memory_space<vmem>>, vector<1x128xf32>
      %110 = vector.broadcast %109 : vector<1x128xf32> to vector<8x128xf32>
      %111 = arith.mulf %110, %54 : vector<8x128xf32>
      %112 = arith.addf %104, %111 : vector<8x128xf32>
      %c38 = arith.constant 38 : index
      %c0_57 = arith.constant 0 : index
      %113 = vector.load %arg6[%c38, %c0_57] : memref<208x128xf32, #tpu.memory_space<vmem>>, vector<1x128xf32>
      %114 = vector.broadcast %113 : vector<1x128xf32> to vector<8x128xf32>
      %115 = arith.mulf %114, %54 : vector<8x128xf32>
      %116 = arith.addf %108, %115 : vector<8x128xf32>
      %c7 = arith.constant 7 : index
      %c0_58 = arith.constant 0 : index
      %117 = vector.load %arg6[%c7, %c0_58] : memref<208x128xf32, #tpu.memory_space<vmem>>, vector<1x128xf32>
      %118 = vector.broadcast %117 : vector<1x128xf32> to vector<8x128xf32>
      %119 = arith.mulf %118, %59 : vector<8x128xf32>
      %120 = arith.addf %112, %119 : vector<8x128xf32>
      %c39 = arith.constant 39 : index
      %c0_59 = arith.constant 0 : index
      %121 = vector.load %arg6[%c39, %c0_59] : memref<208x128xf32, #tpu.memory_space<vmem>>, vector<1x128xf32>
      %122 = vector.broadcast %121 : vector<1x128xf32> to vector<8x128xf32>
      %123 = arith.mulf %122, %59 : vector<8x128xf32>
      %124 = arith.addf %116, %123 : vector<8x128xf32>
      %c1_60 = arith.constant 1 : index
      %c0_61 = arith.constant 0 : index
      %125 = vector.load %arg4[%c1_60, %c0_61] : memref<32x128xf32, #tpu.memory_space<vmem>>, vector<1x128xf32>
      %126 = vector.broadcast %125 : vector<1x128xf32> to vector<8x128xf32>
      %127 = arith.addf %120, %126 : vector<8x128xf32>
      %cst_62 = arith.constant 0.000000e+00 : f32
      %128 = vector.broadcast %cst_62 : f32 to vector<8x128xf32>
      %129 = arith.maximumf %127, %128 : vector<8x128xf32>
      %c8 = arith.constant 8 : index
      %c0_63 = arith.constant 0 : index
      %130 = vector.load %arg6[%c8, %c0_63] : memref<208x128xf32, #tpu.memory_space<vmem>>, vector<1x128xf32>
      %131 = vector.broadcast %130 : vector<1x128xf32> to vector<8x128xf32>
      %132 = arith.mulf %131, %44 : vector<8x128xf32>
      %c40 = arith.constant 40 : index
      %c0_64 = arith.constant 0 : index
      %133 = vector.load %arg6[%c40, %c0_64] : memref<208x128xf32, #tpu.memory_space<vmem>>, vector<1x128xf32>
      %134 = vector.broadcast %133 : vector<1x128xf32> to vector<8x128xf32>
      %135 = arith.mulf %134, %44 : vector<8x128xf32>
      %c9 = arith.constant 9 : index
      %c0_65 = arith.constant 0 : index
      %136 = vector.load %arg6[%c9, %c0_65] : memref<208x128xf32, #tpu.memory_space<vmem>>, vector<1x128xf32>
      %137 = vector.broadcast %136 : vector<1x128xf32> to vector<8x128xf32>
      %138 = arith.mulf %137, %49 : vector<8x128xf32>
      %139 = arith.addf %132, %138 : vector<8x128xf32>
      %c41 = arith.constant 41 : index
      %c0_66 = arith.constant 0 : index
      %140 = vector.load %arg6[%c41, %c0_66] : memref<208x128xf32, #tpu.memory_space<vmem>>, vector<1x128xf32>
      %141 = vector.broadcast %140 : vector<1x128xf32> to vector<8x128xf32>
      %142 = arith.mulf %141, %49 : vector<8x128xf32>
      %143 = arith.addf %135, %142 : vector<8x128xf32>
      %c10 = arith.constant 10 : index
      %c0_67 = arith.constant 0 : index
      %144 = vector.load %arg6[%c10, %c0_67] : memref<208x128xf32, #tpu.memory_space<vmem>>, vector<1x128xf32>
      %145 = vector.broadcast %144 : vector<1x128xf32> to vector<8x128xf32>
      %146 = arith.mulf %145, %54 : vector<8x128xf32>
      %147 = arith.addf %139, %146 : vector<8x128xf32>
      %c42 = arith.constant 42 : index
      %c0_68 = arith.constant 0 : index
      %148 = vector.load %arg6[%c42, %c0_68] : memref<208x128xf32, #tpu.memory_space<vmem>>, vector<1x128xf32>
      %149 = vector.broadcast %148 : vector<1x128xf32> to vector<8x128xf32>
      %150 = arith.mulf %149, %54 : vector<8x128xf32>
      %151 = arith.addf %143, %150 : vector<8x128xf32>
      %c11 = arith.constant 11 : index
      %c0_69 = arith.constant 0 : index
      %152 = vector.load %arg6[%c11, %c0_69] : memref<208x128xf32, #tpu.memory_space<vmem>>, vector<1x128xf32>
      %153 = vector.broadcast %152 : vector<1x128xf32> to vector<8x128xf32>
      %154 = arith.mulf %153, %59 : vector<8x128xf32>
      %155 = arith.addf %147, %154 : vector<8x128xf32>
      %c43 = arith.constant 43 : index
      %c0_70 = arith.constant 0 : index
      %156 = vector.load %arg6[%c43, %c0_70] : memref<208x128xf32, #tpu.memory_space<vmem>>, vector<1x128xf32>
      %157 = vector.broadcast %156 : vector<1x128xf32> to vector<8x128xf32>
      %158 = arith.mulf %157, %59 : vector<8x128xf32>
      %159 = arith.addf %151, %158 : vector<8x128xf32>
      %c2_71 = arith.constant 2 : index
      %c0_72 = arith.constant 0 : index
      %160 = vector.load %arg4[%c2_71, %c0_72] : memref<32x128xf32, #tpu.memory_space<vmem>>, vector<1x128xf32>
      %161 = vector.broadcast %160 : vector<1x128xf32> to vector<8x128xf32>
      %162 = arith.addf %155, %161 : vector<8x128xf32>
      %cst_73 = arith.constant 0.000000e+00 : f32
      %163 = vector.broadcast %cst_73 : f32 to vector<8x128xf32>
      %164 = arith.maximumf %162, %163 : vector<8x128xf32>
      %c12 = arith.constant 12 : index
      %c0_74 = arith.constant 0 : index
      %165 = vector.load %arg6[%c12, %c0_74] : memref<208x128xf32, #tpu.memory_space<vmem>>, vector<1x128xf32>
      %166 = vector.broadcast %165 : vector<1x128xf32> to vector<8x128xf32>
      %167 = arith.mulf %166, %44 : vector<8x128xf32>
      %c44 = arith.constant 44 : index
      %c0_75 = arith.constant 0 : index
      %168 = vector.load %arg6[%c44, %c0_75] : memref<208x128xf32, #tpu.memory_space<vmem>>, vector<1x128xf32>
      %169 = vector.broadcast %168 : vector<1x128xf32> to vector<8x128xf32>
      %170 = arith.mulf %169, %44 : vector<8x128xf32>
      %c13 = arith.constant 13 : index
      %c0_76 = arith.constant 0 : index
      %171 = vector.load %arg6[%c13, %c0_76] : memref<208x128xf32, #tpu.memory_space<vmem>>, vector<1x128xf32>
      %172 = vector.broadcast %171 : vector<1x128xf32> to vector<8x128xf32>
      %173 = arith.mulf %172, %49 : vector<8x128xf32>
      %174 = arith.addf %167, %173 : vector<8x128xf32>
      %c45 = arith.constant 45 : index
      %c0_77 = arith.constant 0 : index
      %175 = vector.load %arg6[%c45, %c0_77] : memref<208x128xf32, #tpu.memory_space<vmem>>, vector<1x128xf32>
      %176 = vector.broadcast %175 : vector<1x128xf32> to vector<8x128xf32>
      %177 = arith.mulf %176, %49 : vector<8x128xf32>
      %178 = arith.addf %170, %177 : vector<8x128xf32>
      %c14 = arith.constant 14 : index
      %c0_78 = arith.constant 0 : index
      %179 = vector.load %arg6[%c14, %c0_78] : memref<208x128xf32, #tpu.memory_space<vmem>>, vector<1x128xf32>
      %180 = vector.broadcast %179 : vector<1x128xf32> to vector<8x128xf32>
      %181 = arith.mulf %180, %54 : vector<8x128xf32>
      %182 = arith.addf %174, %181 : vector<8x128xf32>
      %c46 = arith.constant 46 : index
      %c0_79 = arith.constant 0 : index
      %183 = vector.load %arg6[%c46, %c0_79] : memref<208x128xf32, #tpu.memory_space<vmem>>, vector<1x128xf32>
      %184 = vector.broadcast %183 : vector<1x128xf32> to vector<8x128xf32>
      %185 = arith.mulf %184, %54 : vector<8x128xf32>
      %186 = arith.addf %178, %185 : vector<8x128xf32>
      %c15 = arith.constant 15 : index
      %c0_80 = arith.constant 0 : index
      %187 = vector.load %arg6[%c15, %c0_80] : memref<208x128xf32, #tpu.memory_space<vmem>>, vector<1x128xf32>
      %188 = vector.broadcast %187 : vector<1x128xf32> to vector<8x128xf32>
      %189 = arith.mulf %188, %59 : vector<8x128xf32>
      %190 = arith.addf %182, %189 : vector<8x128xf32>
      %c47 = arith.constant 47 : index
      %c0_81 = arith.constant 0 : index
      %191 = vector.load %arg6[%c47, %c0_81] : memref<208x128xf32, #tpu.memory_space<vmem>>, vector<1x128xf32>
      %192 = vector.broadcast %191 : vector<1x128xf32> to vector<8x128xf32>
      %193 = arith.mulf %192, %59 : vector<8x128xf32>
      %194 = arith.addf %186, %193 : vector<8x128xf32>
      %c3_82 = arith.constant 3 : index
      %c0_83 = arith.constant 0 : index
      %195 = vector.load %arg4[%c3_82, %c0_83] : memref<32x128xf32, #tpu.memory_space<vmem>>, vector<1x128xf32>
      %196 = vector.broadcast %195 : vector<1x128xf32> to vector<8x128xf32>
      %197 = arith.addf %190, %196 : vector<8x128xf32>
      %cst_84 = arith.constant 0.000000e+00 : f32
      %198 = vector.broadcast %cst_84 : f32 to vector<8x128xf32>
      %199 = arith.maximumf %197, %198 : vector<8x128xf32>
      %c16_85 = arith.constant 16 : index
      %c0_86 = arith.constant 0 : index
      %200 = vector.load %arg6[%c16_85, %c0_86] : memref<208x128xf32, #tpu.memory_space<vmem>>, vector<1x128xf32>
      %201 = vector.broadcast %200 : vector<1x128xf32> to vector<8x128xf32>
      %202 = arith.mulf %201, %44 : vector<8x128xf32>
      %c48_87 = arith.constant 48 : index
      %c0_88 = arith.constant 0 : index
      %203 = vector.load %arg6[%c48_87, %c0_88] : memref<208x128xf32, #tpu.memory_space<vmem>>, vector<1x128xf32>
      %204 = vector.broadcast %203 : vector<1x128xf32> to vector<8x128xf32>
      %205 = arith.mulf %204, %44 : vector<8x128xf32>
      %c17 = arith.constant 17 : index
      %c0_89 = arith.constant 0 : index
      %206 = vector.load %arg6[%c17, %c0_89] : memref<208x128xf32, #tpu.memory_space<vmem>>, vector<1x128xf32>
      %207 = vector.broadcast %206 : vector<1x128xf32> to vector<8x128xf32>
      %208 = arith.mulf %207, %49 : vector<8x128xf32>
      %209 = arith.addf %202, %208 : vector<8x128xf32>
      %c49 = arith.constant 49 : index
      %c0_90 = arith.constant 0 : index
      %210 = vector.load %arg6[%c49, %c0_90] : memref<208x128xf32, #tpu.memory_space<vmem>>, vector<1x128xf32>
      %211 = vector.broadcast %210 : vector<1x128xf32> to vector<8x128xf32>
      %212 = arith.mulf %211, %49 : vector<8x128xf32>
      %213 = arith.addf %205, %212 : vector<8x128xf32>
      %c18 = arith.constant 18 : index
      %c0_91 = arith.constant 0 : index
      %214 = vector.load %arg6[%c18, %c0_91] : memref<208x128xf32, #tpu.memory_space<vmem>>, vector<1x128xf32>
      %215 = vector.broadcast %214 : vector<1x128xf32> to vector<8x128xf32>
      %216 = arith.mulf %215, %54 : vector<8x128xf32>
      %217 = arith.addf %209, %216 : vector<8x128xf32>
      %c50 = arith.constant 50 : index
      %c0_92 = arith.constant 0 : index
      %218 = vector.load %arg6[%c50, %c0_92] : memref<208x128xf32, #tpu.memory_space<vmem>>, vector<1x128xf32>
      %219 = vector.broadcast %218 : vector<1x128xf32> to vector<8x128xf32>
      %220 = arith.mulf %219, %54 : vector<8x128xf32>
      %221 = arith.addf %213, %220 : vector<8x128xf32>
      %c19 = arith.constant 19 : index
      %c0_93 = arith.constant 0 : index
      %222 = vector.load %arg6[%c19, %c0_93] : memref<208x128xf32, #tpu.memory_space<vmem>>, vector<1x128xf32>
      %223 = vector.broadcast %222 : vector<1x128xf32> to vector<8x128xf32>
      %224 = arith.mulf %223, %59 : vector<8x128xf32>
      %225 = arith.addf %217, %224 : vector<8x128xf32>
      %c51 = arith.constant 51 : index
      %c0_94 = arith.constant 0 : index
      %226 = vector.load %arg6[%c51, %c0_94] : memref<208x128xf32, #tpu.memory_space<vmem>>, vector<1x128xf32>
      %227 = vector.broadcast %226 : vector<1x128xf32> to vector<8x128xf32>
      %228 = arith.mulf %227, %59 : vector<8x128xf32>
      %229 = arith.addf %221, %228 : vector<8x128xf32>
      %c4_95 = arith.constant 4 : index
      %c0_96 = arith.constant 0 : index
      %230 = vector.load %arg4[%c4_95, %c0_96] : memref<32x128xf32, #tpu.memory_space<vmem>>, vector<1x128xf32>
      %231 = vector.broadcast %230 : vector<1x128xf32> to vector<8x128xf32>
      %232 = arith.addf %225, %231 : vector<8x128xf32>
      %cst_97 = arith.constant 0.000000e+00 : f32
      %233 = vector.broadcast %cst_97 : f32 to vector<8x128xf32>
      %234 = arith.maximumf %232, %233 : vector<8x128xf32>
      %c20 = arith.constant 20 : index
      %c0_98 = arith.constant 0 : index
      %235 = vector.load %arg6[%c20, %c0_98] : memref<208x128xf32, #tpu.memory_space<vmem>>, vector<1x128xf32>
      %236 = vector.broadcast %235 : vector<1x128xf32> to vector<8x128xf32>
      %237 = arith.mulf %236, %44 : vector<8x128xf32>
      %c52 = arith.constant 52 : index
      %c0_99 = arith.constant 0 : index
      %238 = vector.load %arg6[%c52, %c0_99] : memref<208x128xf32, #tpu.memory_space<vmem>>, vector<1x128xf32>
      %239 = vector.broadcast %238 : vector<1x128xf32> to vector<8x128xf32>
      %240 = arith.mulf %239, %44 : vector<8x128xf32>
      %c21 = arith.constant 21 : index
      %c0_100 = arith.constant 0 : index
      %241 = vector.load %arg6[%c21, %c0_100] : memref<208x128xf32, #tpu.memory_space<vmem>>, vector<1x128xf32>
      %242 = vector.broadcast %241 : vector<1x128xf32> to vector<8x128xf32>
      %243 = arith.mulf %242, %49 : vector<8x128xf32>
      %244 = arith.addf %237, %243 : vector<8x128xf32>
      %c53 = arith.constant 53 : index
      %c0_101 = arith.constant 0 : index
      %245 = vector.load %arg6[%c53, %c0_101] : memref<208x128xf32, #tpu.memory_space<vmem>>, vector<1x128xf32>
      %246 = vector.broadcast %245 : vector<1x128xf32> to vector<8x128xf32>
      %247 = arith.mulf %246, %49 : vector<8x128xf32>
      %248 = arith.addf %240, %247 : vector<8x128xf32>
      %c22 = arith.constant 22 : index
      %c0_102 = arith.constant 0 : index
      %249 = vector.load %arg6[%c22, %c0_102] : memref<208x128xf32, #tpu.memory_space<vmem>>, vector<1x128xf32>
      %250 = vector.broadcast %249 : vector<1x128xf32> to vector<8x128xf32>
      %251 = arith.mulf %250, %54 : vector<8x128xf32>
      %252 = arith.addf %244, %251 : vector<8x128xf32>
      %c54 = arith.constant 54 : index
      %c0_103 = arith.constant 0 : index
      %253 = vector.load %arg6[%c54, %c0_103] : memref<208x128xf32, #tpu.memory_space<vmem>>, vector<1x128xf32>
      %254 = vector.broadcast %253 : vector<1x128xf32> to vector<8x128xf32>
      %255 = arith.mulf %254, %54 : vector<8x128xf32>
      %256 = arith.addf %248, %255 : vector<8x128xf32>
      %c23 = arith.constant 23 : index
      %c0_104 = arith.constant 0 : index
      %257 = vector.load %arg6[%c23, %c0_104] : memref<208x128xf32, #tpu.memory_space<vmem>>, vector<1x128xf32>
      %258 = vector.broadcast %257 : vector<1x128xf32> to vector<8x128xf32>
      %259 = arith.mulf %258, %59 : vector<8x128xf32>
      %260 = arith.addf %252, %259 : vector<8x128xf32>
      %c55 = arith.constant 55 : index
      %c0_105 = arith.constant 0 : index
      %261 = vector.load %arg6[%c55, %c0_105] : memref<208x128xf32, #tpu.memory_space<vmem>>, vector<1x128xf32>
      %262 = vector.broadcast %261 : vector<1x128xf32> to vector<8x128xf32>
      %263 = arith.mulf %262, %59 : vector<8x128xf32>
      %264 = arith.addf %256, %263 : vector<8x128xf32>
      %c5_106 = arith.constant 5 : index
      %c0_107 = arith.constant 0 : index
      %265 = vector.load %arg4[%c5_106, %c0_107] : memref<32x128xf32, #tpu.memory_space<vmem>>, vector<1x128xf32>
      %266 = vector.broadcast %265 : vector<1x128xf32> to vector<8x128xf32>
      %267 = arith.addf %260, %266 : vector<8x128xf32>
      %cst_108 = arith.constant 0.000000e+00 : f32
      %268 = vector.broadcast %cst_108 : f32 to vector<8x128xf32>
      %269 = arith.maximumf %267, %268 : vector<8x128xf32>
      %c24 = arith.constant 24 : index
      %c0_109 = arith.constant 0 : index
      %270 = vector.load %arg6[%c24, %c0_109] : memref<208x128xf32, #tpu.memory_space<vmem>>, vector<1x128xf32>
      %271 = vector.broadcast %270 : vector<1x128xf32> to vector<8x128xf32>
      %272 = arith.mulf %271, %44 : vector<8x128xf32>
      %c56 = arith.constant 56 : index
      %c0_110 = arith.constant 0 : index
      %273 = vector.load %arg6[%c56, %c0_110] : memref<208x128xf32, #tpu.memory_space<vmem>>, vector<1x128xf32>
      %274 = vector.broadcast %273 : vector<1x128xf32> to vector<8x128xf32>
      %275 = arith.mulf %274, %44 : vector<8x128xf32>
      %c25 = arith.constant 25 : index
      %c0_111 = arith.constant 0 : index
      %276 = vector.load %arg6[%c25, %c0_111] : memref<208x128xf32, #tpu.memory_space<vmem>>, vector<1x128xf32>
      %277 = vector.broadcast %276 : vector<1x128xf32> to vector<8x128xf32>
      %278 = arith.mulf %277, %49 : vector<8x128xf32>
      %279 = arith.addf %272, %278 : vector<8x128xf32>
      %c57 = arith.constant 57 : index
      %c0_112 = arith.constant 0 : index
      %280 = vector.load %arg6[%c57, %c0_112] : memref<208x128xf32, #tpu.memory_space<vmem>>, vector<1x128xf32>
      %281 = vector.broadcast %280 : vector<1x128xf32> to vector<8x128xf32>
      %282 = arith.mulf %281, %49 : vector<8x128xf32>
      %283 = arith.addf %275, %282 : vector<8x128xf32>
      %c26 = arith.constant 26 : index
      %c0_113 = arith.constant 0 : index
      %284 = vector.load %arg6[%c26, %c0_113] : memref<208x128xf32, #tpu.memory_space<vmem>>, vector<1x128xf32>
      %285 = vector.broadcast %284 : vector<1x128xf32> to vector<8x128xf32>
      %286 = arith.mulf %285, %54 : vector<8x128xf32>
      %287 = arith.addf %279, %286 : vector<8x128xf32>
      %c58 = arith.constant 58 : index
      %c0_114 = arith.constant 0 : index
      %288 = vector.load %arg6[%c58, %c0_114] : memref<208x128xf32, #tpu.memory_space<vmem>>, vector<1x128xf32>
      %289 = vector.broadcast %288 : vector<1x128xf32> to vector<8x128xf32>
      %290 = arith.mulf %289, %54 : vector<8x128xf32>
      %291 = arith.addf %283, %290 : vector<8x128xf32>
      %c27 = arith.constant 27 : index
      %c0_115 = arith.constant 0 : index
      %292 = vector.load %arg6[%c27, %c0_115] : memref<208x128xf32, #tpu.memory_space<vmem>>, vector<1x128xf32>
      %293 = vector.broadcast %292 : vector<1x128xf32> to vector<8x128xf32>
      %294 = arith.mulf %293, %59 : vector<8x128xf32>
      %295 = arith.addf %287, %294 : vector<8x128xf32>
      %c59 = arith.constant 59 : index
      %c0_116 = arith.constant 0 : index
      %296 = vector.load %arg6[%c59, %c0_116] : memref<208x128xf32, #tpu.memory_space<vmem>>, vector<1x128xf32>
      %297 = vector.broadcast %296 : vector<1x128xf32> to vector<8x128xf32>
      %298 = arith.mulf %297, %59 : vector<8x128xf32>
      %299 = arith.addf %291, %298 : vector<8x128xf32>
      %c6_117 = arith.constant 6 : index
      %c0_118 = arith.constant 0 : index
      %300 = vector.load %arg4[%c6_117, %c0_118] : memref<32x128xf32, #tpu.memory_space<vmem>>, vector<1x128xf32>
      %301 = vector.broadcast %300 : vector<1x128xf32> to vector<8x128xf32>
      %302 = arith.addf %295, %301 : vector<8x128xf32>
      %cst_119 = arith.constant 0.000000e+00 : f32
      %303 = vector.broadcast %cst_119 : f32 to vector<8x128xf32>
      %304 = arith.maximumf %302, %303 : vector<8x128xf32>
      %c28 = arith.constant 28 : index
      %c0_120 = arith.constant 0 : index
      %305 = vector.load %arg6[%c28, %c0_120] : memref<208x128xf32, #tpu.memory_space<vmem>>, vector<1x128xf32>
      %306 = vector.broadcast %305 : vector<1x128xf32> to vector<8x128xf32>
      %307 = arith.mulf %306, %44 : vector<8x128xf32>
      %c60 = arith.constant 60 : index
      %c0_121 = arith.constant 0 : index
      %308 = vector.load %arg6[%c60, %c0_121] : memref<208x128xf32, #tpu.memory_space<vmem>>, vector<1x128xf32>
      %309 = vector.broadcast %308 : vector<1x128xf32> to vector<8x128xf32>
      %310 = arith.mulf %309, %44 : vector<8x128xf32>
      %c29 = arith.constant 29 : index
      %c0_122 = arith.constant 0 : index
      %311 = vector.load %arg6[%c29, %c0_122] : memref<208x128xf32, #tpu.memory_space<vmem>>, vector<1x128xf32>
      %312 = vector.broadcast %311 : vector<1x128xf32> to vector<8x128xf32>
      %313 = arith.mulf %312, %49 : vector<8x128xf32>
      %314 = arith.addf %307, %313 : vector<8x128xf32>
      %c61 = arith.constant 61 : index
      %c0_123 = arith.constant 0 : index
      %315 = vector.load %arg6[%c61, %c0_123] : memref<208x128xf32, #tpu.memory_space<vmem>>, vector<1x128xf32>
      %316 = vector.broadcast %315 : vector<1x128xf32> to vector<8x128xf32>
      %317 = arith.mulf %316, %49 : vector<8x128xf32>
      %318 = arith.addf %310, %317 : vector<8x128xf32>
      %c30 = arith.constant 30 : index
      %c0_124 = arith.constant 0 : index
      %319 = vector.load %arg6[%c30, %c0_124] : memref<208x128xf32, #tpu.memory_space<vmem>>, vector<1x128xf32>
      %320 = vector.broadcast %319 : vector<1x128xf32> to vector<8x128xf32>
      %321 = arith.mulf %320, %54 : vector<8x128xf32>
      %322 = arith.addf %314, %321 : vector<8x128xf32>
      %c62 = arith.constant 62 : index
      %c0_125 = arith.constant 0 : index
      %323 = vector.load %arg6[%c62, %c0_125] : memref<208x128xf32, #tpu.memory_space<vmem>>, vector<1x128xf32>
      %324 = vector.broadcast %323 : vector<1x128xf32> to vector<8x128xf32>
      %325 = arith.mulf %324, %54 : vector<8x128xf32>
      %326 = arith.addf %318, %325 : vector<8x128xf32>
      %c31 = arith.constant 31 : index
      %c0_126 = arith.constant 0 : index
      %327 = vector.load %arg6[%c31, %c0_126] : memref<208x128xf32, #tpu.memory_space<vmem>>, vector<1x128xf32>
      %328 = vector.broadcast %327 : vector<1x128xf32> to vector<8x128xf32>
      %329 = arith.mulf %328, %59 : vector<8x128xf32>
      %330 = arith.addf %322, %329 : vector<8x128xf32>
      %c63 = arith.constant 63 : index
      %c0_127 = arith.constant 0 : index
      %331 = vector.load %arg6[%c63, %c0_127] : memref<208x128xf32, #tpu.memory_space<vmem>>, vector<1x128xf32>
      %332 = vector.broadcast %331 : vector<1x128xf32> to vector<8x128xf32>
      %333 = arith.mulf %332, %59 : vector<8x128xf32>
      %334 = arith.addf %326, %333 : vector<8x128xf32>
      %c7_128 = arith.constant 7 : index
      %c0_129 = arith.constant 0 : index
      %335 = vector.load %arg4[%c7_128, %c0_129] : memref<32x128xf32, #tpu.memory_space<vmem>>, vector<1x128xf32>
      %336 = vector.broadcast %335 : vector<1x128xf32> to vector<8x128xf32>
      %337 = arith.addf %330, %336 : vector<8x128xf32>
      %cst_130 = arith.constant 0.000000e+00 : f32
      %338 = vector.broadcast %cst_130 : f32 to vector<8x128xf32>
      %339 = arith.maximumf %337, %338 : vector<8x128xf32>
      %c64 = arith.constant 64 : index
      %c0_131 = arith.constant 0 : index
      %340 = vector.load %arg6[%c64, %c0_131] : memref<208x128xf32, #tpu.memory_space<vmem>>, vector<1x128xf32>
      %341 = vector.broadcast %340 : vector<1x128xf32> to vector<8x128xf32>
      %342 = arith.mulf %341, %94 : vector<8x128xf32>
      %c65 = arith.constant 65 : index
      %c0_132 = arith.constant 0 : index
      %343 = vector.load %arg6[%c65, %c0_132] : memref<208x128xf32, #tpu.memory_space<vmem>>, vector<1x128xf32>
      %344 = vector.broadcast %343 : vector<1x128xf32> to vector<8x128xf32>
      %345 = arith.mulf %344, %129 : vector<8x128xf32>
      %346 = arith.addf %342, %345 : vector<8x128xf32>
      %c66 = arith.constant 66 : index
      %c0_133 = arith.constant 0 : index
      %347 = vector.load %arg6[%c66, %c0_133] : memref<208x128xf32, #tpu.memory_space<vmem>>, vector<1x128xf32>
      %348 = vector.broadcast %347 : vector<1x128xf32> to vector<8x128xf32>
      %349 = arith.mulf %348, %164 : vector<8x128xf32>
      %350 = arith.addf %346, %349 : vector<8x128xf32>
      %c67 = arith.constant 67 : index
      %c0_134 = arith.constant 0 : index
      %351 = vector.load %arg6[%c67, %c0_134] : memref<208x128xf32, #tpu.memory_space<vmem>>, vector<1x128xf32>
      %352 = vector.broadcast %351 : vector<1x128xf32> to vector<8x128xf32>
      %353 = arith.mulf %352, %199 : vector<8x128xf32>
      %354 = arith.addf %350, %353 : vector<8x128xf32>
      %c68 = arith.constant 68 : index
      %c0_135 = arith.constant 0 : index
      %355 = vector.load %arg6[%c68, %c0_135] : memref<208x128xf32, #tpu.memory_space<vmem>>, vector<1x128xf32>
      %356 = vector.broadcast %355 : vector<1x128xf32> to vector<8x128xf32>
      %357 = arith.mulf %356, %234 : vector<8x128xf32>
      %358 = arith.addf %354, %357 : vector<8x128xf32>
      %c69 = arith.constant 69 : index
      %c0_136 = arith.constant 0 : index
      %359 = vector.load %arg6[%c69, %c0_136] : memref<208x128xf32, #tpu.memory_space<vmem>>, vector<1x128xf32>
      %360 = vector.broadcast %359 : vector<1x128xf32> to vector<8x128xf32>
      %361 = arith.mulf %360, %269 : vector<8x128xf32>
      %362 = arith.addf %358, %361 : vector<8x128xf32>
      %c70 = arith.constant 70 : index
      %c0_137 = arith.constant 0 : index
      %363 = vector.load %arg6[%c70, %c0_137] : memref<208x128xf32, #tpu.memory_space<vmem>>, vector<1x128xf32>
      %364 = vector.broadcast %363 : vector<1x128xf32> to vector<8x128xf32>
      %365 = arith.mulf %364, %304 : vector<8x128xf32>
      %366 = arith.addf %362, %365 : vector<8x128xf32>
      %c71 = arith.constant 71 : index
      %c0_138 = arith.constant 0 : index
      %367 = vector.load %arg6[%c71, %c0_138] : memref<208x128xf32, #tpu.memory_space<vmem>>, vector<1x128xf32>
      %368 = vector.broadcast %367 : vector<1x128xf32> to vector<8x128xf32>
      %369 = arith.mulf %368, %339 : vector<8x128xf32>
      %370 = arith.addf %366, %369 : vector<8x128xf32>
      %c8_139 = arith.constant 8 : index
      %c0_140 = arith.constant 0 : index
      %371 = vector.load %arg4[%c8_139, %c0_140] : memref<32x128xf32, #tpu.memory_space<vmem>>, vector<1x128xf32>
      %372 = vector.broadcast %371 : vector<1x128xf32> to vector<8x128xf32>
      %373 = arith.addf %370, %372 : vector<8x128xf32>
      %374 = arith.addf %373, %89 : vector<8x128xf32>
      %cst_141 = arith.constant 0.000000e+00 : f32
      %375 = vector.broadcast %cst_141 : f32 to vector<8x128xf32>
      %376 = arith.maximumf %374, %375 : vector<8x128xf32>
      %c72 = arith.constant 72 : index
      %c0_142 = arith.constant 0 : index
      %377 = vector.load %arg6[%c72, %c0_142] : memref<208x128xf32, #tpu.memory_space<vmem>>, vector<1x128xf32>
      %378 = vector.broadcast %377 : vector<1x128xf32> to vector<8x128xf32>
      %379 = arith.mulf %378, %94 : vector<8x128xf32>
      %c73 = arith.constant 73 : index
      %c0_143 = arith.constant 0 : index
      %380 = vector.load %arg6[%c73, %c0_143] : memref<208x128xf32, #tpu.memory_space<vmem>>, vector<1x128xf32>
      %381 = vector.broadcast %380 : vector<1x128xf32> to vector<8x128xf32>
      %382 = arith.mulf %381, %129 : vector<8x128xf32>
      %383 = arith.addf %379, %382 : vector<8x128xf32>
      %c74 = arith.constant 74 : index
      %c0_144 = arith.constant 0 : index
      %384 = vector.load %arg6[%c74, %c0_144] : memref<208x128xf32, #tpu.memory_space<vmem>>, vector<1x128xf32>
      %385 = vector.broadcast %384 : vector<1x128xf32> to vector<8x128xf32>
      %386 = arith.mulf %385, %164 : vector<8x128xf32>
      %387 = arith.addf %383, %386 : vector<8x128xf32>
      %c75 = arith.constant 75 : index
      %c0_145 = arith.constant 0 : index
      %388 = vector.load %arg6[%c75, %c0_145] : memref<208x128xf32, #tpu.memory_space<vmem>>, vector<1x128xf32>
      %389 = vector.broadcast %388 : vector<1x128xf32> to vector<8x128xf32>
      %390 = arith.mulf %389, %199 : vector<8x128xf32>
      %391 = arith.addf %387, %390 : vector<8x128xf32>
      %c76 = arith.constant 76 : index
      %c0_146 = arith.constant 0 : index
      %392 = vector.load %arg6[%c76, %c0_146] : memref<208x128xf32, #tpu.memory_space<vmem>>, vector<1x128xf32>
      %393 = vector.broadcast %392 : vector<1x128xf32> to vector<8x128xf32>
      %394 = arith.mulf %393, %234 : vector<8x128xf32>
      %395 = arith.addf %391, %394 : vector<8x128xf32>
      %c77 = arith.constant 77 : index
      %c0_147 = arith.constant 0 : index
      %396 = vector.load %arg6[%c77, %c0_147] : memref<208x128xf32, #tpu.memory_space<vmem>>, vector<1x128xf32>
      %397 = vector.broadcast %396 : vector<1x128xf32> to vector<8x128xf32>
      %398 = arith.mulf %397, %269 : vector<8x128xf32>
      %399 = arith.addf %395, %398 : vector<8x128xf32>
      %c78 = arith.constant 78 : index
      %c0_148 = arith.constant 0 : index
      %400 = vector.load %arg6[%c78, %c0_148] : memref<208x128xf32, #tpu.memory_space<vmem>>, vector<1x128xf32>
      %401 = vector.broadcast %400 : vector<1x128xf32> to vector<8x128xf32>
      %402 = arith.mulf %401, %304 : vector<8x128xf32>
      %403 = arith.addf %399, %402 : vector<8x128xf32>
      %c79 = arith.constant 79 : index
      %c0_149 = arith.constant 0 : index
      %404 = vector.load %arg6[%c79, %c0_149] : memref<208x128xf32, #tpu.memory_space<vmem>>, vector<1x128xf32>
      %405 = vector.broadcast %404 : vector<1x128xf32> to vector<8x128xf32>
      %406 = arith.mulf %405, %339 : vector<8x128xf32>
      %407 = arith.addf %403, %406 : vector<8x128xf32>
      %c9_150 = arith.constant 9 : index
      %c0_151 = arith.constant 0 : index
      %408 = vector.load %arg4[%c9_150, %c0_151] : memref<32x128xf32, #tpu.memory_space<vmem>>, vector<1x128xf32>
      %409 = vector.broadcast %408 : vector<1x128xf32> to vector<8x128xf32>
      %410 = arith.addf %407, %409 : vector<8x128xf32>
      %411 = arith.addf %410, %124 : vector<8x128xf32>
      %cst_152 = arith.constant 0.000000e+00 : f32
      %412 = vector.broadcast %cst_152 : f32 to vector<8x128xf32>
      %413 = arith.maximumf %411, %412 : vector<8x128xf32>
      %c80 = arith.constant 80 : index
      %c0_153 = arith.constant 0 : index
      %414 = vector.load %arg6[%c80, %c0_153] : memref<208x128xf32, #tpu.memory_space<vmem>>, vector<1x128xf32>
      %415 = vector.broadcast %414 : vector<1x128xf32> to vector<8x128xf32>
      %416 = arith.mulf %415, %94 : vector<8x128xf32>
      %c81 = arith.constant 81 : index
      %c0_154 = arith.constant 0 : index
      %417 = vector.load %arg6[%c81, %c0_154] : memref<208x128xf32, #tpu.memory_space<vmem>>, vector<1x128xf32>
      %418 = vector.broadcast %417 : vector<1x128xf32> to vector<8x128xf32>
      %419 = arith.mulf %418, %129 : vector<8x128xf32>
      %420 = arith.addf %416, %419 : vector<8x128xf32>
      %c82 = arith.constant 82 : index
      %c0_155 = arith.constant 0 : index
      %421 = vector.load %arg6[%c82, %c0_155] : memref<208x128xf32, #tpu.memory_space<vmem>>, vector<1x128xf32>
      %422 = vector.broadcast %421 : vector<1x128xf32> to vector<8x128xf32>
      %423 = arith.mulf %422, %164 : vector<8x128xf32>
      %424 = arith.addf %420, %423 : vector<8x128xf32>
      %c83 = arith.constant 83 : index
      %c0_156 = arith.constant 0 : index
      %425 = vector.load %arg6[%c83, %c0_156] : memref<208x128xf32, #tpu.memory_space<vmem>>, vector<1x128xf32>
      %426 = vector.broadcast %425 : vector<1x128xf32> to vector<8x128xf32>
      %427 = arith.mulf %426, %199 : vector<8x128xf32>
      %428 = arith.addf %424, %427 : vector<8x128xf32>
      %c84 = arith.constant 84 : index
      %c0_157 = arith.constant 0 : index
      %429 = vector.load %arg6[%c84, %c0_157] : memref<208x128xf32, #tpu.memory_space<vmem>>, vector<1x128xf32>
      %430 = vector.broadcast %429 : vector<1x128xf32> to vector<8x128xf32>
      %431 = arith.mulf %430, %234 : vector<8x128xf32>
      %432 = arith.addf %428, %431 : vector<8x128xf32>
      %c85 = arith.constant 85 : index
      %c0_158 = arith.constant 0 : index
      %433 = vector.load %arg6[%c85, %c0_158] : memref<208x128xf32, #tpu.memory_space<vmem>>, vector<1x128xf32>
      %434 = vector.broadcast %433 : vector<1x128xf32> to vector<8x128xf32>
      %435 = arith.mulf %434, %269 : vector<8x128xf32>
      %436 = arith.addf %432, %435 : vector<8x128xf32>
      %c86 = arith.constant 86 : index
      %c0_159 = arith.constant 0 : index
      %437 = vector.load %arg6[%c86, %c0_159] : memref<208x128xf32, #tpu.memory_space<vmem>>, vector<1x128xf32>
      %438 = vector.broadcast %437 : vector<1x128xf32> to vector<8x128xf32>
      %439 = arith.mulf %438, %304 : vector<8x128xf32>
      %440 = arith.addf %436, %439 : vector<8x128xf32>
      %c87 = arith.constant 87 : index
      %c0_160 = arith.constant 0 : index
      %441 = vector.load %arg6[%c87, %c0_160] : memref<208x128xf32, #tpu.memory_space<vmem>>, vector<1x128xf32>
      %442 = vector.broadcast %441 : vector<1x128xf32> to vector<8x128xf32>
      %443 = arith.mulf %442, %339 : vector<8x128xf32>
      %444 = arith.addf %440, %443 : vector<8x128xf32>
      %c10_161 = arith.constant 10 : index
      %c0_162 = arith.constant 0 : index
      %445 = vector.load %arg4[%c10_161, %c0_162] : memref<32x128xf32, #tpu.memory_space<vmem>>, vector<1x128xf32>
      %446 = vector.broadcast %445 : vector<1x128xf32> to vector<8x128xf32>
      %447 = arith.addf %444, %446 : vector<8x128xf32>
      %448 = arith.addf %447, %159 : vector<8x128xf32>
      %cst_163 = arith.constant 0.000000e+00 : f32
      %449 = vector.broadcast %cst_163 : f32 to vector<8x128xf32>
      %450 = arith.maximumf %448, %449 : vector<8x128xf32>
      %c88 = arith.constant 88 : index
      %c0_164 = arith.constant 0 : index
      %451 = vector.load %arg6[%c88, %c0_164] : memref<208x128xf32, #tpu.memory_space<vmem>>, vector<1x128xf32>
      %452 = vector.broadcast %451 : vector<1x128xf32> to vector<8x128xf32>
      %453 = arith.mulf %452, %94 : vector<8x128xf32>
      %c89 = arith.constant 89 : index
      %c0_165 = arith.constant 0 : index
      %454 = vector.load %arg6[%c89, %c0_165] : memref<208x128xf32, #tpu.memory_space<vmem>>, vector<1x128xf32>
      %455 = vector.broadcast %454 : vector<1x128xf32> to vector<8x128xf32>
      %456 = arith.mulf %455, %129 : vector<8x128xf32>
      %457 = arith.addf %453, %456 : vector<8x128xf32>
      %c90 = arith.constant 90 : index
      %c0_166 = arith.constant 0 : index
      %458 = vector.load %arg6[%c90, %c0_166] : memref<208x128xf32, #tpu.memory_space<vmem>>, vector<1x128xf32>
      %459 = vector.broadcast %458 : vector<1x128xf32> to vector<8x128xf32>
      %460 = arith.mulf %459, %164 : vector<8x128xf32>
      %461 = arith.addf %457, %460 : vector<8x128xf32>
      %c91 = arith.constant 91 : index
      %c0_167 = arith.constant 0 : index
      %462 = vector.load %arg6[%c91, %c0_167] : memref<208x128xf32, #tpu.memory_space<vmem>>, vector<1x128xf32>
      %463 = vector.broadcast %462 : vector<1x128xf32> to vector<8x128xf32>
      %464 = arith.mulf %463, %199 : vector<8x128xf32>
      %465 = arith.addf %461, %464 : vector<8x128xf32>
      %c92 = arith.constant 92 : index
      %c0_168 = arith.constant 0 : index
      %466 = vector.load %arg6[%c92, %c0_168] : memref<208x128xf32, #tpu.memory_space<vmem>>, vector<1x128xf32>
      %467 = vector.broadcast %466 : vector<1x128xf32> to vector<8x128xf32>
      %468 = arith.mulf %467, %234 : vector<8x128xf32>
      %469 = arith.addf %465, %468 : vector<8x128xf32>
      %c93 = arith.constant 93 : index
      %c0_169 = arith.constant 0 : index
      %470 = vector.load %arg6[%c93, %c0_169] : memref<208x128xf32, #tpu.memory_space<vmem>>, vector<1x128xf32>
      %471 = vector.broadcast %470 : vector<1x128xf32> to vector<8x128xf32>
      %472 = arith.mulf %471, %269 : vector<8x128xf32>
      %473 = arith.addf %469, %472 : vector<8x128xf32>
      %c94 = arith.constant 94 : index
      %c0_170 = arith.constant 0 : index
      %474 = vector.load %arg6[%c94, %c0_170] : memref<208x128xf32, #tpu.memory_space<vmem>>, vector<1x128xf32>
      %475 = vector.broadcast %474 : vector<1x128xf32> to vector<8x128xf32>
      %476 = arith.mulf %475, %304 : vector<8x128xf32>
      %477 = arith.addf %473, %476 : vector<8x128xf32>
      %c95 = arith.constant 95 : index
      %c0_171 = arith.constant 0 : index
      %478 = vector.load %arg6[%c95, %c0_171] : memref<208x128xf32, #tpu.memory_space<vmem>>, vector<1x128xf32>
      %479 = vector.broadcast %478 : vector<1x128xf32> to vector<8x128xf32>
      %480 = arith.mulf %479, %339 : vector<8x128xf32>
      %481 = arith.addf %477, %480 : vector<8x128xf32>
      %c11_172 = arith.constant 11 : index
      %c0_173 = arith.constant 0 : index
      %482 = vector.load %arg4[%c11_172, %c0_173] : memref<32x128xf32, #tpu.memory_space<vmem>>, vector<1x128xf32>
      %483 = vector.broadcast %482 : vector<1x128xf32> to vector<8x128xf32>
      %484 = arith.addf %481, %483 : vector<8x128xf32>
      %485 = arith.addf %484, %194 : vector<8x128xf32>
      %cst_174 = arith.constant 0.000000e+00 : f32
      %486 = vector.broadcast %cst_174 : f32 to vector<8x128xf32>
      %487 = arith.maximumf %485, %486 : vector<8x128xf32>
      %c96 = arith.constant 96 : index
      %c0_175 = arith.constant 0 : index
      %488 = vector.load %arg6[%c96, %c0_175] : memref<208x128xf32, #tpu.memory_space<vmem>>, vector<1x128xf32>
      %489 = vector.broadcast %488 : vector<1x128xf32> to vector<8x128xf32>
      %490 = arith.mulf %489, %94 : vector<8x128xf32>
      %c97 = arith.constant 97 : index
      %c0_176 = arith.constant 0 : index
      %491 = vector.load %arg6[%c97, %c0_176] : memref<208x128xf32, #tpu.memory_space<vmem>>, vector<1x128xf32>
      %492 = vector.broadcast %491 : vector<1x128xf32> to vector<8x128xf32>
      %493 = arith.mulf %492, %129 : vector<8x128xf32>
      %494 = arith.addf %490, %493 : vector<8x128xf32>
      %c98 = arith.constant 98 : index
      %c0_177 = arith.constant 0 : index
      %495 = vector.load %arg6[%c98, %c0_177] : memref<208x128xf32, #tpu.memory_space<vmem>>, vector<1x128xf32>
      %496 = vector.broadcast %495 : vector<1x128xf32> to vector<8x128xf32>
      %497 = arith.mulf %496, %164 : vector<8x128xf32>
      %498 = arith.addf %494, %497 : vector<8x128xf32>
      %c99 = arith.constant 99 : index
      %c0_178 = arith.constant 0 : index
      %499 = vector.load %arg6[%c99, %c0_178] : memref<208x128xf32, #tpu.memory_space<vmem>>, vector<1x128xf32>
      %500 = vector.broadcast %499 : vector<1x128xf32> to vector<8x128xf32>
      %501 = arith.mulf %500, %199 : vector<8x128xf32>
      %502 = arith.addf %498, %501 : vector<8x128xf32>
      %c100 = arith.constant 100 : index
      %c0_179 = arith.constant 0 : index
      %503 = vector.load %arg6[%c100, %c0_179] : memref<208x128xf32, #tpu.memory_space<vmem>>, vector<1x128xf32>
      %504 = vector.broadcast %503 : vector<1x128xf32> to vector<8x128xf32>
      %505 = arith.mulf %504, %234 : vector<8x128xf32>
      %506 = arith.addf %502, %505 : vector<8x128xf32>
      %c101 = arith.constant 101 : index
      %c0_180 = arith.constant 0 : index
      %507 = vector.load %arg6[%c101, %c0_180] : memref<208x128xf32, #tpu.memory_space<vmem>>, vector<1x128xf32>
      %508 = vector.broadcast %507 : vector<1x128xf32> to vector<8x128xf32>
      %509 = arith.mulf %508, %269 : vector<8x128xf32>
      %510 = arith.addf %506, %509 : vector<8x128xf32>
      %c102 = arith.constant 102 : index
      %c0_181 = arith.constant 0 : index
      %511 = vector.load %arg6[%c102, %c0_181] : memref<208x128xf32, #tpu.memory_space<vmem>>, vector<1x128xf32>
      %512 = vector.broadcast %511 : vector<1x128xf32> to vector<8x128xf32>
      %513 = arith.mulf %512, %304 : vector<8x128xf32>
      %514 = arith.addf %510, %513 : vector<8x128xf32>
      %c103 = arith.constant 103 : index
      %c0_182 = arith.constant 0 : index
      %515 = vector.load %arg6[%c103, %c0_182] : memref<208x128xf32, #tpu.memory_space<vmem>>, vector<1x128xf32>
      %516 = vector.broadcast %515 : vector<1x128xf32> to vector<8x128xf32>
      %517 = arith.mulf %516, %339 : vector<8x128xf32>
      %518 = arith.addf %514, %517 : vector<8x128xf32>
      %c12_183 = arith.constant 12 : index
      %c0_184 = arith.constant 0 : index
      %519 = vector.load %arg4[%c12_183, %c0_184] : memref<32x128xf32, #tpu.memory_space<vmem>>, vector<1x128xf32>
      %520 = vector.broadcast %519 : vector<1x128xf32> to vector<8x128xf32>
      %521 = arith.addf %518, %520 : vector<8x128xf32>
      %522 = arith.addf %521, %229 : vector<8x128xf32>
      %cst_185 = arith.constant 0.000000e+00 : f32
      %523 = vector.broadcast %cst_185 : f32 to vector<8x128xf32>
      %524 = arith.maximumf %522, %523 : vector<8x128xf32>
      %c104 = arith.constant 104 : index
      %c0_186 = arith.constant 0 : index
      %525 = vector.load %arg6[%c104, %c0_186] : memref<208x128xf32, #tpu.memory_space<vmem>>, vector<1x128xf32>
      %526 = vector.broadcast %525 : vector<1x128xf32> to vector<8x128xf32>
      %527 = arith.mulf %526, %94 : vector<8x128xf32>
      %c105 = arith.constant 105 : index
      %c0_187 = arith.constant 0 : index
      %528 = vector.load %arg6[%c105, %c0_187] : memref<208x128xf32, #tpu.memory_space<vmem>>, vector<1x128xf32>
      %529 = vector.broadcast %528 : vector<1x128xf32> to vector<8x128xf32>
      %530 = arith.mulf %529, %129 : vector<8x128xf32>
      %531 = arith.addf %527, %530 : vector<8x128xf32>
      %c106 = arith.constant 106 : index
      %c0_188 = arith.constant 0 : index
      %532 = vector.load %arg6[%c106, %c0_188] : memref<208x128xf32, #tpu.memory_space<vmem>>, vector<1x128xf32>
      %533 = vector.broadcast %532 : vector<1x128xf32> to vector<8x128xf32>
      %534 = arith.mulf %533, %164 : vector<8x128xf32>
      %535 = arith.addf %531, %534 : vector<8x128xf32>
      %c107 = arith.constant 107 : index
      %c0_189 = arith.constant 0 : index
      %536 = vector.load %arg6[%c107, %c0_189] : memref<208x128xf32, #tpu.memory_space<vmem>>, vector<1x128xf32>
      %537 = vector.broadcast %536 : vector<1x128xf32> to vector<8x128xf32>
      %538 = arith.mulf %537, %199 : vector<8x128xf32>
      %539 = arith.addf %535, %538 : vector<8x128xf32>
      %c108 = arith.constant 108 : index
      %c0_190 = arith.constant 0 : index
      %540 = vector.load %arg6[%c108, %c0_190] : memref<208x128xf32, #tpu.memory_space<vmem>>, vector<1x128xf32>
      %541 = vector.broadcast %540 : vector<1x128xf32> to vector<8x128xf32>
      %542 = arith.mulf %541, %234 : vector<8x128xf32>
      %543 = arith.addf %539, %542 : vector<8x128xf32>
      %c109 = arith.constant 109 : index
      %c0_191 = arith.constant 0 : index
      %544 = vector.load %arg6[%c109, %c0_191] : memref<208x128xf32, #tpu.memory_space<vmem>>, vector<1x128xf32>
      %545 = vector.broadcast %544 : vector<1x128xf32> to vector<8x128xf32>
      %546 = arith.mulf %545, %269 : vector<8x128xf32>
      %547 = arith.addf %543, %546 : vector<8x128xf32>
      %c110 = arith.constant 110 : index
      %c0_192 = arith.constant 0 : index
      %548 = vector.load %arg6[%c110, %c0_192] : memref<208x128xf32, #tpu.memory_space<vmem>>, vector<1x128xf32>
      %549 = vector.broadcast %548 : vector<1x128xf32> to vector<8x128xf32>
      %550 = arith.mulf %549, %304 : vector<8x128xf32>
      %551 = arith.addf %547, %550 : vector<8x128xf32>
      %c111 = arith.constant 111 : index
      %c0_193 = arith.constant 0 : index
      %552 = vector.load %arg6[%c111, %c0_193] : memref<208x128xf32, #tpu.memory_space<vmem>>, vector<1x128xf32>
      %553 = vector.broadcast %552 : vector<1x128xf32> to vector<8x128xf32>
      %554 = arith.mulf %553, %339 : vector<8x128xf32>
      %555 = arith.addf %551, %554 : vector<8x128xf32>
      %c13_194 = arith.constant 13 : index
      %c0_195 = arith.constant 0 : index
      %556 = vector.load %arg4[%c13_194, %c0_195] : memref<32x128xf32, #tpu.memory_space<vmem>>, vector<1x128xf32>
      %557 = vector.broadcast %556 : vector<1x128xf32> to vector<8x128xf32>
      %558 = arith.addf %555, %557 : vector<8x128xf32>
      %559 = arith.addf %558, %264 : vector<8x128xf32>
      %cst_196 = arith.constant 0.000000e+00 : f32
      %560 = vector.broadcast %cst_196 : f32 to vector<8x128xf32>
      %561 = arith.maximumf %559, %560 : vector<8x128xf32>
      %c112 = arith.constant 112 : index
      %c0_197 = arith.constant 0 : index
      %562 = vector.load %arg6[%c112, %c0_197] : memref<208x128xf32, #tpu.memory_space<vmem>>, vector<1x128xf32>
      %563 = vector.broadcast %562 : vector<1x128xf32> to vector<8x128xf32>
      %564 = arith.mulf %563, %94 : vector<8x128xf32>
      %c113 = arith.constant 113 : index
      %c0_198 = arith.constant 0 : index
      %565 = vector.load %arg6[%c113, %c0_198] : memref<208x128xf32, #tpu.memory_space<vmem>>, vector<1x128xf32>
      %566 = vector.broadcast %565 : vector<1x128xf32> to vector<8x128xf32>
      %567 = arith.mulf %566, %129 : vector<8x128xf32>
      %568 = arith.addf %564, %567 : vector<8x128xf32>
      %c114 = arith.constant 114 : index
      %c0_199 = arith.constant 0 : index
      %569 = vector.load %arg6[%c114, %c0_199] : memref<208x128xf32, #tpu.memory_space<vmem>>, vector<1x128xf32>
      %570 = vector.broadcast %569 : vector<1x128xf32> to vector<8x128xf32>
      %571 = arith.mulf %570, %164 : vector<8x128xf32>
      %572 = arith.addf %568, %571 : vector<8x128xf32>
      %c115 = arith.constant 115 : index
      %c0_200 = arith.constant 0 : index
      %573 = vector.load %arg6[%c115, %c0_200] : memref<208x128xf32, #tpu.memory_space<vmem>>, vector<1x128xf32>
      %574 = vector.broadcast %573 : vector<1x128xf32> to vector<8x128xf32>
      %575 = arith.mulf %574, %199 : vector<8x128xf32>
      %576 = arith.addf %572, %575 : vector<8x128xf32>
      %c116 = arith.constant 116 : index
      %c0_201 = arith.constant 0 : index
      %577 = vector.load %arg6[%c116, %c0_201] : memref<208x128xf32, #tpu.memory_space<vmem>>, vector<1x128xf32>
      %578 = vector.broadcast %577 : vector<1x128xf32> to vector<8x128xf32>
      %579 = arith.mulf %578, %234 : vector<8x128xf32>
      %580 = arith.addf %576, %579 : vector<8x128xf32>
      %c117 = arith.constant 117 : index
      %c0_202 = arith.constant 0 : index
      %581 = vector.load %arg6[%c117, %c0_202] : memref<208x128xf32, #tpu.memory_space<vmem>>, vector<1x128xf32>
      %582 = vector.broadcast %581 : vector<1x128xf32> to vector<8x128xf32>
      %583 = arith.mulf %582, %269 : vector<8x128xf32>
      %584 = arith.addf %580, %583 : vector<8x128xf32>
      %c118 = arith.constant 118 : index
      %c0_203 = arith.constant 0 : index
      %585 = vector.load %arg6[%c118, %c0_203] : memref<208x128xf32, #tpu.memory_space<vmem>>, vector<1x128xf32>
      %586 = vector.broadcast %585 : vector<1x128xf32> to vector<8x128xf32>
      %587 = arith.mulf %586, %304 : vector<8x128xf32>
      %588 = arith.addf %584, %587 : vector<8x128xf32>
      %c119 = arith.constant 119 : index
      %c0_204 = arith.constant 0 : index
      %589 = vector.load %arg6[%c119, %c0_204] : memref<208x128xf32, #tpu.memory_space<vmem>>, vector<1x128xf32>
      %590 = vector.broadcast %589 : vector<1x128xf32> to vector<8x128xf32>
      %591 = arith.mulf %590, %339 : vector<8x128xf32>
      %592 = arith.addf %588, %591 : vector<8x128xf32>
      %c14_205 = arith.constant 14 : index
      %c0_206 = arith.constant 0 : index
      %593 = vector.load %arg4[%c14_205, %c0_206] : memref<32x128xf32, #tpu.memory_space<vmem>>, vector<1x128xf32>
      %594 = vector.broadcast %593 : vector<1x128xf32> to vector<8x128xf32>
      %595 = arith.addf %592, %594 : vector<8x128xf32>
      %596 = arith.addf %595, %299 : vector<8x128xf32>
      %cst_207 = arith.constant 0.000000e+00 : f32
      %597 = vector.broadcast %cst_207 : f32 to vector<8x128xf32>
      %598 = arith.maximumf %596, %597 : vector<8x128xf32>
      %c120 = arith.constant 120 : index
      %c0_208 = arith.constant 0 : index
      %599 = vector.load %arg6[%c120, %c0_208] : memref<208x128xf32, #tpu.memory_space<vmem>>, vector<1x128xf32>
      %600 = vector.broadcast %599 : vector<1x128xf32> to vector<8x128xf32>
      %601 = arith.mulf %600, %94 : vector<8x128xf32>
      %c121 = arith.constant 121 : index
      %c0_209 = arith.constant 0 : index
      %602 = vector.load %arg6[%c121, %c0_209] : memref<208x128xf32, #tpu.memory_space<vmem>>, vector<1x128xf32>
      %603 = vector.broadcast %602 : vector<1x128xf32> to vector<8x128xf32>
      %604 = arith.mulf %603, %129 : vector<8x128xf32>
      %605 = arith.addf %601, %604 : vector<8x128xf32>
      %c122 = arith.constant 122 : index
      %c0_210 = arith.constant 0 : index
      %606 = vector.load %arg6[%c122, %c0_210] : memref<208x128xf32, #tpu.memory_space<vmem>>, vector<1x128xf32>
      %607 = vector.broadcast %606 : vector<1x128xf32> to vector<8x128xf32>
      %608 = arith.mulf %607, %164 : vector<8x128xf32>
      %609 = arith.addf %605, %608 : vector<8x128xf32>
      %c123 = arith.constant 123 : index
      %c0_211 = arith.constant 0 : index
      %610 = vector.load %arg6[%c123, %c0_211] : memref<208x128xf32, #tpu.memory_space<vmem>>, vector<1x128xf32>
      %611 = vector.broadcast %610 : vector<1x128xf32> to vector<8x128xf32>
      %612 = arith.mulf %611, %199 : vector<8x128xf32>
      %613 = arith.addf %609, %612 : vector<8x128xf32>
      %c124 = arith.constant 124 : index
      %c0_212 = arith.constant 0 : index
      %614 = vector.load %arg6[%c124, %c0_212] : memref<208x128xf32, #tpu.memory_space<vmem>>, vector<1x128xf32>
      %615 = vector.broadcast %614 : vector<1x128xf32> to vector<8x128xf32>
      %616 = arith.mulf %615, %234 : vector<8x128xf32>
      %617 = arith.addf %613, %616 : vector<8x128xf32>
      %c125 = arith.constant 125 : index
      %c0_213 = arith.constant 0 : index
      %618 = vector.load %arg6[%c125, %c0_213] : memref<208x128xf32, #tpu.memory_space<vmem>>, vector<1x128xf32>
      %619 = vector.broadcast %618 : vector<1x128xf32> to vector<8x128xf32>
      %620 = arith.mulf %619, %269 : vector<8x128xf32>
      %621 = arith.addf %617, %620 : vector<8x128xf32>
      %c126 = arith.constant 126 : index
      %c0_214 = arith.constant 0 : index
      %622 = vector.load %arg6[%c126, %c0_214] : memref<208x128xf32, #tpu.memory_space<vmem>>, vector<1x128xf32>
      %623 = vector.broadcast %622 : vector<1x128xf32> to vector<8x128xf32>
      %624 = arith.mulf %623, %304 : vector<8x128xf32>
      %625 = arith.addf %621, %624 : vector<8x128xf32>
      %c127 = arith.constant 127 : index
      %c0_215 = arith.constant 0 : index
      %626 = vector.load %arg6[%c127, %c0_215] : memref<208x128xf32, #tpu.memory_space<vmem>>, vector<1x128xf32>
      %627 = vector.broadcast %626 : vector<1x128xf32> to vector<8x128xf32>
      %628 = arith.mulf %627, %339 : vector<8x128xf32>
      %629 = arith.addf %625, %628 : vector<8x128xf32>
      %c15_216 = arith.constant 15 : index
      %c0_217 = arith.constant 0 : index
      %630 = vector.load %arg4[%c15_216, %c0_217] : memref<32x128xf32, #tpu.memory_space<vmem>>, vector<1x128xf32>
      %631 = vector.broadcast %630 : vector<1x128xf32> to vector<8x128xf32>
      %632 = arith.addf %629, %631 : vector<8x128xf32>
      %633 = arith.addf %632, %334 : vector<8x128xf32>
      %cst_218 = arith.constant 0.000000e+00 : f32
      %634 = vector.broadcast %cst_218 : f32 to vector<8x128xf32>
      %635 = arith.maximumf %633, %634 : vector<8x128xf32>
      %c192 = arith.constant 192 : index
      %c0_219 = arith.constant 0 : index
      %636 = vector.load %arg6[%c192, %c0_219] : memref<208x128xf32, #tpu.memory_space<vmem>>, vector<1x128xf32>
      %637 = vector.broadcast %636 : vector<1x128xf32> to vector<8x128xf32>
      %638 = arith.mulf %637, %376 : vector<8x128xf32>
      %c193 = arith.constant 193 : index
      %c0_220 = arith.constant 0 : index
      %639 = vector.load %arg6[%c193, %c0_220] : memref<208x128xf32, #tpu.memory_space<vmem>>, vector<1x128xf32>
      %640 = vector.broadcast %639 : vector<1x128xf32> to vector<8x128xf32>
      %641 = arith.mulf %640, %413 : vector<8x128xf32>
      %642 = arith.addf %638, %641 : vector<8x128xf32>
      %c194 = arith.constant 194 : index
      %c0_221 = arith.constant 0 : index
      %643 = vector.load %arg6[%c194, %c0_221] : memref<208x128xf32, #tpu.memory_space<vmem>>, vector<1x128xf32>
      %644 = vector.broadcast %643 : vector<1x128xf32> to vector<8x128xf32>
      %645 = arith.mulf %644, %450 : vector<8x128xf32>
      %646 = arith.addf %642, %645 : vector<8x128xf32>
      %c195 = arith.constant 195 : index
      %c0_222 = arith.constant 0 : index
      %647 = vector.load %arg6[%c195, %c0_222] : memref<208x128xf32, #tpu.memory_space<vmem>>, vector<1x128xf32>
      %648 = vector.broadcast %647 : vector<1x128xf32> to vector<8x128xf32>
      %649 = arith.mulf %648, %487 : vector<8x128xf32>
      %650 = arith.addf %646, %649 : vector<8x128xf32>
      %c196 = arith.constant 196 : index
      %c0_223 = arith.constant 0 : index
      %651 = vector.load %arg6[%c196, %c0_223] : memref<208x128xf32, #tpu.memory_space<vmem>>, vector<1x128xf32>
      %652 = vector.broadcast %651 : vector<1x128xf32> to vector<8x128xf32>
      %653 = arith.mulf %652, %524 : vector<8x128xf32>
      %654 = arith.addf %650, %653 : vector<8x128xf32>
      %c197 = arith.constant 197 : index
      %c0_224 = arith.constant 0 : index
      %655 = vector.load %arg6[%c197, %c0_224] : memref<208x128xf32, #tpu.memory_space<vmem>>, vector<1x128xf32>
      %656 = vector.broadcast %655 : vector<1x128xf32> to vector<8x128xf32>
      %657 = arith.mulf %656, %561 : vector<8x128xf32>
      %658 = arith.addf %654, %657 : vector<8x128xf32>
      %c198 = arith.constant 198 : index
      %c0_225 = arith.constant 0 : index
      %659 = vector.load %arg6[%c198, %c0_225] : memref<208x128xf32, #tpu.memory_space<vmem>>, vector<1x128xf32>
      %660 = vector.broadcast %659 : vector<1x128xf32> to vector<8x128xf32>
      %661 = arith.mulf %660, %598 : vector<8x128xf32>
      %662 = arith.addf %658, %661 : vector<8x128xf32>
      %c199 = arith.constant 199 : index
      %c0_226 = arith.constant 0 : index
      %663 = vector.load %arg6[%c199, %c0_226] : memref<208x128xf32, #tpu.memory_space<vmem>>, vector<1x128xf32>
      %664 = vector.broadcast %663 : vector<1x128xf32> to vector<8x128xf32>
      %665 = arith.mulf %664, %635 : vector<8x128xf32>
      %666 = arith.addf %662, %665 : vector<8x128xf32>
      %c128 = arith.constant 128 : index
      %c0_227 = arith.constant 0 : index
      %667 = vector.load %arg6[%c128, %c0_227] : memref<208x128xf32, #tpu.memory_space<vmem>>, vector<1x128xf32>
      %668 = vector.broadcast %667 : vector<1x128xf32> to vector<8x128xf32>
      %669 = arith.mulf %668, %376 : vector<8x128xf32>
      %c129 = arith.constant 129 : index
      %c0_228 = arith.constant 0 : index
      %670 = vector.load %arg6[%c129, %c0_228] : memref<208x128xf32, #tpu.memory_space<vmem>>, vector<1x128xf32>
      %671 = vector.broadcast %670 : vector<1x128xf32> to vector<8x128xf32>
      %672 = arith.mulf %671, %413 : vector<8x128xf32>
      %673 = arith.addf %669, %672 : vector<8x128xf32>
      %c130 = arith.constant 130 : index
      %c0_229 = arith.constant 0 : index
      %674 = vector.load %arg6[%c130, %c0_229] : memref<208x128xf32, #tpu.memory_space<vmem>>, vector<1x128xf32>
      %675 = vector.broadcast %674 : vector<1x128xf32> to vector<8x128xf32>
      %676 = arith.mulf %675, %450 : vector<8x128xf32>
      %677 = arith.addf %673, %676 : vector<8x128xf32>
      %c131 = arith.constant 131 : index
      %c0_230 = arith.constant 0 : index
      %678 = vector.load %arg6[%c131, %c0_230] : memref<208x128xf32, #tpu.memory_space<vmem>>, vector<1x128xf32>
      %679 = vector.broadcast %678 : vector<1x128xf32> to vector<8x128xf32>
      %680 = arith.mulf %679, %487 : vector<8x128xf32>
      %681 = arith.addf %677, %680 : vector<8x128xf32>
      %c132 = arith.constant 132 : index
      %c0_231 = arith.constant 0 : index
      %682 = vector.load %arg6[%c132, %c0_231] : memref<208x128xf32, #tpu.memory_space<vmem>>, vector<1x128xf32>
      %683 = vector.broadcast %682 : vector<1x128xf32> to vector<8x128xf32>
      %684 = arith.mulf %683, %524 : vector<8x128xf32>
      %685 = arith.addf %681, %684 : vector<8x128xf32>
      %c133 = arith.constant 133 : index
      %c0_232 = arith.constant 0 : index
      %686 = vector.load %arg6[%c133, %c0_232] : memref<208x128xf32, #tpu.memory_space<vmem>>, vector<1x128xf32>
      %687 = vector.broadcast %686 : vector<1x128xf32> to vector<8x128xf32>
      %688 = arith.mulf %687, %561 : vector<8x128xf32>
      %689 = arith.addf %685, %688 : vector<8x128xf32>
      %c134 = arith.constant 134 : index
      %c0_233 = arith.constant 0 : index
      %690 = vector.load %arg6[%c134, %c0_233] : memref<208x128xf32, #tpu.memory_space<vmem>>, vector<1x128xf32>
      %691 = vector.broadcast %690 : vector<1x128xf32> to vector<8x128xf32>
      %692 = arith.mulf %691, %598 : vector<8x128xf32>
      %693 = arith.addf %689, %692 : vector<8x128xf32>
      %c135 = arith.constant 135 : index
      %c0_234 = arith.constant 0 : index
      %694 = vector.load %arg6[%c135, %c0_234] : memref<208x128xf32, #tpu.memory_space<vmem>>, vector<1x128xf32>
      %695 = vector.broadcast %694 : vector<1x128xf32> to vector<8x128xf32>
      %696 = arith.mulf %695, %635 : vector<8x128xf32>
      %697 = arith.addf %693, %696 : vector<8x128xf32>
      %c16_235 = arith.constant 16 : index
      %c0_236 = arith.constant 0 : index
      %698 = vector.load %arg4[%c16_235, %c0_236] : memref<32x128xf32, #tpu.memory_space<vmem>>, vector<1x128xf32>
      %699 = vector.broadcast %698 : vector<1x128xf32> to vector<8x128xf32>
      %700 = arith.addf %697, %699 : vector<8x128xf32>
      %cst_237 = arith.constant 0.000000e+00 : f32
      %701 = vector.broadcast %cst_237 : f32 to vector<8x128xf32>
      %702 = arith.maximumf %700, %701 : vector<8x128xf32>
      %c136 = arith.constant 136 : index
      %c0_238 = arith.constant 0 : index
      %703 = vector.load %arg6[%c136, %c0_238] : memref<208x128xf32, #tpu.memory_space<vmem>>, vector<1x128xf32>
      %704 = vector.broadcast %703 : vector<1x128xf32> to vector<8x128xf32>
      %705 = arith.mulf %704, %376 : vector<8x128xf32>
      %c137 = arith.constant 137 : index
      %c0_239 = arith.constant 0 : index
      %706 = vector.load %arg6[%c137, %c0_239] : memref<208x128xf32, #tpu.memory_space<vmem>>, vector<1x128xf32>
      %707 = vector.broadcast %706 : vector<1x128xf32> to vector<8x128xf32>
      %708 = arith.mulf %707, %413 : vector<8x128xf32>
      %709 = arith.addf %705, %708 : vector<8x128xf32>
      %c138 = arith.constant 138 : index
      %c0_240 = arith.constant 0 : index
      %710 = vector.load %arg6[%c138, %c0_240] : memref<208x128xf32, #tpu.memory_space<vmem>>, vector<1x128xf32>
      %711 = vector.broadcast %710 : vector<1x128xf32> to vector<8x128xf32>
      %712 = arith.mulf %711, %450 : vector<8x128xf32>
      %713 = arith.addf %709, %712 : vector<8x128xf32>
      %c139 = arith.constant 139 : index
      %c0_241 = arith.constant 0 : index
      %714 = vector.load %arg6[%c139, %c0_241] : memref<208x128xf32, #tpu.memory_space<vmem>>, vector<1x128xf32>
      %715 = vector.broadcast %714 : vector<1x128xf32> to vector<8x128xf32>
      %716 = arith.mulf %715, %487 : vector<8x128xf32>
      %717 = arith.addf %713, %716 : vector<8x128xf32>
      %c140 = arith.constant 140 : index
      %c0_242 = arith.constant 0 : index
      %718 = vector.load %arg6[%c140, %c0_242] : memref<208x128xf32, #tpu.memory_space<vmem>>, vector<1x128xf32>
      %719 = vector.broadcast %718 : vector<1x128xf32> to vector<8x128xf32>
      %720 = arith.mulf %719, %524 : vector<8x128xf32>
      %721 = arith.addf %717, %720 : vector<8x128xf32>
      %c141 = arith.constant 141 : index
      %c0_243 = arith.constant 0 : index
      %722 = vector.load %arg6[%c141, %c0_243] : memref<208x128xf32, #tpu.memory_space<vmem>>, vector<1x128xf32>
      %723 = vector.broadcast %722 : vector<1x128xf32> to vector<8x128xf32>
      %724 = arith.mulf %723, %561 : vector<8x128xf32>
      %725 = arith.addf %721, %724 : vector<8x128xf32>
      %c142 = arith.constant 142 : index
      %c0_244 = arith.constant 0 : index
      %726 = vector.load %arg6[%c142, %c0_244] : memref<208x128xf32, #tpu.memory_space<vmem>>, vector<1x128xf32>
      %727 = vector.broadcast %726 : vector<1x128xf32> to vector<8x128xf32>
      %728 = arith.mulf %727, %598 : vector<8x128xf32>
      %729 = arith.addf %725, %728 : vector<8x128xf32>
      %c143 = arith.constant 143 : index
      %c0_245 = arith.constant 0 : index
      %730 = vector.load %arg6[%c143, %c0_245] : memref<208x128xf32, #tpu.memory_space<vmem>>, vector<1x128xf32>
      %731 = vector.broadcast %730 : vector<1x128xf32> to vector<8x128xf32>
      %732 = arith.mulf %731, %635 : vector<8x128xf32>
      %733 = arith.addf %729, %732 : vector<8x128xf32>
      %c17_246 = arith.constant 17 : index
      %c0_247 = arith.constant 0 : index
      %734 = vector.load %arg4[%c17_246, %c0_247] : memref<32x128xf32, #tpu.memory_space<vmem>>, vector<1x128xf32>
      %735 = vector.broadcast %734 : vector<1x128xf32> to vector<8x128xf32>
      %736 = arith.addf %733, %735 : vector<8x128xf32>
      %cst_248 = arith.constant 0.000000e+00 : f32
      %737 = vector.broadcast %cst_248 : f32 to vector<8x128xf32>
      %738 = arith.maximumf %736, %737 : vector<8x128xf32>
      %c144 = arith.constant 144 : index
      %c0_249 = arith.constant 0 : index
      %739 = vector.load %arg6[%c144, %c0_249] : memref<208x128xf32, #tpu.memory_space<vmem>>, vector<1x128xf32>
      %740 = vector.broadcast %739 : vector<1x128xf32> to vector<8x128xf32>
      %741 = arith.mulf %740, %376 : vector<8x128xf32>
      %c145 = arith.constant 145 : index
      %c0_250 = arith.constant 0 : index
      %742 = vector.load %arg6[%c145, %c0_250] : memref<208x128xf32, #tpu.memory_space<vmem>>, vector<1x128xf32>
      %743 = vector.broadcast %742 : vector<1x128xf32> to vector<8x128xf32>
      %744 = arith.mulf %743, %413 : vector<8x128xf32>
      %745 = arith.addf %741, %744 : vector<8x128xf32>
      %c146 = arith.constant 146 : index
      %c0_251 = arith.constant 0 : index
      %746 = vector.load %arg6[%c146, %c0_251] : memref<208x128xf32, #tpu.memory_space<vmem>>, vector<1x128xf32>
      %747 = vector.broadcast %746 : vector<1x128xf32> to vector<8x128xf32>
      %748 = arith.mulf %747, %450 : vector<8x128xf32>
      %749 = arith.addf %745, %748 : vector<8x128xf32>
      %c147 = arith.constant 147 : index
      %c0_252 = arith.constant 0 : index
      %750 = vector.load %arg6[%c147, %c0_252] : memref<208x128xf32, #tpu.memory_space<vmem>>, vector<1x128xf32>
      %751 = vector.broadcast %750 : vector<1x128xf32> to vector<8x128xf32>
      %752 = arith.mulf %751, %487 : vector<8x128xf32>
      %753 = arith.addf %749, %752 : vector<8x128xf32>
      %c148 = arith.constant 148 : index
      %c0_253 = arith.constant 0 : index
      %754 = vector.load %arg6[%c148, %c0_253] : memref<208x128xf32, #tpu.memory_space<vmem>>, vector<1x128xf32>
      %755 = vector.broadcast %754 : vector<1x128xf32> to vector<8x128xf32>
      %756 = arith.mulf %755, %524 : vector<8x128xf32>
      %757 = arith.addf %753, %756 : vector<8x128xf32>
      %c149 = arith.constant 149 : index
      %c0_254 = arith.constant 0 : index
      %758 = vector.load %arg6[%c149, %c0_254] : memref<208x128xf32, #tpu.memory_space<vmem>>, vector<1x128xf32>
      %759 = vector.broadcast %758 : vector<1x128xf32> to vector<8x128xf32>
      %760 = arith.mulf %759, %561 : vector<8x128xf32>
      %761 = arith.addf %757, %760 : vector<8x128xf32>
      %c150 = arith.constant 150 : index
      %c0_255 = arith.constant 0 : index
      %762 = vector.load %arg6[%c150, %c0_255] : memref<208x128xf32, #tpu.memory_space<vmem>>, vector<1x128xf32>
      %763 = vector.broadcast %762 : vector<1x128xf32> to vector<8x128xf32>
      %764 = arith.mulf %763, %598 : vector<8x128xf32>
      %765 = arith.addf %761, %764 : vector<8x128xf32>
      %c151 = arith.constant 151 : index
      %c0_256 = arith.constant 0 : index
      %766 = vector.load %arg6[%c151, %c0_256] : memref<208x128xf32, #tpu.memory_space<vmem>>, vector<1x128xf32>
      %767 = vector.broadcast %766 : vector<1x128xf32> to vector<8x128xf32>
      %768 = arith.mulf %767, %635 : vector<8x128xf32>
      %769 = arith.addf %765, %768 : vector<8x128xf32>
      %c18_257 = arith.constant 18 : index
      %c0_258 = arith.constant 0 : index
      %770 = vector.load %arg4[%c18_257, %c0_258] : memref<32x128xf32, #tpu.memory_space<vmem>>, vector<1x128xf32>
      %771 = vector.broadcast %770 : vector<1x128xf32> to vector<8x128xf32>
      %772 = arith.addf %769, %771 : vector<8x128xf32>
      %cst_259 = arith.constant 0.000000e+00 : f32
      %773 = vector.broadcast %cst_259 : f32 to vector<8x128xf32>
      %774 = arith.maximumf %772, %773 : vector<8x128xf32>
      %c152 = arith.constant 152 : index
      %c0_260 = arith.constant 0 : index
      %775 = vector.load %arg6[%c152, %c0_260] : memref<208x128xf32, #tpu.memory_space<vmem>>, vector<1x128xf32>
      %776 = vector.broadcast %775 : vector<1x128xf32> to vector<8x128xf32>
      %777 = arith.mulf %776, %376 : vector<8x128xf32>
      %c153 = arith.constant 153 : index
      %c0_261 = arith.constant 0 : index
      %778 = vector.load %arg6[%c153, %c0_261] : memref<208x128xf32, #tpu.memory_space<vmem>>, vector<1x128xf32>
      %779 = vector.broadcast %778 : vector<1x128xf32> to vector<8x128xf32>
      %780 = arith.mulf %779, %413 : vector<8x128xf32>
      %781 = arith.addf %777, %780 : vector<8x128xf32>
      %c154 = arith.constant 154 : index
      %c0_262 = arith.constant 0 : index
      %782 = vector.load %arg6[%c154, %c0_262] : memref<208x128xf32, #tpu.memory_space<vmem>>, vector<1x128xf32>
      %783 = vector.broadcast %782 : vector<1x128xf32> to vector<8x128xf32>
      %784 = arith.mulf %783, %450 : vector<8x128xf32>
      %785 = arith.addf %781, %784 : vector<8x128xf32>
      %c155 = arith.constant 155 : index
      %c0_263 = arith.constant 0 : index
      %786 = vector.load %arg6[%c155, %c0_263] : memref<208x128xf32, #tpu.memory_space<vmem>>, vector<1x128xf32>
      %787 = vector.broadcast %786 : vector<1x128xf32> to vector<8x128xf32>
      %788 = arith.mulf %787, %487 : vector<8x128xf32>
      %789 = arith.addf %785, %788 : vector<8x128xf32>
      %c156 = arith.constant 156 : index
      %c0_264 = arith.constant 0 : index
      %790 = vector.load %arg6[%c156, %c0_264] : memref<208x128xf32, #tpu.memory_space<vmem>>, vector<1x128xf32>
      %791 = vector.broadcast %790 : vector<1x128xf32> to vector<8x128xf32>
      %792 = arith.mulf %791, %524 : vector<8x128xf32>
      %793 = arith.addf %789, %792 : vector<8x128xf32>
      %c157 = arith.constant 157 : index
      %c0_265 = arith.constant 0 : index
      %794 = vector.load %arg6[%c157, %c0_265] : memref<208x128xf32, #tpu.memory_space<vmem>>, vector<1x128xf32>
      %795 = vector.broadcast %794 : vector<1x128xf32> to vector<8x128xf32>
      %796 = arith.mulf %795, %561 : vector<8x128xf32>
      %797 = arith.addf %793, %796 : vector<8x128xf32>
      %c158 = arith.constant 158 : index
      %c0_266 = arith.constant 0 : index
      %798 = vector.load %arg6[%c158, %c0_266] : memref<208x128xf32, #tpu.memory_space<vmem>>, vector<1x128xf32>
      %799 = vector.broadcast %798 : vector<1x128xf32> to vector<8x128xf32>
      %800 = arith.mulf %799, %598 : vector<8x128xf32>
      %801 = arith.addf %797, %800 : vector<8x128xf32>
      %c159 = arith.constant 159 : index
      %c0_267 = arith.constant 0 : index
      %802 = vector.load %arg6[%c159, %c0_267] : memref<208x128xf32, #tpu.memory_space<vmem>>, vector<1x128xf32>
      %803 = vector.broadcast %802 : vector<1x128xf32> to vector<8x128xf32>
      %804 = arith.mulf %803, %635 : vector<8x128xf32>
      %805 = arith.addf %801, %804 : vector<8x128xf32>
      %c19_268 = arith.constant 19 : index
      %c0_269 = arith.constant 0 : index
      %806 = vector.load %arg4[%c19_268, %c0_269] : memref<32x128xf32, #tpu.memory_space<vmem>>, vector<1x128xf32>
      %807 = vector.broadcast %806 : vector<1x128xf32> to vector<8x128xf32>
      %808 = arith.addf %805, %807 : vector<8x128xf32>
      %cst_270 = arith.constant 0.000000e+00 : f32
      %809 = vector.broadcast %cst_270 : f32 to vector<8x128xf32>
      %810 = arith.maximumf %808, %809 : vector<8x128xf32>
      %c160 = arith.constant 160 : index
      %c0_271 = arith.constant 0 : index
      %811 = vector.load %arg6[%c160, %c0_271] : memref<208x128xf32, #tpu.memory_space<vmem>>, vector<1x128xf32>
      %812 = vector.broadcast %811 : vector<1x128xf32> to vector<8x128xf32>
      %813 = arith.mulf %812, %376 : vector<8x128xf32>
      %c161 = arith.constant 161 : index
      %c0_272 = arith.constant 0 : index
      %814 = vector.load %arg6[%c161, %c0_272] : memref<208x128xf32, #tpu.memory_space<vmem>>, vector<1x128xf32>
      %815 = vector.broadcast %814 : vector<1x128xf32> to vector<8x128xf32>
      %816 = arith.mulf %815, %413 : vector<8x128xf32>
      %817 = arith.addf %813, %816 : vector<8x128xf32>
      %c162 = arith.constant 162 : index
      %c0_273 = arith.constant 0 : index
      %818 = vector.load %arg6[%c162, %c0_273] : memref<208x128xf32, #tpu.memory_space<vmem>>, vector<1x128xf32>
      %819 = vector.broadcast %818 : vector<1x128xf32> to vector<8x128xf32>
      %820 = arith.mulf %819, %450 : vector<8x128xf32>
      %821 = arith.addf %817, %820 : vector<8x128xf32>
      %c163 = arith.constant 163 : index
      %c0_274 = arith.constant 0 : index
      %822 = vector.load %arg6[%c163, %c0_274] : memref<208x128xf32, #tpu.memory_space<vmem>>, vector<1x128xf32>
      %823 = vector.broadcast %822 : vector<1x128xf32> to vector<8x128xf32>
      %824 = arith.mulf %823, %487 : vector<8x128xf32>
      %825 = arith.addf %821, %824 : vector<8x128xf32>
      %c164 = arith.constant 164 : index
      %c0_275 = arith.constant 0 : index
      %826 = vector.load %arg6[%c164, %c0_275] : memref<208x128xf32, #tpu.memory_space<vmem>>, vector<1x128xf32>
      %827 = vector.broadcast %826 : vector<1x128xf32> to vector<8x128xf32>
      %828 = arith.mulf %827, %524 : vector<8x128xf32>
      %829 = arith.addf %825, %828 : vector<8x128xf32>
      %c165 = arith.constant 165 : index
      %c0_276 = arith.constant 0 : index
      %830 = vector.load %arg6[%c165, %c0_276] : memref<208x128xf32, #tpu.memory_space<vmem>>, vector<1x128xf32>
      %831 = vector.broadcast %830 : vector<1x128xf32> to vector<8x128xf32>
      %832 = arith.mulf %831, %561 : vector<8x128xf32>
      %833 = arith.addf %829, %832 : vector<8x128xf32>
      %c166 = arith.constant 166 : index
      %c0_277 = arith.constant 0 : index
      %834 = vector.load %arg6[%c166, %c0_277] : memref<208x128xf32, #tpu.memory_space<vmem>>, vector<1x128xf32>
      %835 = vector.broadcast %834 : vector<1x128xf32> to vector<8x128xf32>
      %836 = arith.mulf %835, %598 : vector<8x128xf32>
      %837 = arith.addf %833, %836 : vector<8x128xf32>
      %c167 = arith.constant 167 : index
      %c0_278 = arith.constant 0 : index
      %838 = vector.load %arg6[%c167, %c0_278] : memref<208x128xf32, #tpu.memory_space<vmem>>, vector<1x128xf32>
      %839 = vector.broadcast %838 : vector<1x128xf32> to vector<8x128xf32>
      %840 = arith.mulf %839, %635 : vector<8x128xf32>
      %841 = arith.addf %837, %840 : vector<8x128xf32>
      %c20_279 = arith.constant 20 : index
      %c0_280 = arith.constant 0 : index
      %842 = vector.load %arg4[%c20_279, %c0_280] : memref<32x128xf32, #tpu.memory_space<vmem>>, vector<1x128xf32>
      %843 = vector.broadcast %842 : vector<1x128xf32> to vector<8x128xf32>
      %844 = arith.addf %841, %843 : vector<8x128xf32>
      %cst_281 = arith.constant 0.000000e+00 : f32
      %845 = vector.broadcast %cst_281 : f32 to vector<8x128xf32>
      %846 = arith.maximumf %844, %845 : vector<8x128xf32>
      %c168 = arith.constant 168 : index
      %c0_282 = arith.constant 0 : index
      %847 = vector.load %arg6[%c168, %c0_282] : memref<208x128xf32, #tpu.memory_space<vmem>>, vector<1x128xf32>
      %848 = vector.broadcast %847 : vector<1x128xf32> to vector<8x128xf32>
      %849 = arith.mulf %848, %376 : vector<8x128xf32>
      %c169 = arith.constant 169 : index
      %c0_283 = arith.constant 0 : index
      %850 = vector.load %arg6[%c169, %c0_283] : memref<208x128xf32, #tpu.memory_space<vmem>>, vector<1x128xf32>
      %851 = vector.broadcast %850 : vector<1x128xf32> to vector<8x128xf32>
      %852 = arith.mulf %851, %413 : vector<8x128xf32>
      %853 = arith.addf %849, %852 : vector<8x128xf32>
      %c170 = arith.constant 170 : index
      %c0_284 = arith.constant 0 : index
      %854 = vector.load %arg6[%c170, %c0_284] : memref<208x128xf32, #tpu.memory_space<vmem>>, vector<1x128xf32>
      %855 = vector.broadcast %854 : vector<1x128xf32> to vector<8x128xf32>
      %856 = arith.mulf %855, %450 : vector<8x128xf32>
      %857 = arith.addf %853, %856 : vector<8x128xf32>
      %c171 = arith.constant 171 : index
      %c0_285 = arith.constant 0 : index
      %858 = vector.load %arg6[%c171, %c0_285] : memref<208x128xf32, #tpu.memory_space<vmem>>, vector<1x128xf32>
      %859 = vector.broadcast %858 : vector<1x128xf32> to vector<8x128xf32>
      %860 = arith.mulf %859, %487 : vector<8x128xf32>
      %861 = arith.addf %857, %860 : vector<8x128xf32>
      %c172 = arith.constant 172 : index
      %c0_286 = arith.constant 0 : index
      %862 = vector.load %arg6[%c172, %c0_286] : memref<208x128xf32, #tpu.memory_space<vmem>>, vector<1x128xf32>
      %863 = vector.broadcast %862 : vector<1x128xf32> to vector<8x128xf32>
      %864 = arith.mulf %863, %524 : vector<8x128xf32>
      %865 = arith.addf %861, %864 : vector<8x128xf32>
      %c173 = arith.constant 173 : index
      %c0_287 = arith.constant 0 : index
      %866 = vector.load %arg6[%c173, %c0_287] : memref<208x128xf32, #tpu.memory_space<vmem>>, vector<1x128xf32>
      %867 = vector.broadcast %866 : vector<1x128xf32> to vector<8x128xf32>
      %868 = arith.mulf %867, %561 : vector<8x128xf32>
      %869 = arith.addf %865, %868 : vector<8x128xf32>
      %c174 = arith.constant 174 : index
      %c0_288 = arith.constant 0 : index
      %870 = vector.load %arg6[%c174, %c0_288] : memref<208x128xf32, #tpu.memory_space<vmem>>, vector<1x128xf32>
      %871 = vector.broadcast %870 : vector<1x128xf32> to vector<8x128xf32>
      %872 = arith.mulf %871, %598 : vector<8x128xf32>
      %873 = arith.addf %869, %872 : vector<8x128xf32>
      %c175 = arith.constant 175 : index
      %c0_289 = arith.constant 0 : index
      %874 = vector.load %arg6[%c175, %c0_289] : memref<208x128xf32, #tpu.memory_space<vmem>>, vector<1x128xf32>
      %875 = vector.broadcast %874 : vector<1x128xf32> to vector<8x128xf32>
      %876 = arith.mulf %875, %635 : vector<8x128xf32>
      %877 = arith.addf %873, %876 : vector<8x128xf32>
      %c21_290 = arith.constant 21 : index
      %c0_291 = arith.constant 0 : index
      %878 = vector.load %arg4[%c21_290, %c0_291] : memref<32x128xf32, #tpu.memory_space<vmem>>, vector<1x128xf32>
      %879 = vector.broadcast %878 : vector<1x128xf32> to vector<8x128xf32>
      %880 = arith.addf %877, %879 : vector<8x128xf32>
      %cst_292 = arith.constant 0.000000e+00 : f32
      %881 = vector.broadcast %cst_292 : f32 to vector<8x128xf32>
      %882 = arith.maximumf %880, %881 : vector<8x128xf32>
      %c176 = arith.constant 176 : index
      %c0_293 = arith.constant 0 : index
      %883 = vector.load %arg6[%c176, %c0_293] : memref<208x128xf32, #tpu.memory_space<vmem>>, vector<1x128xf32>
      %884 = vector.broadcast %883 : vector<1x128xf32> to vector<8x128xf32>
      %885 = arith.mulf %884, %376 : vector<8x128xf32>
      %c177 = arith.constant 177 : index
      %c0_294 = arith.constant 0 : index
      %886 = vector.load %arg6[%c177, %c0_294] : memref<208x128xf32, #tpu.memory_space<vmem>>, vector<1x128xf32>
      %887 = vector.broadcast %886 : vector<1x128xf32> to vector<8x128xf32>
      %888 = arith.mulf %887, %413 : vector<8x128xf32>
      %889 = arith.addf %885, %888 : vector<8x128xf32>
      %c178 = arith.constant 178 : index
      %c0_295 = arith.constant 0 : index
      %890 = vector.load %arg6[%c178, %c0_295] : memref<208x128xf32, #tpu.memory_space<vmem>>, vector<1x128xf32>
      %891 = vector.broadcast %890 : vector<1x128xf32> to vector<8x128xf32>
      %892 = arith.mulf %891, %450 : vector<8x128xf32>
      %893 = arith.addf %889, %892 : vector<8x128xf32>
      %c179 = arith.constant 179 : index
      %c0_296 = arith.constant 0 : index
      %894 = vector.load %arg6[%c179, %c0_296] : memref<208x128xf32, #tpu.memory_space<vmem>>, vector<1x128xf32>
      %895 = vector.broadcast %894 : vector<1x128xf32> to vector<8x128xf32>
      %896 = arith.mulf %895, %487 : vector<8x128xf32>
      %897 = arith.addf %893, %896 : vector<8x128xf32>
      %c180 = arith.constant 180 : index
      %c0_297 = arith.constant 0 : index
      %898 = vector.load %arg6[%c180, %c0_297] : memref<208x128xf32, #tpu.memory_space<vmem>>, vector<1x128xf32>
      %899 = vector.broadcast %898 : vector<1x128xf32> to vector<8x128xf32>
      %900 = arith.mulf %899, %524 : vector<8x128xf32>
      %901 = arith.addf %897, %900 : vector<8x128xf32>
      %c181 = arith.constant 181 : index
      %c0_298 = arith.constant 0 : index
      %902 = vector.load %arg6[%c181, %c0_298] : memref<208x128xf32, #tpu.memory_space<vmem>>, vector<1x128xf32>
      %903 = vector.broadcast %902 : vector<1x128xf32> to vector<8x128xf32>
      %904 = arith.mulf %903, %561 : vector<8x128xf32>
      %905 = arith.addf %901, %904 : vector<8x128xf32>
      %c182 = arith.constant 182 : index
      %c0_299 = arith.constant 0 : index
      %906 = vector.load %arg6[%c182, %c0_299] : memref<208x128xf32, #tpu.memory_space<vmem>>, vector<1x128xf32>
      %907 = vector.broadcast %906 : vector<1x128xf32> to vector<8x128xf32>
      %908 = arith.mulf %907, %598 : vector<8x128xf32>
      %909 = arith.addf %905, %908 : vector<8x128xf32>
      %c183 = arith.constant 183 : index
      %c0_300 = arith.constant 0 : index
      %910 = vector.load %arg6[%c183, %c0_300] : memref<208x128xf32, #tpu.memory_space<vmem>>, vector<1x128xf32>
      %911 = vector.broadcast %910 : vector<1x128xf32> to vector<8x128xf32>
      %912 = arith.mulf %911, %635 : vector<8x128xf32>
      %913 = arith.addf %909, %912 : vector<8x128xf32>
      %c22_301 = arith.constant 22 : index
      %c0_302 = arith.constant 0 : index
      %914 = vector.load %arg4[%c22_301, %c0_302] : memref<32x128xf32, #tpu.memory_space<vmem>>, vector<1x128xf32>
      %915 = vector.broadcast %914 : vector<1x128xf32> to vector<8x128xf32>
      %916 = arith.addf %913, %915 : vector<8x128xf32>
      %cst_303 = arith.constant 0.000000e+00 : f32
      %917 = vector.broadcast %cst_303 : f32 to vector<8x128xf32>
      %918 = arith.maximumf %916, %917 : vector<8x128xf32>
      %c184 = arith.constant 184 : index
      %c0_304 = arith.constant 0 : index
      %919 = vector.load %arg6[%c184, %c0_304] : memref<208x128xf32, #tpu.memory_space<vmem>>, vector<1x128xf32>
      %920 = vector.broadcast %919 : vector<1x128xf32> to vector<8x128xf32>
      %921 = arith.mulf %920, %376 : vector<8x128xf32>
      %c185 = arith.constant 185 : index
      %c0_305 = arith.constant 0 : index
      %922 = vector.load %arg6[%c185, %c0_305] : memref<208x128xf32, #tpu.memory_space<vmem>>, vector<1x128xf32>
      %923 = vector.broadcast %922 : vector<1x128xf32> to vector<8x128xf32>
      %924 = arith.mulf %923, %413 : vector<8x128xf32>
      %925 = arith.addf %921, %924 : vector<8x128xf32>
      %c186 = arith.constant 186 : index
      %c0_306 = arith.constant 0 : index
      %926 = vector.load %arg6[%c186, %c0_306] : memref<208x128xf32, #tpu.memory_space<vmem>>, vector<1x128xf32>
      %927 = vector.broadcast %926 : vector<1x128xf32> to vector<8x128xf32>
      %928 = arith.mulf %927, %450 : vector<8x128xf32>
      %929 = arith.addf %925, %928 : vector<8x128xf32>
      %c187 = arith.constant 187 : index
      %c0_307 = arith.constant 0 : index
      %930 = vector.load %arg6[%c187, %c0_307] : memref<208x128xf32, #tpu.memory_space<vmem>>, vector<1x128xf32>
      %931 = vector.broadcast %930 : vector<1x128xf32> to vector<8x128xf32>
      %932 = arith.mulf %931, %487 : vector<8x128xf32>
      %933 = arith.addf %929, %932 : vector<8x128xf32>
      %c188 = arith.constant 188 : index
      %c0_308 = arith.constant 0 : index
      %934 = vector.load %arg6[%c188, %c0_308] : memref<208x128xf32, #tpu.memory_space<vmem>>, vector<1x128xf32>
      %935 = vector.broadcast %934 : vector<1x128xf32> to vector<8x128xf32>
      %936 = arith.mulf %935, %524 : vector<8x128xf32>
      %937 = arith.addf %933, %936 : vector<8x128xf32>
      %c189 = arith.constant 189 : index
      %c0_309 = arith.constant 0 : index
      %938 = vector.load %arg6[%c189, %c0_309] : memref<208x128xf32, #tpu.memory_space<vmem>>, vector<1x128xf32>
      %939 = vector.broadcast %938 : vector<1x128xf32> to vector<8x128xf32>
      %940 = arith.mulf %939, %561 : vector<8x128xf32>
      %941 = arith.addf %937, %940 : vector<8x128xf32>
      %c190 = arith.constant 190 : index
      %c0_310 = arith.constant 0 : index
      %942 = vector.load %arg6[%c190, %c0_310] : memref<208x128xf32, #tpu.memory_space<vmem>>, vector<1x128xf32>
      %943 = vector.broadcast %942 : vector<1x128xf32> to vector<8x128xf32>
      %944 = arith.mulf %943, %598 : vector<8x128xf32>
      %945 = arith.addf %941, %944 : vector<8x128xf32>
      %c191 = arith.constant 191 : index
      %c0_311 = arith.constant 0 : index
      %946 = vector.load %arg6[%c191, %c0_311] : memref<208x128xf32, #tpu.memory_space<vmem>>, vector<1x128xf32>
      %947 = vector.broadcast %946 : vector<1x128xf32> to vector<8x128xf32>
      %948 = arith.mulf %947, %635 : vector<8x128xf32>
      %949 = arith.addf %945, %948 : vector<8x128xf32>
      %c23_312 = arith.constant 23 : index
      %c0_313 = arith.constant 0 : index
      %950 = vector.load %arg4[%c23_312, %c0_313] : memref<32x128xf32, #tpu.memory_space<vmem>>, vector<1x128xf32>
      %951 = vector.broadcast %950 : vector<1x128xf32> to vector<8x128xf32>
      %952 = arith.addf %949, %951 : vector<8x128xf32>
      %cst_314 = arith.constant 0.000000e+00 : f32
      %953 = vector.broadcast %cst_314 : f32 to vector<8x128xf32>
      %954 = arith.maximumf %952, %953 : vector<8x128xf32>
      %c200 = arith.constant 200 : index
      %c0_315 = arith.constant 0 : index
      %955 = vector.load %arg6[%c200, %c0_315] : memref<208x128xf32, #tpu.memory_space<vmem>>, vector<1x128xf32>
      %956 = vector.broadcast %955 : vector<1x128xf32> to vector<8x128xf32>
      %957 = arith.mulf %956, %702 : vector<8x128xf32>
      %c201 = arith.constant 201 : index
      %c0_316 = arith.constant 0 : index
      %958 = vector.load %arg6[%c201, %c0_316] : memref<208x128xf32, #tpu.memory_space<vmem>>, vector<1x128xf32>
      %959 = vector.broadcast %958 : vector<1x128xf32> to vector<8x128xf32>
      %960 = arith.mulf %959, %738 : vector<8x128xf32>
      %961 = arith.addf %957, %960 : vector<8x128xf32>
      %c202 = arith.constant 202 : index
      %c0_317 = arith.constant 0 : index
      %962 = vector.load %arg6[%c202, %c0_317] : memref<208x128xf32, #tpu.memory_space<vmem>>, vector<1x128xf32>
      %963 = vector.broadcast %962 : vector<1x128xf32> to vector<8x128xf32>
      %964 = arith.mulf %963, %774 : vector<8x128xf32>
      %965 = arith.addf %961, %964 : vector<8x128xf32>
      %c203 = arith.constant 203 : index
      %c0_318 = arith.constant 0 : index
      %966 = vector.load %arg6[%c203, %c0_318] : memref<208x128xf32, #tpu.memory_space<vmem>>, vector<1x128xf32>
      %967 = vector.broadcast %966 : vector<1x128xf32> to vector<8x128xf32>
      %968 = arith.mulf %967, %810 : vector<8x128xf32>
      %969 = arith.addf %965, %968 : vector<8x128xf32>
      %c204 = arith.constant 204 : index
      %c0_319 = arith.constant 0 : index
      %970 = vector.load %arg6[%c204, %c0_319] : memref<208x128xf32, #tpu.memory_space<vmem>>, vector<1x128xf32>
      %971 = vector.broadcast %970 : vector<1x128xf32> to vector<8x128xf32>
      %972 = arith.mulf %971, %846 : vector<8x128xf32>
      %973 = arith.addf %969, %972 : vector<8x128xf32>
      %c205 = arith.constant 205 : index
      %c0_320 = arith.constant 0 : index
      %974 = vector.load %arg6[%c205, %c0_320] : memref<208x128xf32, #tpu.memory_space<vmem>>, vector<1x128xf32>
      %975 = vector.broadcast %974 : vector<1x128xf32> to vector<8x128xf32>
      %976 = arith.mulf %975, %882 : vector<8x128xf32>
      %977 = arith.addf %973, %976 : vector<8x128xf32>
      %c206 = arith.constant 206 : index
      %c0_321 = arith.constant 0 : index
      %978 = vector.load %arg6[%c206, %c0_321] : memref<208x128xf32, #tpu.memory_space<vmem>>, vector<1x128xf32>
      %979 = vector.broadcast %978 : vector<1x128xf32> to vector<8x128xf32>
      %980 = arith.mulf %979, %918 : vector<8x128xf32>
      %981 = arith.addf %977, %980 : vector<8x128xf32>
      %c207 = arith.constant 207 : index
      %c0_322 = arith.constant 0 : index
      %982 = vector.load %arg6[%c207, %c0_322] : memref<208x128xf32, #tpu.memory_space<vmem>>, vector<1x128xf32>
      %983 = vector.broadcast %982 : vector<1x128xf32> to vector<8x128xf32>
      %984 = arith.mulf %983, %954 : vector<8x128xf32>
      %985 = arith.addf %981, %984 : vector<8x128xf32>
      %c24_323 = arith.constant 24 : index
      %c0_324 = arith.constant 0 : index
      %986 = vector.load %arg4[%c24_323, %c0_324] : memref<32x128xf32, #tpu.memory_space<vmem>>, vector<1x128xf32>
      %987 = vector.broadcast %986 : vector<1x128xf32> to vector<8x128xf32>
      %988 = arith.addf %985, %987 : vector<8x128xf32>
      %989 = arith.addf %988, %666 : vector<8x128xf32>
      %990 = arith.index_cast %39 : i32 to index
      %c0_325 = arith.constant 0 : index
      %991 = vector.load %arg5[%990, %c0_325] : memref<16x128xf32, #tpu.memory_space<vmem>>, vector<8x128xf32>
      tpu.vector_store %arg5[%990, %c0_325], %989 {strides = array<i32>} : memref<16x128xf32, #tpu.memory_space<vmem>>, vector<8x128xf32>,
    }
    %c2_i32_26 = arith.constant 2 : i32
    return
  }
  func.func @transform_0(%arg0: i32) -> (i32, i32) {
    %c0_i32 = arith.constant 0 : i32
    %c0_i32_0 = arith.constant 0 : i32
    %c0_i32_1 = arith.constant 0 : i32
    return %c0_i32, %c0_i32_0 : i32, i32
  }
  func.func @transform_1(%arg0: i32) -> (i32, i32) {
    %c0_i32 = arith.constant 0 : i32
    %c0_i32_0 = arith.constant 0 : i32
    return %c0_i32, %arg0 : i32, i32
  }
  func.func @transform_2(%arg0: i32) -> (i32, i32) {
    %c0_i32 = arith.constant 0 : i32
    %c0_i32_0 = arith.constant 0 : i32
    return %c0_i32, %arg0 : i32, i32
  }
  func.func @transform_3(%arg0: i32) -> (i32, i32) {
    %c0_i32 = arith.constant 0 : i32
    %c0_i32_0 = arith.constant 0 : i32
    return %c0_i32, %arg0 : i32, i32
  }
  func.func @transform_4(%arg0: i32) -> (i32, i32) {
    %c0_i32 = arith.constant 0 : i32
    %c0_i32_0 = arith.constant 0 : i32
    return %c0_i32, %arg0 : i32, i32
  }
}

</mosaic_0001>

<llo_original>
// kernel: sparse_linear_neq_forward.1
$region0: #{sparse_linear_neq_forward.1}
  #allocation0 [shape = 'u32[]', space=smem, size = 0x4, offset = 0x4, fixed_abs, tag = 'smem constant byte address 0x4 - core index']
  #allocation1 [shape = 'u32[144,128]{1,0:T(1,128)}', space=vmem, size = 0x12000, scoped, tag = 'internal scratch']
  #allocation2 [shape = 'f32[208,128]{1,0:T(8,128)}', space=vmem, size = 0x1a000, scoped, tag = 'scratch operand']
  #allocation3 [shape = 'f32[64,128]{1,0:T(8,128)}', space=vmem, size = 0x8000, scoped, tag = 'scratch operand']
  %s0 = inlined_call_operand.hbm [shape: f32[16,64], index: 0, kind: input, shape index: {}]
  %s1 = inlined_call_operand.hbm [shape: s32[4,512], index: 1, kind: input, shape index: {}]
  %s2 = inlined_call_operand.hbm [shape: bf16[208,512], index: 2, kind: input, shape index: {}]
  %s3 = inlined_call_operand.hbm [shape: f32[32,512], index: 3, kind: input, shape index: {}]
  %s4 = inlined_call_operand.hbm [shape: f32[16,512], index: 4, kind: output, shape index: {}]
  %s5 = sld [smem:[#allocation0]]
  $region72: #{sparse_linear_neq_forward.1} parent=0
    _
  %s7 = ssub.s32 1, %s5
  %s8 = scalar_select 0, %s7, %s5
  $region1: #{sparse_linear_neq_forward.1} parent=0
    #allocation4 [shape = 'u8[8192]{0}', space=vmem, size = 0x2000, scoped, tag = 'input window, operand 0, single buffered']
    #allocation5 [shape = 's32[2]{0}', space=sflag, size = 0x8, scoped, tag = 'scoped memory for sparse_linear_neq_forward.1']
    #allocation6 [shape = 's32[2]{0}', space=sflag, size = 0x8, scoped, tag = 'scoped memory for sparse_linear_neq_forward.1']
    #allocation7 [shape = 'u8[4096]{0}', space=vmem, size = 0x1000, scoped, tag = 'input window, operand 1']
    #allocation8 [shape = 's32[2]{0}', space=sflag, size = 0x8, scoped, tag = 'scoped memory for sparse_linear_neq_forward.1']
    #allocation9 [shape = 'u8[106496]{0}', space=vmem, size = 0x1a000, scoped, tag = 'input window, operand 2']
    #allocation10 [shape = 'u8[32768]{0}', space=vmem, size = 0x8000, scoped, tag = 'input window, operand 3']
    #allocation11 [shape = 's32[2]{0}', space=sflag, size = 0x8, scoped, tag = 'scoped memory for sparse_linear_neq_forward.1']
    #allocation12 [shape = 'u8[16384]{0}', space=vmem, size = 0x4000, scoped, tag = 'output window, operand 0']
    %9 = vsyncpa [#allocation5], 0
    %10 = vsyncpa [#allocation8], 0
    %s11 = scalar_lea.sflag [#allocation8], 1
    %12 = vsyncpa %s11, 0
    %13 = vsyncpa [#allocation11], 0
    %s14 = scalar_lea.sflag [#allocation11], 1
    %15 = vsyncpa %s14, 0
    %16 = vsyncpa [#allocation6], 0
    %s17 = scalar_lea.sflag [#allocation6], 1
    %18 = vsyncpa %s17, 0
    loop: start=0, step=1, limit=6
    $region2: #{sparse_linear_neq_forward.1} parent=1 // loop_pre_header
      _
    $region3: #{sparse_linear_neq_forward.1} parent=1 // loop_header
      %s20 = sphi 0, %s24
      %p21 = scmp.ge.s32.totalorder %s20, 6
      %s28 = sphi 0, %s28
      %s30 = sphi 0, %s28
      %s31 = sphi 0, %s30
      %s45 = sphi 0, %s31
      %s51 = sphi 0, %s53
      %s54 = sphi 0, %s51
      %s55 = sphi 0, %s54
      %s71 = sphi 0, %s55
      %s77 = sphi 0, %s79
      %s80 = sphi 0, %s77
      %s81 = sphi 0, %s80
      %s97 = sphi 0, %s81
      %s103 = sphi 0, %s105
      %s106 = sphi 0, %s103
      %s107 = sphi 0, %s106
      %s123 = sphi 0, %s107
      %s129 = sphi 0, %s131
      %s132 = sphi 0, %s129
      %s133 = sphi 0, %s132
      %s149 = sphi 0, %s133
    $region4: #{sparse_linear_neq_forward.1} parent=1 // loop_header_branch
      %23 = sbr.rel (%p21) target = $region8
    $region5: #{sparse_linear_neq_forward.1} parent=1 // loop_body
      %s25 = ssub.s32 %s20, 1
      %s26 = ssub.s32 %s20, 2
      %s27 = sadd.s32 %s20, 1
      %s29 = sadd.s32 %s28, 1
      %p32 = scmp.eq.s32.totalorder %s20, 3
      %p33 = scmp.ne.s32.totalorder %s28, %s30
      %p34 = scmp.eq.s32.totalorder %s20, 0
      %p35 = por %p33, %p34
      %p36 = scmp.ne.s32.totalorder %s28, %s30
      %p37 = scmp.eq.s32.totalorder %s25, 3
      %p38 = por %p36, %p37
      %p39 = scmp.ne.s32.totalorder %s30, %s31
      %p40 = scmp.eq.s32.totalorder %s25, 0
      %p41 = por %p39, %p40
      %p42 = scmp.ne.s32.totalorder %s30, %s31
      %p43 = scmp.eq.s32.totalorder %s26, 3
      %p44 = por %p42, %p43
      %p46 = scmp.ne.s32.totalorder %s31, %s45
      %p47 = scmp.eq.s32.totalorder %s26, 0
      %p48 = por %p46, %p47
      %s49 = ssub.s32 %s20, %s27
      %p50 = scmp.eq.s32.totalorder %s49, 0
      %s52 = sadd.s32 %s51, 1
      %s53 = scalar_select %p50, %s51, %s52
      %p56 = pneg %p50
      %p57 = scmp.eq.s32.totalorder %s20, 3
      %p58 = por %p56, %p57
      %p59 = scmp.ne.s32.totalorder %s51, %s54
      %p60 = scmp.eq.s32.totalorder %s20, 0
      %p61 = por %p59, %p60
      %p62 = scmp.ne.s32.totalorder %s51, %s54
      %p63 = scmp.eq.s32.totalorder %s25, 3
      %p64 = por %p62, %p63
      %p65 = scmp.ne.s32.totalorder %s54, %s55
      %p66 = scmp.eq.s32.totalorder %s25, 0
      %p67 = por %p65, %p66
      %p68 = scmp.ne.s32.totalorder %s54, %s55
      %p69 = scmp.eq.s32.totalorder %s26, 3
      %p70 = por %p68, %p69
      %p72 = scmp.ne.s32.totalorder %s55, %s71
      %p73 = scmp.eq.s32.totalorder %s26, 0
      %p74 = por %p72, %p73
      %s75 = ssub.s32 %s20, %s27
      %p76 = scmp.eq.s32.totalorder %s75, 0
      %s78 = sadd.s32 %s77, 1
      %s79 = scalar_select %p76, %s77, %s78
      %p82 = pneg %p76
      %p83 = scmp.eq.s32.totalorder %s20, 3
      %p84 = por %p82, %p83
      %p85 = scmp.ne.s32.totalorder %s77, %s80
      %p86 = scmp.eq.s32.totalorder %s20, 0
      %p87 = por %p85, %p86
      %p88 = scmp.ne.s32.totalorder %s77, %s80
      %p89 = scmp.eq.s32.totalorder %s25, 3
      %p90 = por %p88, %p89
      %p91 = scmp.ne.s32.totalorder %s80, %s81
      %p92 = scmp.eq.s32.totalorder %s25, 0
      %p93 = por %p91, %p92
      %p94 = scmp.ne.s32.totalorder %s80, %s81
      %p95 = scmp.eq.s32.totalorder %s26, 3
      %p96 = por %p94, %p95
      %p98 = scmp.ne.s32.totalorder %s81, %s97
      %p99 = scmp.eq.s32.totalorder %s26, 0
      %p100 = por %p98, %p99
      %s101 = ssub.s32 %s20, %s27
      %p102 = scmp.eq.s32.totalorder %s101, 0
      %s104 = sadd.s32 %s103, 1
      %s105 = scalar_select %p102, %s103, %s104
      %p108 = pneg %p102
      %p109 = scmp.eq.s32.totalorder %s20, 3
      %p110 = por %p108, %p109
      %p111 = scmp.ne.s32.totalorder %s103, %s106
      %p112 = scmp.eq.s32.totalorder %s20, 0
      %p113 = por %p111, %p112
      %p114 = scmp.ne.s32.totalorder %s103, %s106
      %p115 = scmp.eq.s32.totalorder %s25, 3
      %p116 = por %p114, %p115
      %p117 = scmp.ne.s32.totalorder %s106, %s107
      %p118 = scmp.eq.s32.totalorder %s25, 0
      %p119 = por %p117, %p118
      %p120 = scmp.ne.s32.totalorder %s106, %s107
      %p121 = scmp.eq.s32.totalorder %s26, 3
      %p122 = por %p120, %p121
      %p124 = scmp.ne.s32.totalorder %s107, %s123
      %p125 = scmp.eq.s32.totalorder %s26, 0
      %p126 = por %p124, %p125
      %s127 = ssub.s32 %s20, %s27
      %p128 = scmp.eq.s32.totalorder %s127, 0
      %s130 = sadd.s32 %s129, 1
      %s131 = scalar_select %p128, %s129, %s130
      %p134 = pneg %p128
      %p135 = scmp.eq.s32.totalorder %s20, 3
      %p136 = por %p134, %p135
      %p137 = scmp.ne.s32.totalorder %s129, %s132
      %p138 = scmp.eq.s32.totalorder %s20, 0
      %p139 = por %p137, %p138
      %p140 = scmp.ne.s32.totalorder %s129, %s132
      %p141 = scmp.eq.s32.totalorder %s25, 3
      %p142 = por %p140, %p141
      %p143 = scmp.ne.s32.totalorder %s132, %s133
      %p144 = scmp.eq.s32.totalorder %s25, 0
      %p145 = por %p143, %p144
      %p146 = scmp.ne.s32.totalorder %s132, %s133
      %p147 = scmp.eq.s32.totalorder %s26, 3
      %p148 = por %p146, %p147
      %p150 = scmp.ne.s32.totalorder %s133, %s149
      %p151 = scmp.eq.s32.totalorder %s26, 0
      %p152 = por %p150, %p151
      %p153 = scmp.le.s32.totalorder 1, %s20
      %p154 = scmp.lt.s32.totalorder %s20, 5
      %p155 = pnand %p153, %p154
      %p156 = pneg %p155
      // Predicated region
      $region9: #{sparse_linear_neq_forward.1} parent=5 // pred_check
        _
      $region10: #{sparse_linear_neq_forward.1} parent=5 // pred_check_branch
        %158 = sbr.rel (%p155) target = $region12
      $region11: #{sparse_linear_neq_forward.1} parent=5 // pred_region
        %s159 = ssub.s32 %s20, 1
        // Predicated region
        $region13: #{sparse_linear_neq_forward.1} parent=11 // pred_check
          %p160 = pneg %p41
        $region14: #{sparse_linear_neq_forward.1} parent=11 // pred_check_branch
          %162 = sbr.rel (%p160) target = $region16
        $region15: #{sparse_linear_neq_forward.1} parent=11 // pred_region
          %s164 = ssub.s32 256, 256
          %165 = vsyncadd [#allocation5], %s164
          %s166 = sshll.u32 [#allocation4], 4
          %s167 = int_to_ptr.vmem [resolvable:$true] %s166
          %172 = dma.hbm_to_vmem [thread:$0]  %s0, 256, %s167, [#allocation5], 128, 128, 8
        $region16: #{sparse_linear_neq_forward.1} parent=11 // pred_fallthru
          _
      $region12: #{sparse_linear_neq_forward.1} parent=5 // pred_fallthru
        _
      %p173 = scmp.lt.s32.totalorder %s20, 4
      // Predicated region
      $region17: #{sparse_linear_neq_forward.1} parent=5 // pred_check
        %p174 = pneg %p173
      $region18: #{sparse_linear_neq_forward.1} parent=5 // pred_check_branch
        %176 = sbr.rel (%p174) target = $region20
      $region19: #{sparse_linear_neq_forward.1} parent=5 // pred_region
        // Predicated region
        $region21: #{sparse_linear_neq_forward.1} parent=19 // pred_check
          %p177 = pneg %p61
        $region22: #{sparse_linear_neq_forward.1} parent=19 // pred_check_branch
          %179 = sbr.rel (%p177) target = $region24
        $region23: #{sparse_linear_neq_forward.1} parent=19 // pred_region
          %s180 = sand.u32 %s20, 1
          %s181 = scalar_lea.sflag [#allocation8], %s180
          %s182 = sand.u32 %s51, 1
          %s183 = smul.addr %s182, 4
          %s184 = scalar_lea.vmem [#allocation7], %s183
          %s186 = ssub.s32 64, 64
          %187 = vsyncadd %s181, %s186
          %s188 = smul.addr %s20, 64
          %s189 = scalar_lea.hbm %s1, %s188
          %s191 = sshll.u32 %s184, 4
          %s192 = int_to_ptr.vmem [resolvable:$true] %s191
          %194 = dma.hbm_to_vmem [thread:$0]  %s189, 64, %s192, %s181
        $region24: #{sparse_linear_neq_forward.1} parent=19 // pred_fallthru
          _
        // Predicated region
        $region25: #{sparse_linear_neq_forward.1} parent=19 // pred_check
          %p195 = pneg %p87
        $region26: #{sparse_linear_neq_forward.1} parent=19 // pred_check_branch
          %197 = sbr.rel (%p195) target = $region28
        $region27: #{sparse_linear_neq_forward.1} parent=19 // pred_region
          %s198 = sand.u32 %s20, 1
          %s199 = scalar_lea.sflag [#allocation8], %s198
          %s200 = sand.u32 %s77, 1
          %s201 = smul.addr %s200, 104
          %s202 = scalar_lea.vmem [#allocation9], %s201
          %s204 = ssub.s32 1664, 1664
          %205 = vsyncadd %s199, %s204
          %s206 = smul.addr %s20, 64
          %s207 = scalar_lea.hbm %s2, %s206
          %s208 = sshll.u32 %s202, 4
          %s209 = int_to_ptr.vmem [resolvable:$true] %s208
          %214 = dma.hbm_to_vmem [thread:$0]  %s207, 1664, %s209, %s199, 256, 64, 4
        $region28: #{sparse_linear_neq_forward.1} parent=19 // pred_fallthru
          _
        // Predicated region
        $region29: #{sparse_linear_neq_forward.1} parent=19 // pred_check
          %p215 = pneg %p113
        $region30: #{sparse_linear_neq_forward.1} parent=19 // pred_check_branch
          %217 = sbr.rel (%p215) target = $region32
        $region31: #{sparse_linear_neq_forward.1} parent=19 // pred_region
          %s218 = sand.u32 %s103, 1
          %s219 = scalar_lea.sflag [#allocation11], %s218
          %s220 = sand.u32 %s103, 1
          %s221 = smul.addr %s220, 32
          %s222 = scalar_lea.vmem [#allocation10], %s221
          %s224 = ssub.s32 512, 512
          %225 = vsyncadd %s219, %s224
          %s226 = smul.addr %s20, 128
          %s227 = scalar_lea.hbm %s3, %s226
          %s228 = sshll.u32 %s222, 4
          %s229 = int_to_ptr.vmem [resolvable:$true] %s228
          %234 = dma.hbm_to_vmem [thread:$0]  %s227, 512, %s229, %s219, 512, 128, 8
        $region32: #{sparse_linear_neq_forward.1} parent=19 // pred_fallthru
          _
      $region20: #{sparse_linear_neq_forward.1} parent=5 // pred_fallthru
        _
      %p235 = scmp.le.s32.totalorder 1, %s20
      %p236 = scmp.lt.s32.totalorder %s20, 5
      %p237 = pnand %p235, %p236
      %p238 = pneg %p237
      // Predicated region
      $region33: #{sparse_linear_neq_forward.1} parent=5 // pred_check
        _
      $region34: #{sparse_linear_neq_forward.1} parent=5 // pred_check_branch
        %240 = sbr.rel (%p237) target = $region36
      $region35: #{sparse_linear_neq_forward.1} parent=5 // pred_region
        %s241 = ssub.s32 %s20, 1
        // Predicated region
        $region37: #{sparse_linear_neq_forward.1} parent=35 // pred_check
          %p242 = pneg %p41
        $region38: #{sparse_linear_neq_forward.1} parent=35 // pred_check_branch
          %244 = sbr.rel (%p242) target = $region40
        $region39: #{sparse_linear_neq_forward.1} parent=35 // pred_region
          %245 = dma.done [#allocation5], 256
        $region40: #{sparse_linear_neq_forward.1} parent=35 // pred_fallthru
          _
        %s246 = sand.u32 %s25, 1
        %s247 = scalar_lea.sflag [#allocation8], %s246
        %s248 = sand.u32 %s54, 1
        %s249 = smul.addr %s248, 4
        %s250 = scalar_lea.vmem [#allocation7], %s249
        // Predicated region
        $region41: #{sparse_linear_neq_forward.1} parent=35 // pred_check
          %p251 = pneg %p67
        $region42: #{sparse_linear_neq_forward.1} parent=35 // pred_check_branch
          %253 = sbr.rel (%p251) target = $region44
        $region43: #{sparse_linear_neq_forward.1} parent=35 // pred_region
          %254 = dma.done %s247, 64
        $region44: #{sparse_linear_neq_forward.1} parent=35 // pred_fallthru
          _
        %s255 = sand.u32 %s25, 1
        %s256 = scalar_lea.sflag [#allocation8], %s255
        %s257 = sand.u32 %s80, 1
        %s258 = smul.addr %s257, 104
        %s259 = scalar_lea.vmem [#allocation9], %s258
        // Predicated region
        $region45: #{sparse_linear_neq_forward.1} parent=35 // pred_check
          %p260 = pneg %p93
        $region46: #{sparse_linear_neq_forward.1} parent=35 // pred_check_branch
          %262 = sbr.rel (%p260) target = $region48
        $region47: #{sparse_linear_neq_forward.1} parent=35 // pred_region
          %263 = dma.done %s256, 1664
        $region48: #{sparse_linear_neq_forward.1} parent=35 // pred_fallthru
          _
        %s264 = sand.u32 %s106, 1
        %s265 = scalar_lea.sflag [#allocation11], %s264
        %s266 = sand.u32 %s106, 1
        %s267 = smul.addr %s266, 32
        %s268 = scalar_lea.vmem [#allocation10], %s267
        // Predicated region
        $region49: #{sparse_linear_neq_forward.1} parent=35 // pred_check
          %p269 = pneg %p119
        $region50: #{sparse_linear_neq_forward.1} parent=35 // pred_check_branch
          %271 = sbr.rel (%p269) target = $region52
        $region51: #{sparse_linear_neq_forward.1} parent=35 // pred_region
          %272 = dma.done %s265, 512
        $region52: #{sparse_linear_neq_forward.1} parent=35 // pred_fallthru
          _
        %p273 = pneg %p41
        %p274 = pneg %p38
        %s275 = sand.u32 %s25, 1
        %s276 = scalar_lea.sflag [#allocation8], %s275
        %s277 = sand.u32 %s54, 1
        %s278 = smul.addr %s277, 4
        %s279 = scalar_lea.vmem [#allocation7], %s278
        %p280 = pneg %p67
        %p281 = pneg %p64
        %s282 = sand.u32 %s25, 1
        %s283 = scalar_lea.sflag [#allocation8], %s282
        %s284 = sand.u32 %s80, 1
        %s285 = smul.addr %s284, 104
        %s286 = scalar_lea.vmem [#allocation9], %s285
        %p287 = pneg %p93
        %p288 = pneg %p90
        %s289 = sand.u32 %s106, 1
        %s290 = scalar_lea.sflag [#allocation11], %s289
        %s291 = sand.u32 %s106, 1
        %s292 = smul.addr %s291, 32
        %s293 = scalar_lea.vmem [#allocation10], %s292
        %p294 = pneg %p119
        %p295 = pneg %p116
        %p296 = pneg %p145
        %p297 = pneg %p142
        %s298 = sand.u32 %s132, 1
        %s299 = scalar_lea.sflag [#allocation6], %s298
        %s300 = sand.u32 %s132, 1
        %s301 = smul.addr %s300, 16
        %s302 = scalar_lea.vmem [#allocation12], %s301
        %v303 = vld [vmem:[%s259] sm:$0xf]
        %v304 = vld [vmem:[%s259 + $0x4] sm:$0xf]
        %v305 = vld [vmem:[%s259 + $0x8] sm:$0xf]
        %v306 = vld [vmem:[%s259 + $0xc] sm:$0xf]
        %v307 = vld [vmem:[%s259 + $0x10] sm:$0xf]
        %v308 = vld [vmem:[%s259 + $0x14] sm:$0xf]
        %v309 = vld [vmem:[%s259 + $0x18] sm:$0xf]
        %v310 = vld [vmem:[%s259 + $0x1c] sm:$0xf]
        %v311 = vld [vmem:[%s259 + $0x20] sm:$0xf]
        %v312 = vld [vmem:[%s259 + $0x24] sm:$0xf]
        %v313 = vld [vmem:[%s259 + $0x28] sm:$0xf]
        %v314 = vld [vmem:[%s259 + $0x2c] sm:$0xf]
        %v315 = vld [vmem:[%s259 + $0x30] sm:$0xf]
        %v316 = vld [vmem:[%s259 + $0x34] sm:$0xf]
        %v317 = vld [vmem:[%s259 + $0x38] sm:$0xf]
        %v318 = vld [vmem:[%s259 + $0x3c] sm:$0xf]
        %v319 = vld [vmem:[%s259 + $0x40] sm:$0xf]
        %v320 = vld [vmem:[%s259 + $0x44] sm:$0xf]
        %v321 = vld [vmem:[%s259 + $0x48] sm:$0xf]
        %v322 = vld [vmem:[%s259 + $0x4c] sm:$0xf]
        %v323 = vld [vmem:[%s259 + $0x50] sm:$0xf]
        %v324 = vld [vmem:[%s259 + $0x54] sm:$0xf]
        %v325 = vld [vmem:[%s259 + $0x58] sm:$0xf]
        %v326 = vld [vmem:[%s259 + $0x5c] sm:$0xf]
        %v327 = vld [vmem:[%s259 + $0x60] sm:$0xf]
        %v328 = vld [vmem:[%s259 + $0x64] sm:$0xf]
        %v329 = vunpack.c.l.bf16 %v303
        %v330 = vunpack.c.l.bf16 %v304
        %v331 = vunpack.c.l.bf16 %v305
        %v332 = vunpack.c.l.bf16 %v306
        %v333 = vunpack.c.l.bf16 %v307
        %v334 = vunpack.c.l.bf16 %v308
        %v335 = vunpack.c.l.bf16 %v309
        %v336 = vunpack.c.l.bf16 %v310
        %v337 = vunpack.c.l.bf16 %v311
        %v338 = vunpack.c.l.bf16 %v312
        %v339 = vunpack.c.l.bf16 %v313
        %v340 = vunpack.c.l.bf16 %v314
        %v341 = vunpack.c.l.bf16 %v315
        %v342 = vunpack.c.l.bf16 %v316
        %v343 = vunpack.c.l.bf16 %v317
        %v344 = vunpack.c.l.bf16 %v318
        %v345 = vunpack.c.l.bf16 %v319
        %v346 = vunpack.c.l.bf16 %v320
        %v347 = vunpack.c.l.bf16 %v321
        %v348 = vunpack.c.l.bf16 %v322
        %v349 = vunpack.c.l.bf16 %v323
        %v350 = vunpack.c.l.bf16 %v324
        %v351 = vunpack.c.l.bf16 %v325
        %v352 = vunpack.c.l.bf16 %v326
        %v353 = vunpack.c.l.bf16 %v327
        %v354 = vunpack.c.l.bf16 %v328
        %355 = vst [vmem:[#allocation2] sm:$0xff] %v329
        %356 = vst [vmem:[#allocation2 + $0x8] sm:$0xff] %v330
        %357 = vst [vmem:[#allocation2 + $0x10] sm:$0xff] %v331
        %358 = vst [vmem:[#allocation2 + $0x18] sm:$0xff] %v332
        %359 = vst [vmem:[#allocation2 + $0x20] sm:$0xff] %v333
        %360 = vst [vmem:[#allocation2 + $0x28] sm:$0xff] %v334
        %361 = vst [vmem:[#allocation2 + $0x30] sm:$0xff] %v335
        %362 = vst [vmem:[#allocation2 + $0x38] sm:$0xff] %v336
        %363 = vst [vmem:[#allocation2 + $0x40] sm:$0xff] %v337
        %364 = vst [vmem:[#allocation2 + $0x48] sm:$0xff] %v338
        %365 = vst [vmem:[#allocation2 + $0x50] sm:$0xff] %v339
        %366 = vst [vmem:[#allocation2 + $0x58] sm:$0xff] %v340
        %367 = vst [vmem:[#allocation2 + $0x60] sm:$0xff] %v341
        %368 = vst [vmem:[#allocation2 + $0x68] sm:$0xff] %v342
        %369 = vst [vmem:[#allocation2 + $0x70] sm:$0xff] %v343
        %370 = vst [vmem:[#allocation2 + $0x78] sm:$0xff] %v344
        %371 = vst [vmem:[#allocation2 + $0x80] sm:$0xff] %v345
        %372 = vst [vmem:[#allocation2 + $0x88] sm:$0xff] %v346
        %373 = vst [vmem:[#allocation2 + $0x90] sm:$0xff] %v347
        %374 = vst [vmem:[#allocation2 + $0x98] sm:$0xff] %v348
        %375 = vst [vmem:[#allocation2 + $0xa0] sm:$0xff] %v349
        %376 = vst [vmem:[#allocation2 + $0xa8] sm:$0xff] %v350
        %377 = vst [vmem:[#allocation2 + $0xb0] sm:$0xff] %v351
        %378 = vst [vmem:[#allocation2 + $0xb8] sm:$0xff] %v352
        %379 = vst [vmem:[#allocation2 + $0xc0] sm:$0xff] %v353
        %380 = vst [vmem:[#allocation2 + $0xc8] sm:$0xff] %v354
        %v381 = vld [vmem:[#allocation4] sm:$0xff]
        %v382 = vld [vmem:[#allocation4 + $0x8] sm:$0xff]
        %v383 = vlaneseq
        %v384 = vshrl.u32 %v383, 7
        %v385 = vadd.s32 %v384, 8
        %v386 = vadd.s32 %v384, 16
        %v387 = vadd.s32 %v384, 24
        %v388 = vadd.s32 %v384, 32
        %v389 = vadd.s32 %v384, 40
        %v390 = vadd.s32 %v384, 48
        %v391 = vadd.s32 %v384, 56
        %v392 = vld [vmem:[%s250] sm:$0x1]
        %v393 = vlaneseq
        %v394 = vshrl.u32 %v393, 7
        %v395 = vsub.s32 0, %v394
        %v396 = vrot.slane %v392, %v395
        %vm397 = vcmp.eq.s32.totalorder %v396, %v384
        %vm398 = vcmp.eq.s32.totalorder %v396, %v385
        %vm399 = vcmp.eq.s32.totalorder %v396, %v386
        %vm400 = vcmp.eq.s32.totalorder %v396, %v387
        %vm401 = vcmp.eq.s32.totalorder %v396, %v388
        %vm402 = vcmp.eq.s32.totalorder %v396, %v389
        %vm403 = vcmp.eq.s32.totalorder %v396, %v390
        %vm404 = vcmp.eq.s32.totalorder %v396, %v391
        %v405 = vsel %vm397, 1.0, 0.0
        %v406 = vsel %vm398, 1.0, 0.0
        %v407 = vsel %vm399, 1.0, 0.0
        %v408 = vsel %vm400, 1.0, 0.0
        %v409 = vsel %vm401, 1.0, 0.0
        %v410 = vsel %vm402, 1.0, 0.0
        %v411 = vsel %vm403, 1.0, 0.0
        %v412 = vsel %vm404, 1.0, 0.0
        %vm413 = vcmask 523264
        %v415 = vsel %vm413, %v381, 0
        %v418 = vsel %vm413, %v382, 0
        %420 = vmatprep.subr.mxu0 0.0
        %421 = vmatpush1.msra.mxu0 0.0
        %422 = vmatprep.subr.mxu0 0.0
        %423 = vmatpush1.msra.mxu0 0.0
        %424 = vmatprep.subr.mxu0 0.0
        %425 = vmatpush1.msra.mxu0 0.0
        %426 = vmatprep.subr.mxu0 0.0
        %427 = vmatpush1.msra.mxu0 0.0
        %428 = vmatprep.subr.mxu0 0.0
        %429 = vmatpush1.msra.mxu0 0.0
        %430 = vmatprep.subr.mxu0 0.0
        %431 = vmatpush1.msra.mxu0 0.0
        %432 = vmatprep.subr.mxu0 0.0
        %433 = vmatpush1.msra.mxu0 0.0
        %434 = vmatprep.subr.mxu0 0.0
        %435 = vmatpush1.msra.mxu0 0.0
        %436 = vmatprep.subr.mxu0 0.0
        %437 = vmatpush1.msra.mxu0 %v412
        %438 = vmatprep.subr.mxu0 0.0
        %439 = vmatpush1.msra.mxu0 %v411
        %440 = vmatprep.subr.mxu0 0.0
        %441 = vmatpush1.msra.mxu0 %v410
        %442 = vmatprep.subr.mxu0 0.0
        %443 = vmatpush1.msra.mxu0 %v409
        %444 = vmatprep.subr.mxu0 0.0
        %445 = vmatpush1.msra.mxu0 %v408
        %446 = vmatprep.subr.mxu0 0.0
        %447 = vmatpush1.msra.mxu0 %v407
        %448 = vmatprep.subr.mxu0 0.0
        %449 = vmatpush1.msra.mxu0 %v406
        %450 = vmatprep.subr.mxu0 0.0
        %451 = vmatpush1.msra.mxu0 %v405
        %452 = vmatprep.subr.mxu0 0.0
        %453 = vmatpush2.msra.mxu0 0.0
        %454 = vmatprep.subr.mxu0 0.0
        %455 = vmatpush2.msra.mxu0 0.0
        %456 = vmatprep.subr.mxu0 0.0
        %457 = vmatpush2.msra.mxu0 0.0
        %458 = vmatprep.subr.mxu0 0.0
        %459 = vmatpush2.msra.mxu0 0.0
        %460 = vmatprep.subr.mxu0 0.0
        %461 = vmatpush2.msra.mxu0 0.0
        %462 = vmatprep.subr.mxu0 0.0
        %463 = vmatpush2.msra.mxu0 0.0
        %464 = vmatprep.subr.mxu0 0.0
        %465 = vmatpush2.msra.mxu0 0.0
        %466 = vmatprep.subr.mxu0 0.0
        %467 = vmatpush2.msra.mxu0 0.0
        %468 = vmatprep.subr.mxu0 0.0
        %469 = vmatpush2.msra.mxu0 0.0
        %470 = vmatprep.subr.mxu0 0.0
        %471 = vmatpush2.msra.mxu0 0.0
        %472 = vmatprep.subr.mxu0 0.0
        %473 = vmatpush2.msra.mxu0 0.0
        %474 = vmatprep.subr.mxu0 0.0
        %475 = vmatpush2.msra.mxu0 0.0
        %476 = vmatprep.subr.mxu0 0.0
        %477 = vmatpush2.msra.mxu0 0.0
        %478 = vmatprep.subr.mxu0 0.0
        %479 = vmatpush2.msra.mxu0 0.0
        %480 = vmatprep.subr.mxu0 0.0
        %481 = vmatpush2.msra.mxu0 0.0
        %482 = vmatprep.subr.mxu0 0.0
        %483 = vmatpush2.msra.mxu0 0.0
        %484 = vmatprep.mubr.f32.mxu0 0.0
        %485 = vmatmul.mubr.f32.gmra.mxu0 %v415
        %v486 = vpop.f32.mrf.mxu0
        %v487 = vadd.f32 0.0, %v486
        %v488 = vpop.f32.mrf.mxu0
        %489 = vmatprep.mubr.f32.mxu0 0.0
        %490 = vmatmul.mubr.f32.gmra.mxu0 %v418
        %v491 = vpop.f32.mrf.mxu0
        %v492 = vadd.f32 0.0, %v491
        %v493 = vpop.f32.mrf.mxu0
        %494 = vdwg.mxu0
        %495 = vst [vmem:[#allocation3] sm:$0xff] %v487
        %496 = vst [vmem:[#allocation3 + $0x8] sm:$0xff] %v492
        %v497 = vld [vmem:[%s250 + $0x1] sm:$0x1]
        %v498 = vlaneseq
        %v499 = vshrl.u32 %v498, 7
        %v500 = vsub.s32 0, %v499
        %v501 = vrot.slane %v497, %v500
        %vm502 = vcmp.eq.s32.totalorder %v501, %v384
        %vm503 = vcmp.eq.s32.totalorder %v501, %v385
        %vm504 = vcmp.eq.s32.totalorder %v501, %v386
        %vm505 = vcmp.eq.s32.totalorder %v501, %v387
        %vm506 = vcmp.eq.s32.totalorder %v501, %v388
        %vm507 = vcmp.eq.s32.totalorder %v501, %v389
        %vm508 = vcmp.eq.s32.totalorder %v501, %v390
        %vm509 = vcmp.eq.s32.totalorder %v501, %v391
        %v510 = vsel %vm502, 1.0, 0.0
        %v511 = vsel %vm503, 1.0, 0.0
        %v512 = vsel %vm504, 1.0, 0.0
        %v513 = vsel %vm505, 1.0, 0.0
        %v514 = vsel %vm506, 1.0, 0.0
        %v515 = vsel %vm507, 1.0, 0.0
        %v516 = vsel %vm508, 1.0, 0.0
        %v517 = vsel %vm509, 1.0, 0.0
        %518 = vmatprep.subr.mxu0 0.0
        %519 = vmatpush1.msra.mxu0 0.0
        %520 = vmatprep.subr.mxu0 0.0
        %521 = vmatpush1.msra.mxu0 0.0
        %522 = vmatprep.subr.mxu0 0.0
        %523 = vmatpush1.msra.mxu0 0.0
        %524 = vmatprep.subr.mxu0 0.0
        %525 = vmatpush1.msra.mxu0 0.0
        %526 = vmatprep.subr.mxu0 0.0
        %527 = vmatpush1.msra.mxu0 0.0
        %528 = vmatprep.subr.mxu0 0.0
        %529 = vmatpush1.msra.mxu0 0.0
        %530 = vmatprep.subr.mxu0 0.0
        %531 = vmatpush1.msra.mxu0 0.0
        %532 = vmatprep.subr.mxu0 0.0
        %533 = vmatpush1.msra.mxu0 0.0
        %534 = vmatprep.subr.mxu0 0.0
        %535 = vmatpush1.msra.mxu0 %v517
        %536 = vmatprep.subr.mxu0 0.0
        %537 = vmatpush1.msra.mxu0 %v516
        %538 = vmatprep.subr.mxu0 0.0
        %539 = vmatpush1.msra.mxu0 %v515
        %540 = vmatprep.subr.mxu0 0.0
        %541 = vmatpush1.msra.mxu0 %v514
        %542 = vmatprep.subr.mxu0 0.0
        %543 = vmatpush1.msra.mxu0 %v513
        %544 = vmatprep.subr.mxu0 0.0
        %545 = vmatpush1.msra.mxu0 %v512
        %546 = vmatprep.subr.mxu0 0.0
        %547 = vmatpush1.msra.mxu0 %v511
        %548 = vmatprep.subr.mxu0 0.0
        %549 = vmatpush1.msra.mxu0 %v510
        %550 = vmatprep.subr.mxu0 0.0
        %551 = vmatpush2.msra.mxu0 0.0
        %552 = vmatprep.subr.mxu0 0.0
        %553 = vmatpush2.msra.mxu0 0.0
        %554 = vmatprep.subr.mxu0 0.0
        %555 = vmatpush2.msra.mxu0 0.0
        %556 = vmatprep.subr.mxu0 0.0
        %557 = vmatpush2.msra.mxu0 0.0
        %558 = vmatprep.subr.mxu0 0.0
        %559 = vmatpush2.msra.mxu0 0.0
        %560 = vmatprep.subr.mxu0 0.0
        %561 = vmatpush2.msra.mxu0 0.0
        %562 = vmatprep.subr.mxu0 0.0
        %563 = vmatpush2.msra.mxu0 0.0
        %564 = vmatprep.subr.mxu0 0.0
        %565 = vmatpush2.msra.mxu0 0.0
        %566 = vmatprep.subr.mxu0 0.0
        %567 = vmatpush2.msra.mxu0 0.0
        %568 = vmatprep.subr.mxu0 0.0
        %569 = vmatpush2.msra.mxu0 0.0
        %570 = vmatprep.subr.mxu0 0.0
        %571 = vmatpush2.msra.mxu0 0.0
        %572 = vmatprep.subr.mxu0 0.0
        %573 = vmatpush2.msra.mxu0 0.0
        %574 = vmatprep.subr.mxu0 0.0
        %575 = vmatpush2.msra.mxu0 0.0
        %576 = vmatprep.subr.mxu0 0.0
        %577 = vmatpush2.msra.mxu0 0.0
        %578 = vmatprep.subr.mxu0 0.0
        %579 = vmatpush2.msra.mxu0 0.0
        %580 = vmatprep.subr.mxu0 0.0
        %581 = vmatpush2.msra.mxu0 0.0
        %582 = vmatprep.mubr.f32.mxu0 0.0
        %583 = vmatmul.mubr.f32.gmra.mxu0 %v415
        %v584 = vpop.f32.mrf.mxu0
        %v585 = vadd.f32 0.0, %v584
        %v586 = vpop.f32.mrf.mxu0
        %587 = vmatprep.mubr.f32.mxu0 0.0
        %588 = vmatmul.mubr.f32.gmra.mxu0 %v418
        %v589 = vpop.f32.mrf.mxu0
        %v590 = vadd.f32 0.0, %v589
        %v591 = vpop.f32.mrf.mxu0
        %592 = vdwg.mxu0
        %593 = vst [vmem:[#allocation3 + $0x10] sm:$0xff] %v585
        %594 = vst [vmem:[#allocation3 + $0x18] sm:$0xff] %v590
        %v595 = vld [vmem:[%s250 + $0x2] sm:$0x1]
        %v596 = vlaneseq
        %v597 = vshrl.u32 %v596, 7
        %v598 = vsub.s32 0, %v597
        %v599 = vrot.slane %v595, %v598
        %vm600 = vcmp.eq.s32.totalorder %v599, %v384
        %vm601 = vcmp.eq.s32.totalorder %v599, %v385
        %vm602 = vcmp.eq.s32.totalorder %v599, %v386
        %vm603 = vcmp.eq.s32.totalorder %v599, %v387
        %vm604 = vcmp.eq.s32.totalorder %v599, %v388
        %vm605 = vcmp.eq.s32.totalorder %v599, %v389
        %vm606 = vcmp.eq.s32.totalorder %v599, %v390
        %vm607 = vcmp.eq.s32.totalorder %v599, %v391
        %v608 = vsel %vm600, 1.0, 0.0
        %v609 = vsel %vm601, 1.0, 0.0
        %v610 = vsel %vm602, 1.0, 0.0
        %v611 = vsel %vm603, 1.0, 0.0
        %v612 = vsel %vm604, 1.0, 0.0
        %v613 = vsel %vm605, 1.0, 0.0
        %v614 = vsel %vm606, 1.0, 0.0
        %v615 = vsel %vm607, 1.0, 0.0
        %616 = vmatprep.subr.mxu0 0.0
        %617 = vmatpush1.msra.mxu0 0.0
        %618 = vmatprep.subr.mxu0 0.0
        %619 = vmatpush1.msra.mxu0 0.0
        %620 = vmatprep.subr.mxu0 0.0
        %621 = vmatpush1.msra.mxu0 0.0
        %622 = vmatprep.subr.mxu0 0.0
        %623 = vmatpush1.msra.mxu0 0.0
        %624 = vmatprep.subr.mxu0 0.0
        %625 = vmatpush1.msra.mxu0 0.0
        %626 = vmatprep.subr.mxu0 0.0
        %627 = vmatpush1.msra.mxu0 0.0
        %628 = vmatprep.subr.mxu0 0.0
        %629 = vmatpush1.msra.mxu0 0.0
        %630 = vmatprep.subr.mxu0 0.0
        %631 = vmatpush1.msra.mxu0 0.0
        %632 = vmatprep.subr.mxu0 0.0
        %633 = vmatpush1.msra.mxu0 %v615
        %634 = vmatprep.subr.mxu0 0.0
        %635 = vmatpush1.msra.mxu0 %v614
        %636 = vmatprep.subr.mxu0 0.0
        %637 = vmatpush1.msra.mxu0 %v613
        %638 = vmatprep.subr.mxu0 0.0
        %639 = vmatpush1.msra.mxu0 %v612
        %640 = vmatprep.subr.mxu0 0.0
        %641 = vmatpush1.msra.mxu0 %v611
        %642 = vmatprep.subr.mxu0 0.0
        %643 = vmatpush1.msra.mxu0 %v610
        %644 = vmatprep.subr.mxu0 0.0
        %645 = vmatpush1.msra.mxu0 %v609
        %646 = vmatprep.subr.mxu0 0.0
        %647 = vmatpush1.msra.mxu0 %v608
        %648 = vmatprep.subr.mxu0 0.0
        %649 = vmatpush2.msra.mxu0 0.0
        %650 = vmatprep.subr.mxu0 0.0
        %651 = vmatpush2.msra.mxu0 0.0
        %652 = vmatprep.subr.mxu0 0.0
        %653 = vmatpush2.msra.mxu0 0.0
        %654 = vmatprep.subr.mxu0 0.0
        %655 = vmatpush2.msra.mxu0 0.0
        %656 = vmatprep.subr.mxu0 0.0
        %657 = vmatpush2.msra.mxu0 0.0
        %658 = vmatprep.subr.mxu0 0.0
        %659 = vmatpush2.msra.mxu0 0.0
        %660 = vmatprep.subr.mxu0 0.0
        %661 = vmatpush2.msra.mxu0 0.0
        %662 = vmatprep.subr.mxu0 0.0
        %663 = vmatpush2.msra.mxu0 0.0
        %664 = vmatprep.subr.mxu0 0.0
        %665 = vmatpush2.msra.mxu0 0.0
        %666 = vmatprep.subr.mxu0 0.0
        %667 = vmatpush2.msra.mxu0 0.0
        %668 = vmatprep.subr.mxu0 0.0
        %669 = vmatpush2.msra.mxu0 0.0
        %670 = vmatprep.subr.mxu0 0.0
        %671 = vmatpush2.msra.mxu0 0.0
        %672 = vmatprep.subr.mxu0 0.0
        %673 = vmatpush2.msra.mxu0 0.0
        %674 = vmatprep.subr.mxu0 0.0
        %675 = vmatpush2.msra.mxu0 0.0
        %676 = vmatprep.subr.mxu0 0.0
        %677 = vmatpush2.msra.mxu0 0.0
        %678 = vmatprep.subr.mxu0 0.0
        %679 = vmatpush2.msra.mxu0 0.0
        %680 = vmatprep.mubr.f32.mxu0 0.0
        %681 = vmatmul.mubr.f32.gmra.mxu0 %v415
        %v682 = vpop.f32.mrf.mxu0
        %v683 = vadd.f32 0.0, %v682
        %v684 = vpop.f32.mrf.mxu0
        %685 = vmatprep.mubr.f32.mxu0 0.0
        %686 = vmatmul.mubr.f32.gmra.mxu0 %v418
        %v687 = vpop.f32.mrf.mxu0
        %v688 = vadd.f32 0.0, %v687
        %v689 = vpop.f32.mrf.mxu0
        %690 = vdwg.mxu0
        %691 = vst [vmem:[#allocation3 + $0x20] sm:$0xff] %v683
        %692 = vst [vmem:[#allocation3 + $0x28] sm:$0xff] %v688
        %v693 = vld [vmem:[%s250 + $0x3] sm:$0x1]
        %v694 = vlaneseq
        %v695 = vshrl.u32 %v694, 7
        %v696 = vsub.s32 0, %v695
        %v697 = vrot.slane %v693, %v696
        %vm698 = vcmp.eq.s32.totalorder %v697, %v384
        %vm699 = vcmp.eq.s32.totalorder %v697, %v385
        %vm700 = vcmp.eq.s32.totalorder %v697, %v386
        %vm701 = vcmp.eq.s32.totalorder %v697, %v387
        %vm702 = vcmp.eq.s32.totalorder %v697, %v388
        %vm703 = vcmp.eq.s32.totalorder %v697, %v389
        %vm704 = vcmp.eq.s32.totalorder %v697, %v390
        %vm705 = vcmp.eq.s32.totalorder %v697, %v391
        %v706 = vsel %vm698, 1.0, 0.0
        %v707 = vsel %vm699, 1.0, 0.0
        %v708 = vsel %vm700, 1.0, 0.0
        %v709 = vsel %vm701, 1.0, 0.0
        %v710 = vsel %vm702, 1.0, 0.0
        %v711 = vsel %vm703, 1.0, 0.0
        %v712 = vsel %vm704, 1.0, 0.0
        %v713 = vsel %vm705, 1.0, 0.0
        %714 = vmatprep.subr.mxu0 0.0
        %715 = vmatpush1.msra.mxu0 0.0
        %716 = vmatprep.subr.mxu0 0.0
        %717 = vmatpush1.msra.mxu0 0.0
        %718 = vmatprep.subr.mxu0 0.0
        %719 = vmatpush1.msra.mxu0 0.0
        %720 = vmatprep.subr.mxu0 0.0
        %721 = vmatpush1.msra.mxu0 0.0
        %722 = vmatprep.subr.mxu0 0.0
        %723 = vmatpush1.msra.mxu0 0.0
        %724 = vmatprep.subr.mxu0 0.0
        %725 = vmatpush1.msra.mxu0 0.0
        %726 = vmatprep.subr.mxu0 0.0
        %727 = vmatpush1.msra.mxu0 0.0
        %728 = vmatprep.subr.mxu0 0.0
        %729 = vmatpush1.msra.mxu0 0.0
        %730 = vmatprep.subr.mxu0 0.0
        %731 = vmatpush1.msra.mxu0 %v713
        %732 = vmatprep.subr.mxu0 0.0
        %733 = vmatpush1.msra.mxu0 %v712
        %734 = vmatprep.subr.mxu0 0.0
        %735 = vmatpush1.msra.mxu0 %v711
        %736 = vmatprep.subr.mxu0 0.0
        %737 = vmatpush1.msra.mxu0 %v710
        %738 = vmatprep.subr.mxu0 0.0
        %739 = vmatpush1.msra.mxu0 %v709
        %740 = vmatprep.subr.mxu0 0.0
        %741 = vmatpush1.msra.mxu0 %v708
        %742 = vmatprep.subr.mxu0 0.0
        %743 = vmatpush1.msra.mxu0 %v707
        %744 = vmatprep.subr.mxu0 0.0
        %745 = vmatpush1.msra.mxu0 %v706
        %746 = vmatprep.subr.mxu0 0.0
        %747 = vmatpush2.msra.mxu0 0.0
        %748 = vmatprep.subr.mxu0 0.0
        %749 = vmatpush2.msra.mxu0 0.0
        %750 = vmatprep.subr.mxu0 0.0
        %751 = vmatpush2.msra.mxu0 0.0
        %752 = vmatprep.subr.mxu0 0.0
        %753 = vmatpush2.msra.mxu0 0.0
        %754 = vmatprep.subr.mxu0 0.0
        %755 = vmatpush2.msra.mxu0 0.0
        %756 = vmatprep.subr.mxu0 0.0
        %757 = vmatpush2.msra.mxu0 0.0
        %758 = vmatprep.subr.mxu0 0.0
        %759 = vmatpush2.msra.mxu0 0.0
        %760 = vmatprep.subr.mxu0 0.0
        %761 = vmatpush2.msra.mxu0 0.0
        %762 = vmatprep.subr.mxu0 0.0
        %763 = vmatpush2.msra.mxu0 0.0
        %764 = vmatprep.subr.mxu0 0.0
        %765 = vmatpush2.msra.mxu0 0.0
        %766 = vmatprep.subr.mxu0 0.0
        %767 = vmatpush2.msra.mxu0 0.0
        %768 = vmatprep.subr.mxu0 0.0
        %769 = vmatpush2.msra.mxu0 0.0
        %770 = vmatprep.subr.mxu0 0.0
        %771 = vmatpush2.msra.mxu0 0.0
        %772 = vmatprep.subr.mxu0 0.0
        %773 = vmatpush2.msra.mxu0 0.0
        %774 = vmatprep.subr.mxu0 0.0
        %775 = vmatpush2.msra.mxu0 0.0
        %776 = vmatprep.subr.mxu0 0.0
        %777 = vmatpush2.msra.mxu0 0.0
        %778 = vmatprep.mubr.f32.mxu0 0.0
        %779 = vmatmul.mubr.f32.gmra.mxu0 %v415
        %v780 = vpop.f32.mrf.mxu0
        %v781 = vadd.f32 0.0, %v780
        %v782 = vpop.f32.mrf.mxu0
        %783 = vmatprep.mubr.f32.mxu0 0.0
        %784 = vmatmul.mubr.f32.gmra.mxu0 %v418
        %v785 = vpop.f32.mrf.mxu0
        %v786 = vadd.f32 0.0, %v785
        %v787 = vpop.f32.mrf.mxu0
        %788 = vdwg.mxu0
        %789 = vst [vmem:[#allocation3 + $0x30] sm:$0xff] %v781
        %790 = vst [vmem:[#allocation3 + $0x38] sm:$0xff] %v786
        loop: start=0, step=1, limit=2
        $region53: #{sparse_linear_neq_forward.1} parent=35 // loop_pre_header
          _
        $region54: #{sparse_linear_neq_forward.1} parent=35 // loop_header
          %s792 = sphi 0, %s796
          %p793 = scmp.ge.s32.totalorder %s792, 2
        $region55: #{sparse_linear_neq_forward.1} parent=35 // loop_header_branch
          %795 = sbr.rel (%p793) target = $region59
        $region56: #{sparse_linear_neq_forward.1} parent=35 // loop_body
          %s797 = smul.u32 %s792, 8
          %s798 = scalar_lea.vmem [#allocation3], %s797
          %v799 = vld [vmem:[%s798] sm:$0xff]
          %s800 = sadd.s32 %s797, 16
          %s801 = scalar_lea.vmem [#allocation3], %s800
          %v802 = vld [vmem:[%s801] sm:$0xff]
          %s803 = sadd.s32 %s797, 32
          %s804 = scalar_lea.vmem [#allocation3], %s803
          %v805 = vld [vmem:[%s804] sm:$0xff]
          %s806 = sadd.s32 %s797, 48
          %s807 = scalar_lea.vmem [#allocation3], %s806
          %v808 = vld [vmem:[%s807] sm:$0xff]
          %v809 = vld [vmem:[#allocation2] sm:$0x1]
          %v810 = vlaneseq
          %v811 = vshrl.u32 %v810, 7
          %v812 = vsub.s32 0, %v811
          %v813 = vrot.slane %v809, %v812
          %v814 = vmul.f32 %v813, %v799
          %v815 = vld [vmem:[#allocation2 + $0x20] sm:$0x1]
          %v816 = vlaneseq
          %v817 = vshrl.u32 %v816, 7
          %v818 = vsub.s32 0, %v817
          %v819 = vrot.slane %v815, %v818
          %v820 = vmul.f32 %v819, %v799
          %v821 = vld [vmem:[#allocation2 + $0x1] sm:$0x1]
          %v822 = vlaneseq
          %v823 = vshrl.u32 %v822, 7
          %v824 = vsub.s32 0, %v823
          %v825 = vrot.slane %v821, %v824
          %v826 = vmul.f32 %v825, %v802
          %v827 = vadd.f32 %v814, %v826
          %v828 = vld [vmem:[#allocation2 + $0x21] sm:$0x1]
          %v829 = vlaneseq
          %v830 = vshrl.u32 %v829, 7
          %v831 = vsub.s32 0, %v830
          %v832 = vrot.slane %v828, %v831
          %v833 = vmul.f32 %v832, %v802
          %v834 = vadd.f32 %v820, %v833
          %v835 = vld [vmem:[#allocation2 + $0x2] sm:$0x1]
          %v836 = vlaneseq
          %v837 = vshrl.u32 %v836, 7
          %v838 = vsub.s32 0, %v837
          %v839 = vrot.slane %v835, %v838
          %v840 = vmul.f32 %v839, %v805
          %v841 = vadd.f32 %v827, %v840
          %v842 = vld [vmem:[#allocation2 + $0x22] sm:$0x1]
          %v843 = vlaneseq
          %v844 = vshrl.u32 %v843, 7
          %v845 = vsub.s32 0, %v844
          %v846 = vrot.slane %v842, %v845
          %v847 = vmul.f32 %v846, %v805
          %v848 = vadd.f32 %v834, %v847
          %v849 = vld [vmem:[#allocation2 + $0x3] sm:$0x1]
          %v850 = vlaneseq
          %v851 = vshrl.u32 %v850, 7
          %v852 = vsub.s32 0, %v851
          %v853 = vrot.slane %v849, %v852
          %v854 = vmul.f32 %v853, %v808
          %v855 = vadd.f32 %v841, %v854
          %v856 = vld [vmem:[#allocation2 + $0x23] sm:$0x1]
          %v857 = vlaneseq
          %v858 = vshrl.u32 %v857, 7
          %v859 = vsub.s32 0, %v858
          %v860 = vrot.slane %v856, %v859
          %v861 = vmul.f32 %v860, %v808
          %v862 = vadd.f32 %v848, %v861
          %v863 = vld [vmem:[%s268] sm:$0x1]
          %v864 = vlaneseq
          %v865 = vshrl.u32 %v864, 7
          %v866 = vsub.s32 0, %v865
          %v867 = vrot.slane %v863, %v866
          %v868 = vadd.f32 %v855, %v867
          %v869 = vmax.f32 %v868, 0.0
          %v870 = vld [vmem:[#allocation2 + $0x4] sm:$0x1]
          %v871 = vlaneseq
          %v872 = vshrl.u32 %v871, 7
          %v873 = vsub.s32 0, %v872
          %v874 = vrot.slane %v870, %v873
          %v875 = vmul.f32 %v874, %v799
          %v876 = vld [vmem:[#allocation2 + $0x24] sm:$0x1]
          %v877 = vlaneseq
          %v878 = vshrl.u32 %v877, 7
          %v879 = vsub.s32 0, %v878
          %v880 = vrot.slane %v876, %v879
          %v881 = vmul.f32 %v880, %v799
          %v882 = vld [vmem:[#allocation2 + $0x5] sm:$0x1]
          %v883 = vlaneseq
          %v884 = vshrl.u32 %v883, 7
          %v885 = vsub.s32 0, %v884
          %v886 = vrot.slane %v882, %v885
          %v887 = vmul.f32 %v886, %v802
          %v888 = vadd.f32 %v875, %v887
          %v889 = vld [vmem:[#allocation2 + $0x25] sm:$0x1]
          %v890 = vlaneseq
          %v891 = vshrl.u32 %v890, 7
          %v892 = vsub.s32 0, %v891
          %v893 = vrot.slane %v889, %v892
          %v894 = vmul.f32 %v893, %v802
          %v895 = vadd.f32 %v881, %v894
          %v896 = vld [vmem:[#allocation2 + $0x6] sm:$0x1]
          %v897 = vlaneseq
          %v898 = vshrl.u32 %v897, 7
          %v899 = vsub.s32 0, %v898
          %v900 = vrot.slane %v896, %v899
          %v901 = vmul.f32 %v900, %v805
          %v902 = vadd.f32 %v888, %v901
          %v903 = vld [vmem:[#allocation2 + $0x26] sm:$0x1]
          %v904 = vlaneseq
          %v905 = vshrl.u32 %v904, 7
          %v906 = vsub.s32 0, %v905
          %v907 = vrot.slane %v903, %v906
          %v908 = vmul.f32 %v907, %v805
          %v909 = vadd.f32 %v895, %v908
          %v910 = vld [vmem:[#allocation2 + $0x7] sm:$0x1]
          %v911 = vlaneseq
          %v912 = vshrl.u32 %v911, 7
          %v913 = vsub.s32 0, %v912
          %v914 = vrot.slane %v910, %v913
          %v915 = vmul.f32 %v914, %v808
          %v916 = vadd.f32 %v902, %v915
          %v917 = vld [vmem:[#allocation2 + $0x27] sm:$0x1]
          %v918 = vlaneseq
          %v919 = vshrl.u32 %v918, 7
          %v920 = vsub.s32 0, %v919
          %v921 = vrot.slane %v917, %v920
          %v922 = vmul.f32 %v921, %v808
          %v923 = vadd.f32 %v909, %v922
          %v924 = vld [vmem:[%s268 + $0x1] sm:$0x1]
          %v925 = vlaneseq
          %v926 = vshrl.u32 %v925, 7
          %v927 = vsub.s32 0, %v926
          %v928 = vrot.slane %v924, %v927
          %v929 = vadd.f32 %v916, %v928
          %v930 = vmax.f32 %v929, 0.0
          %v931 = vld [vmem:[#allocation2 + $0x8] sm:$0x1]
          %v932 = vlaneseq
          %v933 = vshrl.u32 %v932, 7
          %v934 = vsub.s32 0, %v933
          %v935 = vrot.slane %v931, %v934
          %v936 = vmul.f32 %v935, %v799
          %v937 = vld [vmem:[#allocation2 + $0x28] sm:$0x1]
          %v938 = vlaneseq
          %v939 = vshrl.u32 %v938, 7
          %v940 = vsub.s32 0, %v939
          %v941 = vrot.slane %v937, %v940
          %v942 = vmul.f32 %v941, %v799
          %v943 = vld [vmem:[#allocation2 + $0x9] sm:$0x1]
          %v944 = vlaneseq
          %v945 = vshrl.u32 %v944, 7
          %v946 = vsub.s32 0, %v945
          %v947 = vrot.slane %v943, %v946
          %v948 = vmul.f32 %v947, %v802
          %v949 = vadd.f32 %v936, %v948
          %v950 = vld [vmem:[#allocation2 + $0x29] sm:$0x1]
          %v951 = vlaneseq
          %v952 = vshrl.u32 %v951, 7
          %v953 = vsub.s32 0, %v952
          %v954 = vrot.slane %v950, %v953
          %v955 = vmul.f32 %v954, %v802
          %v956 = vadd.f32 %v942, %v955
          %v957 = vld [vmem:[#allocation2 + $0xa] sm:$0x1]
          %v958 = vlaneseq
          %v959 = vshrl.u32 %v958, 7
          %v960 = vsub.s32 0, %v959
          %v961 = vrot.slane %v957, %v960
          %v962 = vmul.f32 %v961, %v805
          %v963 = vadd.f32 %v949, %v962
          %v964 = vld [vmem:[#allocation2 + $0x2a] sm:$0x1]
          %v965 = vlaneseq
          %v966 = vshrl.u32 %v965, 7
          %v967 = vsub.s32 0, %v966
          %v968 = vrot.slane %v964, %v967
          %v969 = vmul.f32 %v968, %v805
          %v970 = vadd.f32 %v956, %v969
          %v971 = vld [vmem:[#allocation2 + $0xb] sm:$0x1]
          %v972 = vlaneseq
          %v973 = vshrl.u32 %v972, 7
          %v974 = vsub.s32 0, %v973
          %v975 = vrot.slane %v971, %v974
          %v976 = vmul.f32 %v975, %v808
          %v977 = vadd.f32 %v963, %v976
          %v978 = vld [vmem:[#allocation2 + $0x2b] sm:$0x1]
          %v979 = vlaneseq
          %v980 = vshrl.u32 %v979, 7
          %v981 = vsub.s32 0, %v980
          %v982 = vrot.slane %v978, %v981
          %v983 = vmul.f32 %v982, %v808
          %v984 = vadd.f32 %v970, %v983
          %v985 = vld [vmem:[%s268 + $0x2] sm:$0x1]
          %v986 = vlaneseq
          %v987 = vshrl.u32 %v986, 7
          %v988 = vsub.s32 0, %v987
          %v989 = vrot.slane %v985, %v988
          %v990 = vadd.f32 %v977, %v989
          %v991 = vmax.f32 %v990, 0.0
          %v992 = vld [vmem:[#allocation2 + $0xc] sm:$0x1]
          %v993 = vlaneseq
          %v994 = vshrl.u32 %v993, 7
          %v995 = vsub.s32 0, %v994
          %v996 = vrot.slane %v992, %v995
          %v997 = vmul.f32 %v996, %v799
          %v998 = vld [vmem:[#allocation2 + $0x2c] sm:$0x1]
          %v999 = vlaneseq
          %v1000 = vshrl.u32 %v999, 7
          %v1001 = vsub.s32 0, %v1000
          %v1002 = vrot.slane %v998, %v1001
          %v1003 = vmul.f32 %v1002, %v799
          %v1004 = vld [vmem:[#allocation2 + $0xd] sm:$0x1]
          %v1005 = vlaneseq
          %v1006 = vshrl.u32 %v1005, 7
          %v1007 = vsub.s32 0, %v1006
          %v1008 = vrot.slane %v1004, %v1007
          %v1009 = vmul.f32 %v1008, %v802
          %v1010 = vadd.f32 %v997, %v1009
          %v1011 = vld [vmem:[#allocation2 + $0x2d] sm:$0x1]
          %v1012 = vlaneseq
          %v1013 = vshrl.u32 %v1012, 7
          %v1014 = vsub.s32 0, %v1013
          %v1015 = vrot.slane %v1011, %v1014
          %v1016 = vmul.f32 %v1015, %v802
          %v1017 = vadd.f32 %v1003, %v1016
          %v1018 = vld [vmem:[#allocation2 + $0xe] sm:$0x1]
          %v1019 = vlaneseq
          %v1020 = vshrl.u32 %v1019, 7
          %v1021 = vsub.s32 0, %v1020
          %v1022 = vrot.slane %v1018, %v1021
          %v1023 = vmul.f32 %v1022, %v805
          %v1024 = vadd.f32 %v1010, %v1023
          %v1025 = vld [vmem:[#allocation2 + $0x2e] sm:$0x1]
          %v1026 = vlaneseq
          %v1027 = vshrl.u32 %v1026, 7
          %v1028 = vsub.s32 0, %v1027
          %v1029 = vrot.slane %v1025, %v1028
          %v1030 = vmul.f32 %v1029, %v805
          %v1031 = vadd.f32 %v1017, %v1030
          %v1032 = vld [vmem:[#allocation2 + $0xf] sm:$0x1]
          %v1033 = vlaneseq
          %v1034 = vshrl.u32 %v1033, 7
          %v1035 = vsub.s32 0, %v1034
          %v1036 = vrot.slane %v1032, %v1035
          %v1037 = vmul.f32 %v1036, %v808
          %v1038 = vadd.f32 %v1024, %v1037
          %v1039 = vld [vmem:[#allocation2 + $0x2f] sm:$0x1]
          %v1040 = vlaneseq
          %v1041 = vshrl.u32 %v1040, 7
          %v1042 = vsub.s32 0, %v1041
          %v1043 = vrot.slane %v1039, %v1042
          %v1044 = vmul.f32 %v1043, %v808
          %v1045 = vadd.f32 %v1031, %v1044
          %v1046 = vld [vmem:[%s268 + $0x3] sm:$0x1]
          %v1047 = vlaneseq
          %v1048 = vshrl.u32 %v1047, 7
          %v1049 = vsub.s32 0, %v1048
          %v1050 = vrot.slane %v1046, %v1049
          %v1051 = vadd.f32 %v1038, %v1050
          %v1052 = vmax.f32 %v1051, 0.0
          %v1053 = vld [vmem:[#allocation2 + $0x10] sm:$0x1]
          %v1054 = vlaneseq
          %v1055 = vshrl.u32 %v1054, 7
          %v1056 = vsub.s32 0, %v1055
          %v1057 = vrot.slane %v1053, %v1056
          %v1058 = vmul.f32 %v1057, %v799
          %v1059 = vld [vmem:[#allocation2 + $0x30] sm:$0x1]
          %v1060 = vlaneseq
          %v1061 = vshrl.u32 %v1060, 7
          %v1062 = vsub.s32 0, %v1061
          %v1063 = vrot.slane %v1059, %v1062
          %v1064 = vmul.f32 %v1063, %v799
          %v1065 = vld [vmem:[#allocation2 + $0x11] sm:$0x1]
          %v1066 = vlaneseq
          %v1067 = vshrl.u32 %v1066, 7
          %v1068 = vsub.s32 0, %v1067
          %v1069 = vrot.slane %v1065, %v1068
          %v1070 = vmul.f32 %v1069, %v802
          %v1071 = vadd.f32 %v1058, %v1070
          %v1072 = vld [vmem:[#allocation2 + $0x31] sm:$0x1]
          %v1073 = vlaneseq
          %v1074 = vshrl.u32 %v1073, 7
          %v1075 = vsub.s32 0, %v1074
          %v1076 = vrot.slane %v1072, %v1075
          %v1077 = vmul.f32 %v1076, %v802
          %v1078 = vadd.f32 %v1064, %v1077
          %v1079 = vld [vmem:[#allocation2 + $0x12] sm:$0x1]
          %v1080 = vlaneseq
          %v1081 = vshrl.u32 %v1080, 7
          %v1082 = vsub.s32 0, %v1081
          %v1083 = vrot.slane %v1079, %v1082
          %v1084 = vmul.f32 %v1083, %v805
          %v1085 = vadd.f32 %v1071, %v1084
          %v1086 = vld [vmem:[#allocation2 + $0x32] sm:$0x1]
          %v1087 = vlaneseq
          %v1088 = vshrl.u32 %v1087, 7
          %v1089 = vsub.s32 0, %v1088
          %v1090 = vrot.slane %v1086, %v1089
          %v1091 = vmul.f32 %v1090, %v805
          %v1092 = vadd.f32 %v1078, %v1091
          %v1093 = vld [vmem:[#allocation2 + $0x13] sm:$0x1]
          %v1094 = vlaneseq
          %v1095 = vshrl.u32 %v1094, 7
          %v1096 = vsub.s32 0, %v1095
          %v1097 = vrot.slane %v1093, %v1096
          %v1098 = vmul.f32 %v1097, %v808
          %v1099 = vadd.f32 %v1085, %v1098
          %v1100 = vld [vmem:[#allocation2 + $0x33] sm:$0x1]
          %v1101 = vlaneseq
          %v1102 = vshrl.u32 %v1101, 7
          %v1103 = vsub.s32 0, %v1102
          %v1104 = vrot.slane %v1100, %v1103
          %v1105 = vmul.f32 %v1104, %v808
          %v1106 = vadd.f32 %v1092, %v1105
          %v1107 = vld [vmem:[%s268 + $0x4] sm:$0x1]
          %v1108 = vlaneseq
          %v1109 = vshrl.u32 %v1108, 7
          %v1110 = vsub.s32 0, %v1109
          %v1111 = vrot.slane %v1107, %v1110
          %v1112 = vadd.f32 %v1099, %v1111
          %v1113 = vmax.f32 %v1112, 0.0
          %v1114 = vld [vmem:[#allocation2 + $0x14] sm:$0x1]
          %v1115 = vlaneseq
          %v1116 = vshrl.u32 %v1115, 7
          %v1117 = vsub.s32 0, %v1116
          %v1118 = vrot.slane %v1114, %v1117
          %v1119 = vmul.f32 %v1118, %v799
          %v1120 = vld [vmem:[#allocation2 + $0x34] sm:$0x1]
          %v1121 = vlaneseq
          %v1122 = vshrl.u32 %v1121, 7
          %v1123 = vsub.s32 0, %v1122
          %v1124 = vrot.slane %v1120, %v1123
          %v1125 = vmul.f32 %v1124, %v799
          %v1126 = vld [vmem:[#allocation2 + $0x15] sm:$0x1]
          %v1127 = vlaneseq
          %v1128 = vshrl.u32 %v1127, 7
          %v1129 = vsub.s32 0, %v1128
          %v1130 = vrot.slane %v1126, %v1129
          %v1131 = vmul.f32 %v1130, %v802
          %v1132 = vadd.f32 %v1119, %v1131
          %v1133 = vld [vmem:[#allocation2 + $0x35] sm:$0x1]
          %v1134 = vlaneseq
          %v1135 = vshrl.u32 %v1134, 7
          %v1136 = vsub.s32 0, %v1135
          %v1137 = vrot.slane %v1133, %v1136
          %v1138 = vmul.f32 %v1137, %v802
          %v1139 = vadd.f32 %v1125, %v1138
          %v1140 = vld [vmem:[#allocation2 + $0x16] sm:$0x1]
          %v1141 = vlaneseq
          %v1142 = vshrl.u32 %v1141, 7
          %v1143 = vsub.s32 0, %v1142
          %v1144 = vrot.slane %v1140, %v1143
          %v1145 = vmul.f32 %v1144, %v805
          %v1146 = vadd.f32 %v1132, %v1145
          %v1147 = vld [vmem:[#allocation2 + $0x36] sm:$0x1]
          %v1148 = vlaneseq
          %v1149 = vshrl.u32 %v1148, 7
          %v1150 = vsub.s32 0, %v1149
          %v1151 = vrot.slane %v1147, %v1150
          %v1152 = vmul.f32 %v1151, %v805
          %v1153 = vadd.f32 %v1139, %v1152
          %v1154 = vld [vmem:[#allocation2 + $0x17] sm:$0x1]
          %v1155 = vlaneseq
          %v1156 = vshrl.u32 %v1155, 7
          %v1157 = vsub.s32 0, %v1156
          %v1158 = vrot.slane %v1154, %v1157
          %v1159 = vmul.f32 %v1158, %v808
          %v1160 = vadd.f32 %v1146, %v1159
          %v1161 = vld [vmem:[#allocation2 + $0x37] sm:$0x1]
          %v1162 = vlaneseq
          %v1163 = vshrl.u32 %v1162, 7
          %v1164 = vsub.s32 0, %v1163
          %v1165 = vrot.slane %v1161, %v1164
          %v1166 = vmul.f32 %v1165, %v808
          %v1167 = vadd.f32 %v1153, %v1166
          %v1168 = vld [vmem:[%s268 + $0x5] sm:$0x1]
          %v1169 = vlaneseq
          %v1170 = vshrl.u32 %v1169, 7
          %v1171 = vsub.s32 0, %v1170
          %v1172 = vrot.slane %v1168, %v1171
          %v1173 = vadd.f32 %v1160, %v1172
          %v1174 = vmax.f32 %v1173, 0.0
          %v1175 = vld [vmem:[#allocation2 + $0x18] sm:$0x1]
          %v1176 = vlaneseq
          %v1177 = vshrl.u32 %v1176, 7
          %v1178 = vsub.s32 0, %v1177
          %v1179 = vrot.slane %v1175, %v1178
          %v1180 = vmul.f32 %v1179, %v799
          %v1181 = vld [vmem:[#allocation2 + $0x38] sm:$0x1]
          %v1182 = vlaneseq
          %v1183 = vshrl.u32 %v1182, 7
          %v1184 = vsub.s32 0, %v1183
          %v1185 = vrot.slane %v1181, %v1184
          %v1186 = vmul.f32 %v1185, %v799
          %v1187 = vld [vmem:[#allocation2 + $0x19] sm:$0x1]
          %v1188 = vlaneseq
          %v1189 = vshrl.u32 %v1188, 7
          %v1190 = vsub.s32 0, %v1189
          %v1191 = vrot.slane %v1187, %v1190
          %v1192 = vmul.f32 %v1191, %v802
          %v1193 = vadd.f32 %v1180, %v1192
          %v1194 = vld [vmem:[#allocation2 + $0x39] sm:$0x1]
          %v1195 = vlaneseq
          %v1196 = vshrl.u32 %v1195, 7
          %v1197 = vsub.s32 0, %v1196
          %v1198 = vrot.slane %v1194, %v1197
          %v1199 = vmul.f32 %v1198, %v802
          %v1200 = vadd.f32 %v1186, %v1199
          %v1201 = vld [vmem:[#allocation2 + $0x1a] sm:$0x1]
          %v1202 = vlaneseq
          %v1203 = vshrl.u32 %v1202, 7
          %v1204 = vsub.s32 0, %v1203
          %v1205 = vrot.slane %v1201, %v1204
          %v1206 = vmul.f32 %v1205, %v805
          %v1207 = vadd.f32 %v1193, %v1206
          %v1208 = vld [vmem:[#allocation2 + $0x3a] sm:$0x1]
          %v1209 = vlaneseq
          %v1210 = vshrl.u32 %v1209, 7
          %v1211 = vsub.s32 0, %v1210
          %v1212 = vrot.slane %v1208, %v1211
          %v1213 = vmul.f32 %v1212, %v805
          %v1214 = vadd.f32 %v1200, %v1213
          %v1215 = vld [vmem:[#allocation2 + $0x1b] sm:$0x1]
          %v1216 = vlaneseq
          %v1217 = vshrl.u32 %v1216, 7
          %v1218 = vsub.s32 0, %v1217
          %v1219 = vrot.slane %v1215, %v1218
          %v1220 = vmul.f32 %v1219, %v808
          %v1221 = vadd.f32 %v1207, %v1220
          %v1222 = vld [vmem:[#allocation2 + $0x3b] sm:$0x1]
          %v1223 = vlaneseq
          %v1224 = vshrl.u32 %v1223, 7
          %v1225 = vsub.s32 0, %v1224
          %v1226 = vrot.slane %v1222, %v1225
          %v1227 = vmul.f32 %v1226, %v808
          %v1228 = vadd.f32 %v1214, %v1227
          %v1229 = vld [vmem:[%s268 + $0x6] sm:$0x1]
          %v1230 = vlaneseq
          %v1231 = vshrl.u32 %v1230, 7
          %v1232 = vsub.s32 0, %v1231
          %v1233 = vrot.slane %v1229, %v1232
          %v1234 = vadd.f32 %v1221, %v1233
          %v1235 = vmax.f32 %v1234, 0.0
          %v1236 = vld [vmem:[#allocation2 + $0x1c] sm:$0x1]
          %v1237 = vlaneseq
          %v1238 = vshrl.u32 %v1237, 7
          %v1239 = vsub.s32 0, %v1238
          %v1240 = vrot.slane %v1236, %v1239
          %v1241 = vmul.f32 %v1240, %v799
          %v1242 = vld [vmem:[#allocation2 + $0x3c] sm:$0x1]
          %v1243 = vlaneseq
          %v1244 = vshrl.u32 %v1243, 7
          %v1245 = vsub.s32 0, %v1244
          %v1246 = vrot.slane %v1242, %v1245
          %v1247 = vmul.f32 %v1246, %v799
          %v1248 = vld [vmem:[#allocation2 + $0x1d] sm:$0x1]
          %v1249 = vlaneseq
          %v1250 = vshrl.u32 %v1249, 7
          %v1251 = vsub.s32 0, %v1250
          %v1252 = vrot.slane %v1248, %v1251
          %v1253 = vmul.f32 %v1252, %v802
          %v1254 = vadd.f32 %v1241, %v1253
          %v1255 = vld [vmem:[#allocation2 + $0x3d] sm:$0x1]
          %v1256 = vlaneseq
          %v1257 = vshrl.u32 %v1256, 7
          %v1258 = vsub.s32 0, %v1257
          %v1259 = vrot.slane %v1255, %v1258
          %v1260 = vmul.f32 %v1259, %v802
          %v1261 = vadd.f32 %v1247, %v1260
          %v1262 = vld [vmem:[#allocation2 + $0x1e] sm:$0x1]
          %v1263 = vlaneseq
          %v1264 = vshrl.u32 %v1263, 7
          %v1265 = vsub.s32 0, %v1264
          %v1266 = vrot.slane %v1262, %v1265
          %v1267 = vmul.f32 %v1266, %v805
          %v1268 = vadd.f32 %v1254, %v1267
          %v1269 = vld [vmem:[#allocation2 + $0x3e] sm:$0x1]
          %v1270 = vlaneseq
          %v1271 = vshrl.u32 %v1270, 7
          %v1272 = vsub.s32 0, %v1271
          %v1273 = vrot.slane %v1269, %v1272
          %v1274 = vmul.f32 %v1273, %v805
          %v1275 = vadd.f32 %v1261, %v1274
          %v1276 = vld [vmem:[#allocation2 + $0x1f] sm:$0x1]
          %v1277 = vlaneseq
          %v1278 = vshrl.u32 %v1277, 7
          %v1279 = vsub.s32 0, %v1278
          %v1280 = vrot.slane %v1276, %v1279
          %v1281 = vmul.f32 %v1280, %v808
          %v1282 = vadd.f32 %v1268, %v1281
          %v1283 = vld [vmem:[#allocation2 + $0x3f] sm:$0x1]
          %v1284 = vlaneseq
          %v1285 = vshrl.u32 %v1284, 7
          %v1286 = vsub.s32 0, %v1285
          %v1287 = vrot.slane %v1283, %v1286
          %v1288 = vmul.f32 %v1287, %v808
          %v1289 = vadd.f32 %v1275, %v1288
          %v1290 = vld [vmem:[%s268 + $0x7] sm:$0x1]
          %v1291 = vlaneseq
          %v1292 = vshrl.u32 %v1291, 7
          %v1293 = vsub.s32 0, %v1292
          %v1294 = vrot.slane %v1290, %v1293
          %v1295 = vadd.f32 %v1282, %v1294
          %v1296 = vmax.f32 %v1295, 0.0
          %v1297 = vld [vmem:[#allocation2 + $0x40] sm:$0x1]
          %v1298 = vlaneseq
          %v1299 = vshrl.u32 %v1298, 7
          %v1300 = vsub.s32 0, %v1299
          %v1301 = vrot.slane %v1297, %v1300
          %v1302 = vmul.f32 %v1301, %v869
          %v1303 = vld [vmem:[#allocation2 + $0x41] sm:$0x1]
          %v1304 = vlaneseq
          %v1305 = vshrl.u32 %v1304, 7
          %v1306 = vsub.s32 0, %v1305
          %v1307 = vrot.slane %v1303, %v1306
          %v1308 = vmul.f32 %v1307, %v930
          %v1309 = vadd.f32 %v1302, %v1308
          %v1310 = vld [vmem:[#allocation2 + $0x42] sm:$0x1]
          %v1311 = vlaneseq
          %v1312 = vshrl.u32 %v1311, 7
          %v1313 = vsub.s32 0, %v1312
          %v1314 = vrot.slane %v1310, %v1313
          %v1315 = vmul.f32 %v1314, %v991
          %v1316 = vadd.f32 %v1309, %v1315
          %v1317 = vld [vmem:[#allocation2 + $0x43] sm:$0x1]
          %v1318 = vlaneseq
          %v1319 = vshrl.u32 %v1318, 7
          %v1320 = vsub.s32 0, %v1319
          %v1321 = vrot.slane %v1317, %v1320
          %v1322 = vmul.f32 %v1321, %v1052
          %v1323 = vadd.f32 %v1316, %v1322
          %v1324 = vld [vmem:[#allocation2 + $0x44] sm:$0x1]
          %v1325 = vlaneseq
          %v1326 = vshrl.u32 %v1325, 7
          %v1327 = vsub.s32 0, %v1326
          %v1328 = vrot.slane %v1324, %v1327
          %v1329 = vmul.f32 %v1328, %v1113
          %v1330 = vadd.f32 %v1323, %v1329
          %v1331 = vld [vmem:[#allocation2 + $0x45] sm:$0x1]
          %v1332 = vlaneseq
          %v1333 = vshrl.u32 %v1332, 7
          %v1334 = vsub.s32 0, %v1333
          %v1335 = vrot.slane %v1331, %v1334
          %v1336 = vmul.f32 %v1335, %v1174
          %v1337 = vadd.f32 %v1330, %v1336
          %v1338 = vld [vmem:[#allocation2 + $0x46] sm:$0x1]
          %v1339 = vlaneseq
          %v1340 = vshrl.u32 %v1339, 7
          %v1341 = vsub.s32 0, %v1340
          %v1342 = vrot.slane %v1338, %v1341
          %v1343 = vmul.f32 %v1342, %v1235
          %v1344 = vadd.f32 %v1337, %v1343
          %v1345 = vld [vmem:[#allocation2 + $0x47] sm:$0x1]
          %v1346 = vlaneseq
          %v1347 = vshrl.u32 %v1346, 7
          %v1348 = vsub.s32 0, %v1347
          %v1349 = vrot.slane %v1345, %v1348
          %v1350 = vmul.f32 %v1349, %v1296
          %v1351 = vadd.f32 %v1344, %v1350
          %v1352 = vld [vmem:[%s268 + $0x8] sm:$0x1]
          %v1353 = vlaneseq
          %v1354 = vshrl.u32 %v1353, 7
          %v1355 = vsub.s32 0, %v1354
          %v1356 = vrot.slane %v1352, %v1355
          %v1357 = vadd.f32 %v1351, %v1356
          %v1358 = vadd.f32 %v1357, %v862
          %v1359 = vmax.f32 %v1358, 0.0
          %v1360 = vld [vmem:[#allocation2 + $0x48] sm:$0x1]
          %v1361 = vlaneseq
          %v1362 = vshrl.u32 %v1361, 7
          %v1363 = vsub.s32 0, %v1362
          %v1364 = vrot.slane %v1360, %v1363
          %v1365 = vmul.f32 %v1364, %v869
          %v1366 = vld [vmem:[#allocation2 + $0x49] sm:$0x1]
          %v1367 = vlaneseq
          %v1368 = vshrl.u32 %v1367, 7
          %v1369 = vsub.s32 0, %v1368
          %v1370 = vrot.slane %v1366, %v1369
          %v1371 = vmul.f32 %v1370, %v930
          %v1372 = vadd.f32 %v1365, %v1371
          %v1373 = vld [vmem:[#allocation2 + $0x4a] sm:$0x1]
          %v1374 = vlaneseq
          %v1375 = vshrl.u32 %v1374, 7
          %v1376 = vsub.s32 0, %v1375
          %v1377 = vrot.slane %v1373, %v1376
          %v1378 = vmul.f32 %v1377, %v991
          %v1379 = vadd.f32 %v1372, %v1378
          %v1380 = vld [vmem:[#allocation2 + $0x4b] sm:$0x1]
          %v1381 = vlaneseq
          %v1382 = vshrl.u32 %v1381, 7
          %v1383 = vsub.s32 0, %v1382
          %v1384 = vrot.slane %v1380, %v1383
          %v1385 = vmul.f32 %v1384, %v1052
          %v1386 = vadd.f32 %v1379, %v1385
          %v1387 = vld [vmem:[#allocation2 + $0x4c] sm:$0x1]
          %v1388 = vlaneseq
          %v1389 = vshrl.u32 %v1388, 7
          %v1390 = vsub.s32 0, %v1389
          %v1391 = vrot.slane %v1387, %v1390
          %v1392 = vmul.f32 %v1391, %v1113
          %v1393 = vadd.f32 %v1386, %v1392
          %v1394 = vld [vmem:[#allocation2 + $0x4d] sm:$0x1]
          %v1395 = vlaneseq
          %v1396 = vshrl.u32 %v1395, 7
          %v1397 = vsub.s32 0, %v1396
          %v1398 = vrot.slane %v1394, %v1397
          %v1399 = vmul.f32 %v1398, %v1174
          %v1400 = vadd.f32 %v1393, %v1399
          %v1401 = vld [vmem:[#allocation2 + $0x4e] sm:$0x1]
          %v1402 = vlaneseq
          %v1403 = vshrl.u32 %v1402, 7
          %v1404 = vsub.s32 0, %v1403
          %v1405 = vrot.slane %v1401, %v1404
          %v1406 = vmul.f32 %v1405, %v1235
          %v1407 = vadd.f32 %v1400, %v1406
          %v1408 = vld [vmem:[#allocation2 + $0x4f] sm:$0x1]
          %v1409 = vlaneseq
          %v1410 = vshrl.u32 %v1409, 7
          %v1411 = vsub.s32 0, %v1410
          %v1412 = vrot.slane %v1408, %v1411
          %v1413 = vmul.f32 %v1412, %v1296
          %v1414 = vadd.f32 %v1407, %v1413
          %v1415 = vld [vmem:[%s268 + $0x9] sm:$0x1]
          %v1416 = vlaneseq
          %v1417 = vshrl.u32 %v1416, 7
          %v1418 = vsub.s32 0, %v1417
          %v1419 = vrot.slane %v1415, %v1418
          %v1420 = vadd.f32 %v1414, %v1419
          %v1421 = vadd.f32 %v1420, %v923
          %v1422 = vmax.f32 %v1421, 0.0
          %v1423 = vld [vmem:[#allocation2 + $0x50] sm:$0x1]
          %v1424 = vlaneseq
          %v1425 = vshrl.u32 %v1424, 7
          %v1426 = vsub.s32 0, %v1425
          %v1427 = vrot.slane %v1423, %v1426
          %v1428 = vmul.f32 %v1427, %v869
          %v1429 = vld [vmem:[#allocation2 + $0x51] sm:$0x1]
          %v1430 = vlaneseq
          %v1431 = vshrl.u32 %v1430, 7
          %v1432 = vsub.s32 0, %v1431
          %v1433 = vrot.slane %v1429, %v1432
          %v1434 = vmul.f32 %v1433, %v930
          %v1435 = vadd.f32 %v1428, %v1434
          %v1436 = vld [vmem:[#allocation2 + $0x52] sm:$0x1]
          %v1437 = vlaneseq
          %v1438 = vshrl.u32 %v1437, 7
          %v1439 = vsub.s32 0, %v1438
          %v1440 = vrot.slane %v1436, %v1439
          %v1441 = vmul.f32 %v1440, %v991
          %v1442 = vadd.f32 %v1435, %v1441
          %v1443 = vld [vmem:[#allocation2 + $0x53] sm:$0x1]
          %v1444 = vlaneseq
          %v1445 = vshrl.u32 %v1444, 7
          %v1446 = vsub.s32 0, %v1445
          %v1447 = vrot.slane %v1443, %v1446
          %v1448 = vmul.f32 %v1447, %v1052
          %v1449 = vadd.f32 %v1442, %v1448
          %v1450 = vld [vmem:[#allocation2 + $0x54] sm:$0x1]
          %v1451 = vlaneseq
          %v1452 = vshrl.u32 %v1451, 7
          %v1453 = vsub.s32 0, %v1452
          %v1454 = vrot.slane %v1450, %v1453
          %v1455 = vmul.f32 %v1454, %v1113
          %v1456 = vadd.f32 %v1449, %v1455
          %v1457 = vld [vmem:[#allocation2 + $0x55] sm:$0x1]
          %v1458 = vlaneseq
          %v1459 = vshrl.u32 %v1458, 7
          %v1460 = vsub.s32 0, %v1459
          %v1461 = vrot.slane %v1457, %v1460
          %v1462 = vmul.f32 %v1461, %v1174
          %v1463 = vadd.f32 %v1456, %v1462
          %v1464 = vld [vmem:[#allocation2 + $0x56] sm:$0x1]
          %v1465 = vlaneseq
          %v1466 = vshrl.u32 %v1465, 7
          %v1467 = vsub.s32 0, %v1466
          %v1468 = vrot.slane %v1464, %v1467
          %v1469 = vmul.f32 %v1468, %v1235
          %v1470 = vadd.f32 %v1463, %v1469
          %v1471 = vld [vmem:[#allocation2 + $0x57] sm:$0x1]
          %v1472 = vlaneseq
          %v1473 = vshrl.u32 %v1472, 7
          %v1474 = vsub.s32 0, %v1473
          %v1475 = vrot.slane %v1471, %v1474
          %v1476 = vmul.f32 %v1475, %v1296
          %v1477 = vadd.f32 %v1470, %v1476
          %v1478 = vld [vmem:[%s268 + $0xa] sm:$0x1]
          %v1479 = vlaneseq
          %v1480 = vshrl.u32 %v1479, 7
          %v1481 = vsub.s32 0, %v1480
          %v1482 = vrot.slane %v1478, %v1481
          %v1483 = vadd.f32 %v1477, %v1482
          %v1484 = vadd.f32 %v1483, %v984
          %v1485 = vmax.f32 %v1484, 0.0
          %v1486 = vld [vmem:[#allocation2 + $0x58] sm:$0x1]
          %v1487 = vlaneseq
          %v1488 = vshrl.u32 %v1487, 7
          %v1489 = vsub.s32 0, %v1488
          %v1490 = vrot.slane %v1486, %v1489
          %v1491 = vmul.f32 %v1490, %v869
          %v1492 = vld [vmem:[#allocation2 + $0x59] sm:$0x1]
          %v1493 = vlaneseq
          %v1494 = vshrl.u32 %v1493, 7
          %v1495 = vsub.s32 0, %v1494
          %v1496 = vrot.slane %v1492, %v1495
          %v1497 = vmul.f32 %v1496, %v930
          %v1498 = vadd.f32 %v1491, %v1497
          %v1499 = vld [vmem:[#allocation2 + $0x5a] sm:$0x1]
          %v1500 = vlaneseq
          %v1501 = vshrl.u32 %v1500, 7
          %v1502 = vsub.s32 0, %v1501
          %v1503 = vrot.slane %v1499, %v1502
          %v1504 = vmul.f32 %v1503, %v991
          %v1505 = vadd.f32 %v1498, %v1504
          %v1506 = vld [vmem:[#allocation2 + $0x5b] sm:$0x1]
          %v1507 = vlaneseq
          %v1508 = vshrl.u32 %v1507, 7
          %v1509 = vsub.s32 0, %v1508
          %v1510 = vrot.slane %v1506, %v1509
          %v1511 = vmul.f32 %v1510, %v1052
          %v1512 = vadd.f32 %v1505, %v1511
          %v1513 = vld [vmem:[#allocation2 + $0x5c] sm:$0x1]
          %v1514 = vlaneseq
          %v1515 = vshrl.u32 %v1514, 7
          %v1516 = vsub.s32 0, %v1515
          %v1517 = vrot.slane %v1513, %v1516
          %v1518 = vmul.f32 %v1517, %v1113
          %v1519 = vadd.f32 %v1512, %v1518
          %v1520 = vld [vmem:[#allocation2 + $0x5d] sm:$0x1]
          %v1521 = vlaneseq
          %v1522 = vshrl.u32 %v1521, 7
          %v1523 = vsub.s32 0, %v1522
          %v1524 = vrot.slane %v1520, %v1523
          %v1525 = vmul.f32 %v1524, %v1174
          %v1526 = vadd.f32 %v1519, %v1525
          %v1527 = vld [vmem:[#allocation2 + $0x5e] sm:$0x1]
          %v1528 = vlaneseq
          %v1529 = vshrl.u32 %v1528, 7
          %v1530 = vsub.s32 0, %v1529
          %v1531 = vrot.slane %v1527, %v1530
          %v1532 = vmul.f32 %v1531, %v1235
          %v1533 = vadd.f32 %v1526, %v1532
          %v1534 = vld [vmem:[#allocation2 + $0x5f] sm:$0x1]
          %v1535 = vlaneseq
          %v1536 = vshrl.u32 %v1535, 7
          %v1537 = vsub.s32 0, %v1536
          %v1538 = vrot.slane %v1534, %v1537
          %v1539 = vmul.f32 %v1538, %v1296
          %v1540 = vadd.f32 %v1533, %v1539
          %v1541 = vld [vmem:[%s268 + $0xb] sm:$0x1]
          %v1542 = vlaneseq
          %v1543 = vshrl.u32 %v1542, 7
          %v1544 = vsub.s32 0, %v1543
          %v1545 = vrot.slane %v1541, %v1544
          %v1546 = vadd.f32 %v1540, %v1545
          %v1547 = vadd.f32 %v1546, %v1045
          %v1548 = vmax.f32 %v1547, 0.0
          %v1549 = vld [vmem:[#allocation2 + $0x60] sm:$0x1]
          %v1550 = vlaneseq
          %v1551 = vshrl.u32 %v1550, 7
          %v1552 = vsub.s32 0, %v1551
          %v1553 = vrot.slane %v1549, %v1552
          %v1554 = vmul.f32 %v1553, %v869
          %v1555 = vld [vmem:[#allocation2 + $0x61] sm:$0x1]
          %v1556 = vlaneseq
          %v1557 = vshrl.u32 %v1556, 7
          %v1558 = vsub.s32 0, %v1557
          %v1559 = vrot.slane %v1555, %v1558
          %v1560 = vmul.f32 %v1559, %v930
          %v1561 = vadd.f32 %v1554, %v1560
          %v1562 = vld [vmem:[#allocation2 + $0x62] sm:$0x1]
          %v1563 = vlaneseq
          %v1564 = vshrl.u32 %v1563, 7
          %v1565 = vsub.s32 0, %v1564
          %v1566 = vrot.slane %v1562, %v1565
          %v1567 = vmul.f32 %v1566, %v991
          %v1568 = vadd.f32 %v1561, %v1567
          %v1569 = vld [vmem:[#allocation2 + $0x63] sm:$0x1]
          %v1570 = vlaneseq
          %v1571 = vshrl.u32 %v1570, 7
          %v1572 = vsub.s32 0, %v1571
          %v1573 = vrot.slane %v1569, %v1572
          %v1574 = vmul.f32 %v1573, %v1052
          %v1575 = vadd.f32 %v1568, %v1574
          %v1576 = vld [vmem:[#allocation2 + $0x64] sm:$0x1]
          %v1577 = vlaneseq
          %v1578 = vshrl.u32 %v1577, 7
          %v1579 = vsub.s32 0, %v1578
          %v1580 = vrot.slane %v1576, %v1579
          %v1581 = vmul.f32 %v1580, %v1113
          %v1582 = vadd.f32 %v1575, %v1581
          %v1583 = vld [vmem:[#allocation2 + $0x65] sm:$0x1]
          %v1584 = vlaneseq
          %v1585 = vshrl.u32 %v1584, 7
          %v1586 = vsub.s32 0, %v1585
          %v1587 = vrot.slane %v1583, %v1586
          %v1588 = vmul.f32 %v1587, %v1174
          %v1589 = vadd.f32 %v1582, %v1588
          %v1590 = vld [vmem:[#allocation2 + $0x66] sm:$0x1]
          %v1591 = vlaneseq
          %v1592 = vshrl.u32 %v1591, 7
          %v1593 = vsub.s32 0, %v1592
          %v1594 = vrot.slane %v1590, %v1593
          %v1595 = vmul.f32 %v1594, %v1235
          %v1596 = vadd.f32 %v1589, %v1595
          %v1597 = vld [vmem:[#allocation2 + $0x67] sm:$0x1]
          %v1598 = vlaneseq
          %v1599 = vshrl.u32 %v1598, 7
          %v1600 = vsub.s32 0, %v1599
          %v1601 = vrot.slane %v1597, %v1600
          %v1602 = vmul.f32 %v1601, %v1296
          %v1603 = vadd.f32 %v1596, %v1602
          %v1604 = vld [vmem:[%s268 + $0xc] sm:$0x1]
          %v1605 = vlaneseq
          %v1606 = vshrl.u32 %v1605, 7
          %v1607 = vsub.s32 0, %v1606
          %v1608 = vrot.slane %v1604, %v1607
          %v1609 = vadd.f32 %v1603, %v1608
          %v1610 = vadd.f32 %v1609, %v1106
          %v1611 = vmax.f32 %v1610, 0.0
          %v1612 = vld [vmem:[#allocation2 + $0x68] sm:$0x1]
          %v1613 = vlaneseq
          %v1614 = vshrl.u32 %v1613, 7
          %v1615 = vsub.s32 0, %v1614
          %v1616 = vrot.slane %v1612, %v1615
          %v1617 = vmul.f32 %v1616, %v869
          %v1618 = vld [vmem:[#allocation2 + $0x69] sm:$0x1]
          %v1619 = vlaneseq
          %v1620 = vshrl.u32 %v1619, 7
          %v1621 = vsub.s32 0, %v1620
          %v1622 = vrot.slane %v1618, %v1621
          %v1623 = vmul.f32 %v1622, %v930
          %v1624 = vadd.f32 %v1617, %v1623
          %v1625 = vld [vmem:[#allocation2 + $0x6a] sm:$0x1]
          %v1626 = vlaneseq
          %v1627 = vshrl.u32 %v1626, 7
          %v1628 = vsub.s32 0, %v1627
          %v1629 = vrot.slane %v1625, %v1628
          %v1630 = vmul.f32 %v1629, %v991
          %v1631 = vadd.f32 %v1624, %v1630
          %v1632 = vld [vmem:[#allocation2 + $0x6b] sm:$0x1]
          %v1633 = vlaneseq
          %v1634 = vshrl.u32 %v1633, 7
          %v1635 = vsub.s32 0, %v1634
          %v1636 = vrot.slane %v1632, %v1635
          %v1637 = vmul.f32 %v1636, %v1052
          %v1638 = vadd.f32 %v1631, %v1637
          %v1639 = vld [vmem:[#allocation2 + $0x6c] sm:$0x1]
          %v1640 = vlaneseq
          %v1641 = vshrl.u32 %v1640, 7
          %v1642 = vsub.s32 0, %v1641
          %v1643 = vrot.slane %v1639, %v1642
          %v1644 = vmul.f32 %v1643, %v1113
          %v1645 = vadd.f32 %v1638, %v1644
          %v1646 = vld [vmem:[#allocation2 + $0x6d] sm:$0x1]
          %v1647 = vlaneseq
          %v1648 = vshrl.u32 %v1647, 7
          %v1649 = vsub.s32 0, %v1648
          %v1650 = vrot.slane %v1646, %v1649
          %v1651 = vmul.f32 %v1650, %v1174
          %v1652 = vadd.f32 %v1645, %v1651
          %v1653 = vld [vmem:[#allocation2 + $0x6e] sm:$0x1]
          %v1654 = vlaneseq
          %v1655 = vshrl.u32 %v1654, 7
          %v1656 = vsub.s32 0, %v1655
          %v1657 = vrot.slane %v1653, %v1656
          %v1658 = vmul.f32 %v1657, %v1235
          %v1659 = vadd.f32 %v1652, %v1658
          %v1660 = vld [vmem:[#allocation2 + $0x6f] sm:$0x1]
          %v1661 = vlaneseq
          %v1662 = vshrl.u32 %v1661, 7
          %v1663 = vsub.s32 0, %v1662
          %v1664 = vrot.slane %v1660, %v1663
          %v1665 = vmul.f32 %v1664, %v1296
          %v1666 = vadd.f32 %v1659, %v1665
          %v1667 = vld [vmem:[%s268 + $0xd] sm:$0x1]
          %v1668 = vlaneseq
          %v1669 = vshrl.u32 %v1668, 7
          %v1670 = vsub.s32 0, %v1669
          %v1671 = vrot.slane %v1667, %v1670
          %v1672 = vadd.f32 %v1666, %v1671
          %v1673 = vadd.f32 %v1672, %v1167
          %v1674 = vmax.f32 %v1673, 0.0
          %v1675 = vld [vmem:[#allocation2 + $0x70] sm:$0x1]
          %v1676 = vlaneseq
          %v1677 = vshrl.u32 %v1676, 7
          %v1678 = vsub.s32 0, %v1677
          %v1679 = vrot.slane %v1675, %v1678
          %v1680 = vmul.f32 %v1679, %v869
          %v1681 = vld [vmem:[#allocation2 + $0x71] sm:$0x1]
          %v1682 = vlaneseq
          %v1683 = vshrl.u32 %v1682, 7
          %v1684 = vsub.s32 0, %v1683
          %v1685 = vrot.slane %v1681, %v1684
          %v1686 = vmul.f32 %v1685, %v930
          %v1687 = vadd.f32 %v1680, %v1686
          %v1688 = vld [vmem:[#allocation2 + $0x72] sm:$0x1]
          %v1689 = vlaneseq
          %v1690 = vshrl.u32 %v1689, 7
          %v1691 = vsub.s32 0, %v1690
          %v1692 = vrot.slane %v1688, %v1691
          %v1693 = vmul.f32 %v1692, %v991
          %v1694 = vadd.f32 %v1687, %v1693
          %v1695 = vld [vmem:[#allocation2 + $0x73] sm:$0x1]
          %v1696 = vlaneseq
          %v1697 = vshrl.u32 %v1696, 7
          %v1698 = vsub.s32 0, %v1697
          %v1699 = vrot.slane %v1695, %v1698
          %v1700 = vmul.f32 %v1699, %v1052
          %v1701 = vadd.f32 %v1694, %v1700
          %v1702 = vld [vmem:[#allocation2 + $0x74] sm:$0x1]
          %v1703 = vlaneseq
          %v1704 = vshrl.u32 %v1703, 7
          %v1705 = vsub.s32 0, %v1704
          %v1706 = vrot.slane %v1702, %v1705
          %v1707 = vmul.f32 %v1706, %v1113
          %v1708 = vadd.f32 %v1701, %v1707
          %v1709 = vld [vmem:[#allocation2 + $0x75] sm:$0x1]
          %v1710 = vlaneseq
          %v1711 = vshrl.u32 %v1710, 7
          %v1712 = vsub.s32 0, %v1711
          %v1713 = vrot.slane %v1709, %v1712
          %v1714 = vmul.f32 %v1713, %v1174
          %v1715 = vadd.f32 %v1708, %v1714
          %v1716 = vld [vmem:[#allocation2 + $0x76] sm:$0x1]
          %v1717 = vlaneseq
          %v1718 = vshrl.u32 %v1717, 7
          %v1719 = vsub.s32 0, %v1718
          %v1720 = vrot.slane %v1716, %v1719
          %v1721 = vmul.f32 %v1720, %v1235
          %v1722 = vadd.f32 %v1715, %v1721
          %v1723 = vld [vmem:[#allocation2 + $0x77] sm:$0x1]
          %v1724 = vlaneseq
          %v1725 = vshrl.u32 %v1724, 7
          %v1726 = vsub.s32 0, %v1725
          %v1727 = vrot.slane %v1723, %v1726
          %v1728 = vmul.f32 %v1727, %v1296
          %v1729 = vadd.f32 %v1722, %v1728
          %v1730 = vld [vmem:[%s268 + $0xe] sm:$0x1]
          %v1731 = vlaneseq
          %v1732 = vshrl.u32 %v1731, 7
          %v1733 = vsub.s32 0, %v1732
          %v1734 = vrot.slane %v1730, %v1733
          %v1735 = vadd.f32 %v1729, %v1734
          %v1736 = vadd.f32 %v1735, %v1228
          %v1737 = vmax.f32 %v1736, 0.0
          %v1738 = vld [vmem:[#allocation2 + $0x78] sm:$0x1]
          %v1739 = vlaneseq
          %v1740 = vshrl.u32 %v1739, 7
          %v1741 = vsub.s32 0, %v1740
          %v1742 = vrot.slane %v1738, %v1741
          %v1743 = vmul.f32 %v1742, %v869
          %v1744 = vld [vmem:[#allocation2 + $0x79] sm:$0x1]
          %v1745 = vlaneseq
          %v1746 = vshrl.u32 %v1745, 7
          %v1747 = vsub.s32 0, %v1746
          %v1748 = vrot.slane %v1744, %v1747
          %v1749 = vmul.f32 %v1748, %v930
          %v1750 = vadd.f32 %v1743, %v1749
          %v1751 = vld [vmem:[#allocation2 + $0x7a] sm:$0x1]
          %v1752 = vlaneseq
          %v1753 = vshrl.u32 %v1752, 7
          %v1754 = vsub.s32 0, %v1753
          %v1755 = vrot.slane %v1751, %v1754
          %v1756 = vmul.f32 %v1755, %v991
          %v1757 = vadd.f32 %v1750, %v1756
          %v1758 = vld [vmem:[#allocation2 + $0x7b] sm:$0x1]
          %v1759 = vlaneseq
          %v1760 = vshrl.u32 %v1759, 7
          %v1761 = vsub.s32 0, %v1760
          %v1762 = vrot.slane %v1758, %v1761
          %v1763 = vmul.f32 %v1762, %v1052
          %v1764 = vadd.f32 %v1757, %v1763
          %v1765 = vld [vmem:[#allocation2 + $0x7c] sm:$0x1]
          %v1766 = vlaneseq
          %v1767 = vshrl.u32 %v1766, 7
          %v1768 = vsub.s32 0, %v1767
          %v1769 = vrot.slane %v1765, %v1768
          %v1770 = vmul.f32 %v1769, %v1113
          %v1771 = vadd.f32 %v1764, %v1770
          %v1772 = vld [vmem:[#allocation2 + $0x7d] sm:$0x1]
          %v1773 = vlaneseq
          %v1774 = vshrl.u32 %v1773, 7
          %v1775 = vsub.s32 0, %v1774
          %v1776 = vrot.slane %v1772, %v1775
          %v1777 = vmul.f32 %v1776, %v1174
          %v1778 = vadd.f32 %v1771, %v1777
          %v1779 = vld [vmem:[#allocation2 + $0x7e] sm:$0x1]
          %v1780 = vlaneseq
          %v1781 = vshrl.u32 %v1780, 7
          %v1782 = vsub.s32 0, %v1781
          %v1783 = vrot.slane %v1779, %v1782
          %v1784 = vmul.f32 %v1783, %v1235
          %v1785 = vadd.f32 %v1778, %v1784
          %v1786 = vld [vmem:[#allocation2 + $0x7f] sm:$0x1]
          %v1787 = vlaneseq
          %v1788 = vshrl.u32 %v1787, 7
          %v1789 = vsub.s32 0, %v1788
          %v1790 = vrot.slane %v1786, %v1789
          %v1791 = vmul.f32 %v1790, %v1296
          %v1792 = vadd.f32 %v1785, %v1791
          %v1793 = vld [vmem:[%s268 + $0xf] sm:$0x1]
          %v1794 = vlaneseq
          %v1795 = vshrl.u32 %v1794, 7
          %v1796 = vsub.s32 0, %v1795
          %v1797 = vrot.slane %v1793, %v1796
          %v1798 = vadd.f32 %v1792, %v1797
          %v1799 = vadd.f32 %v1798, %v1289
          %v1800 = vmax.f32 %v1799, 0.0
          %v1801 = vld [vmem:[#allocation2 + $0xc0] sm:$0x1]
          %v1802 = vlaneseq
          %v1803 = vshrl.u32 %v1802, 7
          %v1804 = vsub.s32 0, %v1803
          %v1805 = vrot.slane %v1801, %v1804
          %v1806 = vmul.f32 %v1805, %v1359
          %v1807 = vld [vmem:[#allocation2 + $0xc1] sm:$0x1]
          %v1808 = vlaneseq
          %v1809 = vshrl.u32 %v1808, 7
          %v1810 = vsub.s32 0, %v1809
          %v1811 = vrot.slane %v1807, %v1810
          %v1812 = vmul.f32 %v1811, %v1422
          %v1813 = vadd.f32 %v1806, %v1812
          %v1814 = vld [vmem:[#allocation2 + $0xc2] sm:$0x1]
          %v1815 = vlaneseq
          %v1816 = vshrl.u32 %v1815, 7
          %v1817 = vsub.s32 0, %v1816
          %v1818 = vrot.slane %v1814, %v1817
          %v1819 = vmul.f32 %v1818, %v1485
          %v1820 = vadd.f32 %v1813, %v1819
          %v1821 = vld [vmem:[#allocation2 + $0xc3] sm:$0x1]
          %v1822 = vlaneseq
          %v1823 = vshrl.u32 %v1822, 7
          %v1824 = vsub.s32 0, %v1823
          %v1825 = vrot.slane %v1821, %v1824
          %v1826 = vmul.f32 %v1825, %v1548
          %v1827 = vadd.f32 %v1820, %v1826
          %v1828 = vld [vmem:[#allocation2 + $0xc4] sm:$0x1]
          %v1829 = vlaneseq
          %v1830 = vshrl.u32 %v1829, 7
          %v1831 = vsub.s32 0, %v1830
          %v1832 = vrot.slane %v1828, %v1831
          %v1833 = vmul.f32 %v1832, %v1611
          %v1834 = vadd.f32 %v1827, %v1833
          %v1835 = vld [vmem:[#allocation2 + $0xc5] sm:$0x1]
          %v1836 = vlaneseq
          %v1837 = vshrl.u32 %v1836, 7
          %v1838 = vsub.s32 0, %v1837
          %v1839 = vrot.slane %v1835, %v1838
          %v1840 = vmul.f32 %v1839, %v1674
          %v1841 = vadd.f32 %v1834, %v1840
          %v1842 = vld [vmem:[#allocation2 + $0xc6] sm:$0x1]
          %v1843 = vlaneseq
          %v1844 = vshrl.u32 %v1843, 7
          %v1845 = vsub.s32 0, %v1844
          %v1846 = vrot.slane %v1842, %v1845
          %v1847 = vmul.f32 %v1846, %v1737
          %v1848 = vadd.f32 %v1841, %v1847
          %v1849 = vld [vmem:[#allocation2 + $0xc7] sm:$0x1]
          %v1850 = vlaneseq
          %v1851 = vshrl.u32 %v1850, 7
          %v1852 = vsub.s32 0, %v1851
          %v1853 = vrot.slane %v1849, %v1852
          %v1854 = vmul.f32 %v1853, %v1800
          %v1855 = vadd.f32 %v1848, %v1854
          %v1856 = vld [vmem:[#allocation2 + $0x80] sm:$0x1]
          %v1857 = vlaneseq
          %v1858 = vshrl.u32 %v1857, 7
          %v1859 = vsub.s32 0, %v1858
          %v1860 = vrot.slane %v1856, %v1859
          %v1861 = vmul.f32 %v1860, %v1359
          %v1862 = vld [vmem:[#allocation2 + $0x81] sm:$0x1]
          %v1863 = vlaneseq
          %v1864 = vshrl.u32 %v1863, 7
          %v1865 = vsub.s32 0, %v1864
          %v1866 = vrot.slane %v1862, %v1865
          %v1867 = vmul.f32 %v1866, %v1422
          %v1868 = vadd.f32 %v1861, %v1867
          %v1869 = vld [vmem:[#allocation2 + $0x82] sm:$0x1]
          %v1870 = vlaneseq
          %v1871 = vshrl.u32 %v1870, 7
          %v1872 = vsub.s32 0, %v1871
          %v1873 = vrot.slane %v1869, %v1872
          %v1874 = vmul.f32 %v1873, %v1485
          %v1875 = vadd.f32 %v1868, %v1874
          %v1876 = vld [vmem:[#allocation2 + $0x83] sm:$0x1]
          %v1877 = vlaneseq
          %v1878 = vshrl.u32 %v1877, 7
          %v1879 = vsub.s32 0, %v1878
          %v1880 = vrot.slane %v1876, %v1879
          %v1881 = vmul.f32 %v1880, %v1548
          %v1882 = vadd.f32 %v1875, %v1881
          %v1883 = vld [vmem:[#allocation2 + $0x84] sm:$0x1]
          %v1884 = vlaneseq
          %v1885 = vshrl.u32 %v1884, 7
          %v1886 = vsub.s32 0, %v1885
          %v1887 = vrot.slane %v1883, %v1886
          %v1888 = vmul.f32 %v1887, %v1611
          %v1889 = vadd.f32 %v1882, %v1888
          %v1890 = vld [vmem:[#allocation2 + $0x85] sm:$0x1]
          %v1891 = vlaneseq
          %v1892 = vshrl.u32 %v1891, 7
          %v1893 = vsub.s32 0, %v1892
          %v1894 = vrot.slane %v1890, %v1893
          %v1895 = vmul.f32 %v1894, %v1674
          %v1896 = vadd.f32 %v1889, %v1895
          %v1897 = vld [vmem:[#allocation2 + $0x86] sm:$0x1]
          %v1898 = vlaneseq
          %v1899 = vshrl.u32 %v1898, 7
          %v1900 = vsub.s32 0, %v1899
          %v1901 = vrot.slane %v1897, %v1900
          %v1902 = vmul.f32 %v1901, %v1737
          %v1903 = vadd.f32 %v1896, %v1902
          %v1904 = vld [vmem:[#allocation2 + $0x87] sm:$0x1]
          %v1905 = vlaneseq
          %v1906 = vshrl.u32 %v1905, 7
          %v1907 = vsub.s32 0, %v1906
          %v1908 = vrot.slane %v1904, %v1907
          %v1909 = vmul.f32 %v1908, %v1800
          %v1910 = vadd.f32 %v1903, %v1909
          %v1911 = vld [vmem:[%s268 + $0x10] sm:$0x1]
          %v1912 = vlaneseq
          %v1913 = vshrl.u32 %v1912, 7
          %v1914 = vsub.s32 0, %v1913
          %v1915 = vrot.slane %v1911, %v1914
          %v1916 = vadd.f32 %v1910, %v1915
          %v1917 = vmax.f32 %v1916, 0.0
          %v1918 = vld [vmem:[#allocation2 + $0x88] sm:$0x1]
          %v1919 = vlaneseq
          %v1920 = vshrl.u32 %v1919, 7
          %v1921 = vsub.s32 0, %v1920
          %v1922 = vrot.slane %v1918, %v1921
          %v1923 = vmul.f32 %v1922, %v1359
          %v1924 = vld [vmem:[#allocation2 + $0x89] sm:$0x1]
          %v1925 = vlaneseq
          %v1926 = vshrl.u32 %v1925, 7
          %v1927 = vsub.s32 0, %v1926
          %v1928 = vrot.slane %v1924, %v1927
          %v1929 = vmul.f32 %v1928, %v1422
          %v1930 = vadd.f32 %v1923, %v1929
          %v1931 = vld [vmem:[#allocation2 + $0x8a] sm:$0x1]
          %v1932 = vlaneseq
          %v1933 = vshrl.u32 %v1932, 7
          %v1934 = vsub.s32 0, %v1933
          %v1935 = vrot.slane %v1931, %v1934
          %v1936 = vmul.f32 %v1935, %v1485
          %v1937 = vadd.f32 %v1930, %v1936
          %v1938 = vld [vmem:[#allocation2 + $0x8b] sm:$0x1]
          %v1939 = vlaneseq
          %v1940 = vshrl.u32 %v1939, 7
          %v1941 = vsub.s32 0, %v1940
          %v1942 = vrot.slane %v1938, %v1941
          %v1943 = vmul.f32 %v1942, %v1548
          %v1944 = vadd.f32 %v1937, %v1943
          %v1945 = vld [vmem:[#allocation2 + $0x8c] sm:$0x1]
          %v1946 = vlaneseq
          %v1947 = vshrl.u32 %v1946, 7
          %v1948 = vsub.s32 0, %v1947
          %v1949 = vrot.slane %v1945, %v1948
          %v1950 = vmul.f32 %v1949, %v1611
          %v1951 = vadd.f32 %v1944, %v1950
          %v1952 = vld [vmem:[#allocation2 + $0x8d] sm:$0x1]
          %v1953 = vlaneseq
          %v1954 = vshrl.u32 %v1953, 7
          %v1955 = vsub.s32 0, %v1954
          %v1956 = vrot.slane %v1952, %v1955
          %v1957 = vmul.f32 %v1956, %v1674
          %v1958 = vadd.f32 %v1951, %v1957
          %v1959 = vld [vmem:[#allocation2 + $0x8e] sm:$0x1]
          %v1960 = vlaneseq
          %v1961 = vshrl.u32 %v1960, 7
          %v1962 = vsub.s32 0, %v1961
          %v1963 = vrot.slane %v1959, %v1962
          %v1964 = vmul.f32 %v1963, %v1737
          %v1965 = vadd.f32 %v1958, %v1964
          %v1966 = vld [vmem:[#allocation2 + $0x8f] sm:$0x1]
          %v1967 = vlaneseq
          %v1968 = vshrl.u32 %v1967, 7
          %v1969 = vsub.s32 0, %v1968
          %v1970 = vrot.slane %v1966, %v1969
          %v1971 = vmul.f32 %v1970, %v1800
          %v1972 = vadd.f32 %v1965, %v1971
          %v1973 = vld [vmem:[%s268 + $0x11] sm:$0x1]
          %v1974 = vlaneseq
          %v1975 = vshrl.u32 %v1974, 7
          %v1976 = vsub.s32 0, %v1975
          %v1977 = vrot.slane %v1973, %v1976
          %v1978 = vadd.f32 %v1972, %v1977
          %v1979 = vmax.f32 %v1978, 0.0
          %v1980 = vld [vmem:[#allocation2 + $0x90] sm:$0x1]
          %v1981 = vlaneseq
          %v1982 = vshrl.u32 %v1981, 7
          %v1983 = vsub.s32 0, %v1982
          %v1984 = vrot.slane %v1980, %v1983
          %v1985 = vmul.f32 %v1984, %v1359
          %v1986 = vld [vmem:[#allocation2 + $0x91] sm:$0x1]
          %v1987 = vlaneseq
          %v1988 = vshrl.u32 %v1987, 7
          %v1989 = vsub.s32 0, %v1988
          %v1990 = vrot.slane %v1986, %v1989
          %v1991 = vmul.f32 %v1990, %v1422
          %v1992 = vadd.f32 %v1985, %v1991
          %v1993 = vld [vmem:[#allocation2 + $0x92] sm:$0x1]
          %v1994 = vlaneseq
          %v1995 = vshrl.u32 %v1994, 7
          %v1996 = vsub.s32 0, %v1995
          %v1997 = vrot.slane %v1993, %v1996
          %v1998 = vmul.f32 %v1997, %v1485
          %v1999 = vadd.f32 %v1992, %v1998
          %v2000 = vld [vmem:[#allocation2 + $0x93] sm:$0x1]
          %v2001 = vlaneseq
          %v2002 = vshrl.u32 %v2001, 7
          %v2003 = vsub.s32 0, %v2002
          %v2004 = vrot.slane %v2000, %v2003
          %v2005 = vmul.f32 %v2004, %v1548
          %v2006 = vadd.f32 %v1999, %v2005
          %v2007 = vld [vmem:[#allocation2 + $0x94] sm:$0x1]
          %v2008 = vlaneseq
          %v2009 = vshrl.u32 %v2008, 7
          %v2010 = vsub.s32 0, %v2009
          %v2011 = vrot.slane %v2007, %v2010
          %v2012 = vmul.f32 %v2011, %v1611
          %v2013 = vadd.f32 %v2006, %v2012
          %v2014 = vld [vmem:[#allocation2 + $0x95] sm:$0x1]
          %v2015 = vlaneseq
          %v2016 = vshrl.u32 %v2015, 7
          %v2017 = vsub.s32 0, %v2016
          %v2018 = vrot.slane %v2014, %v2017
          %v2019 = vmul.f32 %v2018, %v1674
          %v2020 = vadd.f32 %v2013, %v2019
          %v2021 = vld [vmem:[#allocation2 + $0x96] sm:$0x1]
          %v2022 = vlaneseq
          %v2023 = vshrl.u32 %v2022, 7
          %v2024 = vsub.s32 0, %v2023
          %v2025 = vrot.slane %v2021, %v2024
          %v2026 = vmul.f32 %v2025, %v1737
          %v2027 = vadd.f32 %v2020, %v2026
          %v2028 = vld [vmem:[#allocation2 + $0x97] sm:$0x1]
          %v2029 = vlaneseq
          %v2030 = vshrl.u32 %v2029, 7
          %v2031 = vsub.s32 0, %v2030
          %v2032 = vrot.slane %v2028, %v2031
          %v2033 = vmul.f32 %v2032, %v1800
          %v2034 = vadd.f32 %v2027, %v2033
          %v2035 = vld [vmem:[%s268 + $0x12] sm:$0x1]
          %v2036 = vlaneseq
          %v2037 = vshrl.u32 %v2036, 7
          %v2038 = vsub.s32 0, %v2037
          %v2039 = vrot.slane %v2035, %v2038
          %v2040 = vadd.f32 %v2034, %v2039
          %v2041 = vmax.f32 %v2040, 0.0
          %v2042 = vld [vmem:[#allocation2 + $0x98] sm:$0x1]
          %v2043 = vlaneseq
          %v2044 = vshrl.u32 %v2043, 7
          %v2045 = vsub.s32 0, %v2044
          %v2046 = vrot.slane %v2042, %v2045
          %v2047 = vmul.f32 %v2046, %v1359
          %v2048 = vld [vmem:[#allocation2 + $0x99] sm:$0x1]
          %v2049 = vlaneseq
          %v2050 = vshrl.u32 %v2049, 7
          %v2051 = vsub.s32 0, %v2050
          %v2052 = vrot.slane %v2048, %v2051
          %v2053 = vmul.f32 %v2052, %v1422
          %v2054 = vadd.f32 %v2047, %v2053
          %v2055 = vld [vmem:[#allocation2 + $0x9a] sm:$0x1]
          %v2056 = vlaneseq
          %v2057 = vshrl.u32 %v2056, 7
          %v2058 = vsub.s32 0, %v2057
          %v2059 = vrot.slane %v2055, %v2058
          %v2060 = vmul.f32 %v2059, %v1485
          %v2061 = vadd.f32 %v2054, %v2060
          %v2062 = vld [vmem:[#allocation2 + $0x9b] sm:$0x1]
          %v2063 = vlaneseq
          %v2064 = vshrl.u32 %v2063, 7
          %v2065 = vsub.s32 0, %v2064
          %v2066 = vrot.slane %v2062, %v2065
          %v2067 = vmul.f32 %v2066, %v1548
          %v2068 = vadd.f32 %v2061, %v2067
          %v2069 = vld [vmem:[#allocation2 + $0x9c] sm:$0x1]
          %v2070 = vlaneseq
          %v2071 = vshrl.u32 %v2070, 7
          %v2072 = vsub.s32 0, %v2071
          %v2073 = vrot.slane %v2069, %v2072
          %v2074 = vmul.f32 %v2073, %v1611
          %v2075 = vadd.f32 %v2068, %v2074
          %v2076 = vld [vmem:[#allocation2 + $0x9d] sm:$0x1]
          %v2077 = vlaneseq
          %v2078 = vshrl.u32 %v2077, 7
          %v2079 = vsub.s32 0, %v2078
          %v2080 = vrot.slane %v2076, %v2079
          %v2081 = vmul.f32 %v2080, %v1674
          %v2082 = vadd.f32 %v2075, %v2081
          %v2083 = vld [vmem:[#allocation2 + $0x9e] sm:$0x1]
          %v2084 = vlaneseq
          %v2085 = vshrl.u32 %v2084, 7
          %v2086 = vsub.s32 0, %v2085
          %v2087 = vrot.slane %v2083, %v2086
          %v2088 = vmul.f32 %v2087, %v1737
          %v2089 = vadd.f32 %v2082, %v2088
          %v2090 = vld [vmem:[#allocation2 + $0x9f] sm:$0x1]
          %v2091 = vlaneseq
          %v2092 = vshrl.u32 %v2091, 7
          %v2093 = vsub.s32 0, %v2092
          %v2094 = vrot.slane %v2090, %v2093
          %v2095 = vmul.f32 %v2094, %v1800
          %v2096 = vadd.f32 %v2089, %v2095
          %v2097 = vld [vmem:[%s268 + $0x13] sm:$0x1]
          %v2098 = vlaneseq
          %v2099 = vshrl.u32 %v2098, 7
          %v2100 = vsub.s32 0, %v2099
          %v2101 = vrot.slane %v2097, %v2100
          %v2102 = vadd.f32 %v2096, %v2101
          %v2103 = vmax.f32 %v2102, 0.0
          %v2104 = vld [vmem:[#allocation2 + $0xa0] sm:$0x1]
          %v2105 = vlaneseq
          %v2106 = vshrl.u32 %v2105, 7
          %v2107 = vsub.s32 0, %v2106
          %v2108 = vrot.slane %v2104, %v2107
          %v2109 = vmul.f32 %v2108, %v1359
          %v2110 = vld [vmem:[#allocation2 + $0xa1] sm:$0x1]
          %v2111 = vlaneseq
          %v2112 = vshrl.u32 %v2111, 7
          %v2113 = vsub.s32 0, %v2112
          %v2114 = vrot.slane %v2110, %v2113
          %v2115 = vmul.f32 %v2114, %v1422
          %v2116 = vadd.f32 %v2109, %v2115
          %v2117 = vld [vmem:[#allocation2 + $0xa2] sm:$0x1]
          %v2118 = vlaneseq
          %v2119 = vshrl.u32 %v2118, 7
          %v2120 = vsub.s32 0, %v2119
          %v2121 = vrot.slane %v2117, %v2120
          %v2122 = vmul.f32 %v2121, %v1485
          %v2123 = vadd.f32 %v2116, %v2122
          %v2124 = vld [vmem:[#allocation2 + $0xa3] sm:$0x1]
          %v2125 = vlaneseq
          %v2126 = vshrl.u32 %v2125, 7
          %v2127 = vsub.s32 0, %v2126
          %v2128 = vrot.slane %v2124, %v2127
          %v2129 = vmul.f32 %v2128, %v1548
          %v2130 = vadd.f32 %v2123, %v2129
          %v2131 = vld [vmem:[#allocation2 + $0xa4] sm:$0x1]
          %v2132 = vlaneseq
          %v2133 = vshrl.u32 %v2132, 7
          %v2134 = vsub.s32 0, %v2133
          %v2135 = vrot.slane %v2131, %v2134
          %v2136 = vmul.f32 %v2135, %v1611
          %v2137 = vadd.f32 %v2130, %v2136
          %v2138 = vld [vmem:[#allocation2 + $0xa5] sm:$0x1]
          %v2139 = vlaneseq
          %v2140 = vshrl.u32 %v2139, 7
          %v2141 = vsub.s32 0, %v2140
          %v2142 = vrot.slane %v2138, %v2141
          %v2143 = vmul.f32 %v2142, %v1674
          %v2144 = vadd.f32 %v2137, %v2143
          %v2145 = vld [vmem:[#allocation2 + $0xa6] sm:$0x1]
          %v2146 = vlaneseq
          %v2147 = vshrl.u32 %v2146, 7
          %v2148 = vsub.s32 0, %v2147
          %v2149 = vrot.slane %v2145, %v2148
          %v2150 = vmul.f32 %v2149, %v1737
          %v2151 = vadd.f32 %v2144, %v2150
          %v2152 = vld [vmem:[#allocation2 + $0xa7] sm:$0x1]
          %v2153 = vlaneseq
          %v2154 = vshrl.u32 %v2153, 7
          %v2155 = vsub.s32 0, %v2154
          %v2156 = vrot.slane %v2152, %v2155
          %v2157 = vmul.f32 %v2156, %v1800
          %v2158 = vadd.f32 %v2151, %v2157
          %v2159 = vld [vmem:[%s268 + $0x14] sm:$0x1]
          %v2160 = vlaneseq
          %v2161 = vshrl.u32 %v2160, 7
          %v2162 = vsub.s32 0, %v2161
          %v2163 = vrot.slane %v2159, %v2162
          %v2164 = vadd.f32 %v2158, %v2163
          %v2165 = vmax.f32 %v2164, 0.0
          %v2166 = vld [vmem:[#allocation2 + $0xa8] sm:$0x1]
          %v2167 = vlaneseq
          %v2168 = vshrl.u32 %v2167, 7
          %v2169 = vsub.s32 0, %v2168
          %v2170 = vrot.slane %v2166, %v2169
          %v2171 = vmul.f32 %v2170, %v1359
          %v2172 = vld [vmem:[#allocation2 + $0xa9] sm:$0x1]
          %v2173 = vlaneseq
          %v2174 = vshrl.u32 %v2173, 7
          %v2175 = vsub.s32 0, %v2174
          %v2176 = vrot.slane %v2172, %v2175
          %v2177 = vmul.f32 %v2176, %v1422
          %v2178 = vadd.f32 %v2171, %v2177
          %v2179 = vld [vmem:[#allocation2 + $0xaa] sm:$0x1]
          %v2180 = vlaneseq
          %v2181 = vshrl.u32 %v2180, 7
          %v2182 = vsub.s32 0, %v2181
          %v2183 = vrot.slane %v2179, %v2182
          %v2184 = vmul.f32 %v2183, %v1485
          %v2185 = vadd.f32 %v2178, %v2184
          %v2186 = vld [vmem:[#allocation2 + $0xab] sm:$0x1]
          %v2187 = vlaneseq
          %v2188 = vshrl.u32 %v2187, 7
          %v2189 = vsub.s32 0, %v2188
          %v2190 = vrot.slane %v2186, %v2189
          %v2191 = vmul.f32 %v2190, %v1548
          %v2192 = vadd.f32 %v2185, %v2191
          %v2193 = vld [vmem:[#allocation2 + $0xac] sm:$0x1]
          %v2194 = vlaneseq
          %v2195 = vshrl.u32 %v2194, 7
          %v2196 = vsub.s32 0, %v2195
          %v2197 = vrot.slane %v2193, %v2196
          %v2198 = vmul.f32 %v2197, %v1611
          %v2199 = vadd.f32 %v2192, %v2198
          %v2200 = vld [vmem:[#allocation2 + $0xad] sm:$0x1]
          %v2201 = vlaneseq
          %v2202 = vshrl.u32 %v2201, 7
          %v2203 = vsub.s32 0, %v2202
          %v2204 = vrot.slane %v2200, %v2203
          %v2205 = vmul.f32 %v2204, %v1674
          %v2206 = vadd.f32 %v2199, %v2205
          %v2207 = vld [vmem:[#allocation2 + $0xae] sm:$0x1]
          %v2208 = vlaneseq
          %v2209 = vshrl.u32 %v2208, 7
          %v2210 = vsub.s32 0, %v2209
          %v2211 = vrot.slane %v2207, %v2210
          %v2212 = vmul.f32 %v2211, %v1737
          %v2213 = vadd.f32 %v2206, %v2212
          %v2214 = vld [vmem:[#allocation2 + $0xaf] sm:$0x1]
          %v2215 = vlaneseq
          %v2216 = vshrl.u32 %v2215, 7
          %v2217 = vsub.s32 0, %v2216
          %v2218 = vrot.slane %v2214, %v2217
          %v2219 = vmul.f32 %v2218, %v1800
          %v2220 = vadd.f32 %v2213, %v2219
          %v2221 = vld [vmem:[%s268 + $0x15] sm:$0x1]
          %v2222 = vlaneseq
          %v2223 = vshrl.u32 %v2222, 7
          %v2224 = vsub.s32 0, %v2223
          %v2225 = vrot.slane %v2221, %v2224
          %v2226 = vadd.f32 %v2220, %v2225
          %v2227 = vmax.f32 %v2226, 0.0
          %v2228 = vld [vmem:[#allocation2 + $0xb0] sm:$0x1]
          %v2229 = vlaneseq
          %v2230 = vshrl.u32 %v2229, 7
          %v2231 = vsub.s32 0, %v2230
          %v2232 = vrot.slane %v2228, %v2231
          %v2233 = vmul.f32 %v2232, %v1359
          %v2234 = vld [vmem:[#allocation2 + $0xb1] sm:$0x1]
          %v2235 = vlaneseq
          %v2236 = vshrl.u32 %v2235, 7
          %v2237 = vsub.s32 0, %v2236
          %v2238 = vrot.slane %v2234, %v2237
          %v2239 = vmul.f32 %v2238, %v1422
          %v2240 = vadd.f32 %v2233, %v2239
          %v2241 = vld [vmem:[#allocation2 + $0xb2] sm:$0x1]
          %v2242 = vlaneseq
          %v2243 = vshrl.u32 %v2242, 7
          %v2244 = vsub.s32 0, %v2243
          %v2245 = vrot.slane %v2241, %v2244
          %v2246 = vmul.f32 %v2245, %v1485
          %v2247 = vadd.f32 %v2240, %v2246
          %v2248 = vld [vmem:[#allocation2 + $0xb3] sm:$0x1]
          %v2249 = vlaneseq
          %v2250 = vshrl.u32 %v2249, 7
          %v2251 = vsub.s32 0, %v2250
          %v2252 = vrot.slane %v2248, %v2251
          %v2253 = vmul.f32 %v2252, %v1548
          %v2254 = vadd.f32 %v2247, %v2253
          %v2255 = vld [vmem:[#allocation2 + $0xb4] sm:$0x1]
          %v2256 = vlaneseq
          %v2257 = vshrl.u32 %v2256, 7
          %v2258 = vsub.s32 0, %v2257
          %v2259 = vrot.slane %v2255, %v2258
          %v2260 = vmul.f32 %v2259, %v1611
          %v2261 = vadd.f32 %v2254, %v2260
          %v2262 = vld [vmem:[#allocation2 + $0xb5] sm:$0x1]
          %v2263 = vlaneseq
          %v2264 = vshrl.u32 %v2263, 7
          %v2265 = vsub.s32 0, %v2264
          %v2266 = vrot.slane %v2262, %v2265
          %v2267 = vmul.f32 %v2266, %v1674
          %v2268 = vadd.f32 %v2261, %v2267
          %v2269 = vld [vmem:[#allocation2 + $0xb6] sm:$0x1]
          %v2270 = vlaneseq
          %v2271 = vshrl.u32 %v2270, 7
          %v2272 = vsub.s32 0, %v2271
          %v2273 = vrot.slane %v2269, %v2272
          %v2274 = vmul.f32 %v2273, %v1737
          %v2275 = vadd.f32 %v2268, %v2274
          %v2276 = vld [vmem:[#allocation2 + $0xb7] sm:$0x1]
          %v2277 = vlaneseq
          %v2278 = vshrl.u32 %v2277, 7
          %v2279 = vsub.s32 0, %v2278
          %v2280 = vrot.slane %v2276, %v2279
          %v2281 = vmul.f32 %v2280, %v1800
          %v2282 = vadd.f32 %v2275, %v2281
          %v2283 = vld [vmem:[%s268 + $0x16] sm:$0x1]
          %v2284 = vlaneseq
          %v2285 = vshrl.u32 %v2284, 7
          %v2286 = vsub.s32 0, %v2285
          %v2287 = vrot.slane %v2283, %v2286
          %v2288 = vadd.f32 %v2282, %v2287
          %v2289 = vmax.f32 %v2288, 0.0
          %v2290 = vld [vmem:[#allocation2 + $0xb8] sm:$0x1]
          %v2291 = vlaneseq
          %v2292 = vshrl.u32 %v2291, 7
          %v2293 = vsub.s32 0, %v2292
          %v2294 = vrot.slane %v2290, %v2293
          %v2295 = vmul.f32 %v2294, %v1359
          %v2296 = vld [vmem:[#allocation2 + $0xb9] sm:$0x1]
          %v2297 = vlaneseq
          %v2298 = vshrl.u32 %v2297, 7
          %v2299 = vsub.s32 0, %v2298
          %v2300 = vrot.slane %v2296, %v2299
          %v2301 = vmul.f32 %v2300, %v1422
          %v2302 = vadd.f32 %v2295, %v2301
          %v2303 = vld [vmem:[#allocation2 + $0xba] sm:$0x1]
          %v2304 = vlaneseq
          %v2305 = vshrl.u32 %v2304, 7
          %v2306 = vsub.s32 0, %v2305
          %v2307 = vrot.slane %v2303, %v2306
          %v2308 = vmul.f32 %v2307, %v1485
          %v2309 = vadd.f32 %v2302, %v2308
          %v2310 = vld [vmem:[#allocation2 + $0xbb] sm:$0x1]
          %v2311 = vlaneseq
          %v2312 = vshrl.u32 %v2311, 7
          %v2313 = vsub.s32 0, %v2312
          %v2314 = vrot.slane %v2310, %v2313
          %v2315 = vmul.f32 %v2314, %v1548
          %v2316 = vadd.f32 %v2309, %v2315
          %v2317 = vld [vmem:[#allocation2 + $0xbc] sm:$0x1]
          %v2318 = vlaneseq
          %v2319 = vshrl.u32 %v2318, 7
          %v2320 = vsub.s32 0, %v2319
          %v2321 = vrot.slane %v2317, %v2320
          %v2322 = vmul.f32 %v2321, %v1611
          %v2323 = vadd.f32 %v2316, %v2322
          %v2324 = vld [vmem:[#allocation2 + $0xbd] sm:$0x1]
          %v2325 = vlaneseq
          %v2326 = vshrl.u32 %v2325, 7
          %v2327 = vsub.s32 0, %v2326
          %v2328 = vrot.slane %v2324, %v2327
          %v2329 = vmul.f32 %v2328, %v1674
          %v2330 = vadd.f32 %v2323, %v2329
          %v2331 = vld [vmem:[#allocation2 + $0xbe] sm:$0x1]
          %v2332 = vlaneseq
          %v2333 = vshrl.u32 %v2332, 7
          %v2334 = vsub.s32 0, %v2333
          %v2335 = vrot.slane %v2331, %v2334
          %v2336 = vmul.f32 %v2335, %v1737
          %v2337 = vadd.f32 %v2330, %v2336
          %v2338 = vld [vmem:[#allocation2 + $0xbf] sm:$0x1]
          %v2339 = vlaneseq
          %v2340 = vshrl.u32 %v2339, 7
          %v2341 = vsub.s32 0, %v2340
          %v2342 = vrot.slane %v2338, %v2341
          %v2343 = vmul.f32 %v2342, %v1800
          %v2344 = vadd.f32 %v2337, %v2343
          %v2345 = vld [vmem:[%s268 + $0x17] sm:$0x1]
          %v2346 = vlaneseq
          %v2347 = vshrl.u32 %v2346, 7
          %v2348 = vsub.s32 0, %v2347
          %v2349 = vrot.slane %v2345, %v2348
          %v2350 = vadd.f32 %v2344, %v2349
          %v2351 = vmax.f32 %v2350, 0.0
          %v2352 = vld [vmem:[#allocation2 + $0xc8] sm:$0x1]
          %v2353 = vlaneseq
          %v2354 = vshrl.u32 %v2353, 7
          %v2355 = vsub.s32 0, %v2354
          %v2356 = vrot.slane %v2352, %v2355
          %v2357 = vmul.f32 %v2356, %v1917
          %v2358 = vld [vmem:[#allocation2 + $0xc9] sm:$0x1]
          %v2359 = vlaneseq
          %v2360 = vshrl.u32 %v2359, 7
          %v2361 = vsub.s32 0, %v2360
          %v2362 = vrot.slane %v2358, %v2361
          %v2363 = vmul.f32 %v2362, %v1979
          %v2364 = vadd.f32 %v2357, %v2363
          %v2365 = vld [vmem:[#allocation2 + $0xca] sm:$0x1]
          %v2366 = vlaneseq
          %v2367 = vshrl.u32 %v2366, 7
          %v2368 = vsub.s32 0, %v2367
          %v2369 = vrot.slane %v2365, %v2368
          %v2370 = vmul.f32 %v2369, %v2041
          %v2371 = vadd.f32 %v2364, %v2370
          %v2372 = vld [vmem:[#allocation2 + $0xcb] sm:$0x1]
          %v2373 = vlaneseq
          %v2374 = vshrl.u32 %v2373, 7
          %v2375 = vsub.s32 0, %v2374
          %v2376 = vrot.slane %v2372, %v2375
          %v2377 = vmul.f32 %v2376, %v2103
          %v2378 = vadd.f32 %v2371, %v2377
          %v2379 = vld [vmem:[#allocation2 + $0xcc] sm:$0x1]
          %v2380 = vlaneseq
          %v2381 = vshrl.u32 %v2380, 7
          %v2382 = vsub.s32 0, %v2381
          %v2383 = vrot.slane %v2379, %v2382
          %v2384 = vmul.f32 %v2383, %v2165
          %v2385 = vadd.f32 %v2378, %v2384
          %v2386 = vld [vmem:[#allocation2 + $0xcd] sm:$0x1]
          %v2387 = vlaneseq
          %v2388 = vshrl.u32 %v2387, 7
          %v2389 = vsub.s32 0, %v2388
          %v2390 = vrot.slane %v2386, %v2389
          %v2391 = vmul.f32 %v2390, %v2227
          %v2392 = vadd.f32 %v2385, %v2391
          %v2393 = vld [vmem:[#allocation2 + $0xce] sm:$0x1]
          %v2394 = vlaneseq
          %v2395 = vshrl.u32 %v2394, 7
          %v2396 = vsub.s32 0, %v2395
          %v2397 = vrot.slane %v2393, %v2396
          %v2398 = vmul.f32 %v2397, %v2289
          %v2399 = vadd.f32 %v2392, %v2398
          %v2400 = vld [vmem:[#allocation2 + $0xcf] sm:$0x1]
          %v2401 = vlaneseq
          %v2402 = vshrl.u32 %v2401, 7
          %v2403 = vsub.s32 0, %v2402
          %v2404 = vrot.slane %v2400, %v2403
          %v2405 = vmul.f32 %v2404, %v2351
          %v2406 = vadd.f32 %v2399, %v2405
          %v2407 = vld [vmem:[%s268 + $0x18] sm:$0x1]
          %v2408 = vlaneseq
          %v2409 = vshrl.u32 %v2408, 7
          %v2410 = vsub.s32 0, %v2409
          %v2411 = vrot.slane %v2407, %v2410
          %v2412 = vadd.f32 %v2406, %v2411
          %v2413 = vadd.f32 %v2412, %v1855
          %s2414 = scalar_lea.vmem %s302, %s797 [#allocation12]
          %2415 = vst [vmem:[%s2414] sm:$0xff] %v2413
        $region57: #{sparse_linear_neq_forward.1} parent=35 // loop_footer
          %s796 = sadd.s32 1, %s792
        $region58: #{sparse_linear_neq_forward.1} parent=35 // loop_footer_branch
          %791 = sbr.rel target = $region54
        $region59: #{sparse_linear_neq_forward.1} parent=35 // loop_exit
          _
        %s2416 = sand.u32 %s132, 1
        %s2417 = scalar_lea.sflag [#allocation6], %s2416
        %s2418 = sand.u32 %s132, 1
        %s2419 = smul.addr %s2418, 16
        %s2420 = scalar_lea.vmem [#allocation12], %s2419
        // Predicated region
        $region60: #{sparse_linear_neq_forward.1} parent=35 // pred_check
          %p2421 = pneg %p142
        $region61: #{sparse_linear_neq_forward.1} parent=35 // pred_check_branch
          %2423 = sbr.rel (%p2421) target = $region63
        $region62: #{sparse_linear_neq_forward.1} parent=35 // pred_region
          %s2425 = ssub.s32 256, 256
          %2426 = vsyncadd %s2417, %s2425
          %s2427 = smul.addr %s25, 128
          %s2428 = scalar_lea.hbm %s4, %s2427
          %s2429 = sshll.u32 %s2420, 4
          %s2430 = int_to_ptr.vmem [resolvable:$true] %s2429
          %2435 = dma.vmem_to_hbm [thread:$0]  %s2430, 256, %s2428, %s2417, 128, 512, 8
        $region63: #{sparse_linear_neq_forward.1} parent=35 // pred_fallthru
          _
      $region36: #{sparse_linear_neq_forward.1} parent=5 // pred_fallthru
        _
      %p2436 = scmp.le.s32.totalorder 2, %s20
      // Predicated region
      $region64: #{sparse_linear_neq_forward.1} parent=5 // pred_check
        %p2437 = pneg %p2436
      $region65: #{sparse_linear_neq_forward.1} parent=5 // pred_check_branch
        %2439 = sbr.rel (%p2437) target = $region67
      $region66: #{sparse_linear_neq_forward.1} parent=5 // pred_region
        %s2440 = ssub.s32 %s20, 2
        // Predicated region
        $region68: #{sparse_linear_neq_forward.1} parent=66 // pred_check
          %p2441 = pneg %p148
        $region69: #{sparse_linear_neq_forward.1} parent=66 // pred_check_branch
          %2443 = sbr.rel (%p2441) target = $region71
        $region70: #{sparse_linear_neq_forward.1} parent=66 // pred_region
          %s2444 = sand.u32 %s133, 1
          %s2445 = scalar_lea.sflag [#allocation6], %s2444
          %s2446 = sand.u32 %s133, 1
          %s2447 = smul.addr %s2446, 16
          %s2448 = scalar_lea.vmem [#allocation12], %s2447
          %2449 = dma.done %s2445, 256
        $region71: #{sparse_linear_neq_forward.1} parent=66 // pred_fallthru
          _
      $region67: #{sparse_linear_neq_forward.1} parent=5 // pred_fallthru
        _
    $region6: #{sparse_linear_neq_forward.1} parent=1 // loop_footer
      %s24 = sadd.s32 1, %s20
    $region7: #{sparse_linear_neq_forward.1} parent=1 // loop_footer_branch
      %19 = sbr.rel target = $region3
    $region8: #{sparse_linear_neq_forward.1} parent=1 // loop_exit
      _
    %2450 = vsyncpa [#allocation5], 1
    %s2451 = scalar_lea.sflag [#allocation5], 1
    %2452 = vsyncpa %s2451, 1
    %2453 = vsyncpa [#allocation8], 1
    %s2454 = scalar_lea.sflag [#allocation8], 1
    %2455 = vsyncpa %s2454, 1
    %2456 = vsyncpa [#allocation11], 1
    %s2457 = scalar_lea.sflag [#allocation11], 1
    %2458 = vsyncpa %s2457, 1
    %2459 = vsyncpa [#allocation6], 1
    %s2460 = scalar_lea.sflag [#allocation6], 1
    %2461 = vsyncpa %s2460, 1

</llo_original>
